<compile_context>
chip_gen: v5e
topology: v5e:2x2
jax: 0.10.0
libtpu: 0.0.40
codegen_flags: <defaults>
</compile_context>

<pallas_src>
import math

import jax
import jax.numpy as jnp
import numpy as np
from jax.experimental import pallas as pl
from jax.experimental.pallas import tpu as pltpu

# ------------------------------- config -------------------------------------
B = 2
SEQ_LEN = 16
LABEL_LEN = 8
PRED_LEN = 8
DEC_LEN = LABEL_LEN + PRED_LEN          # 16
ENC_IN = 4
DEC_IN = 4
C_OUT = 4
D_MODEL = 32
N_HEADS = 4
D_HEAD = D_MODEL // N_HEADS             # 8
D_FF = 64
E_LAYERS = 2
D_LAYERS = 1
MARK_DIM = 4                            # embed='timeF', freq='h'
FACTOR = 6                              # configs.predict_merge

EMB_IN = 3 * ENC_IN + MARK_DIM          # 16: im2col taps [x(t-1)|x(t)|x(t+1)] + marks
ENC_ROWS = B * SEQ_LEN                  # 32
DEC_ROWS = B * DEC_LEN                  # 32

# ProbSparse -> full attention equivalence guard (see kernel TODO)
assert FACTOR * math.ceil(math.log(SEQ_LEN)) >= SEQ_LEN
assert FACTOR * math.ceil(math.log(DEC_LEN)) >= DEC_LEN
assert ENC_ROWS == DEC_ROWS  # lets the block-diagonal mask be shared by all attentions


# --------------------------- host-side helpers --------------------------------
def positional_embedding(L, d_model):
    position = np.arange(L, dtype=np.float32)[:, None]
    div_term = np.exp(np.arange(0, d_model, 2, dtype=np.float32)
                      * -(math.log(10000.0) / d_model))
    pe = np.zeros((L, d_model), np.float32)
    pe[:, 0::2] = np.sin(position * div_term)
    pe[:, 1::2] = np.cos(position * div_term)
    return pe


def _embed_inputs(x, x_mark):
    """im2col for the circular k=3 TokenEmbedding conv, concatenated with the
    time-feature inputs, so the whole DataEmbedding is one in-kernel matmul."""
    xm1 = jnp.roll(x, 1, axis=1)     # x[(t-1) % L]
    xp1 = jnp.roll(x, -1, axis=1)    # x[(t+1) % L]
    return jnp.concatenate([xm1, x, xp1, x_mark], axis=-1).astype(jnp.float32)


class _SlabPacker:
    """Packs 2-D f32 tensors into one (R, 128) slab; every tensor starts on an
    8-row boundary so in-kernel static slices are tile-aligned."""
    WIDTH = 128

    def __init__(self):
        self._chunks = []
        self._off = {}
        self._rows = 0

    def add(self, name, arr):
        a = np.asarray(arr, np.float32)
        if a.ndim == 1:
            a = a[None, :]
        r, c = a.shape
        assert c <= self.WIDTH and name not in self._off
        pad = (-self._rows) % 8
        if pad:
            self._chunks.append(np.zeros((pad, self.WIDTH), np.float32))
            self._rows += pad
        buf = np.zeros((r, self.WIDTH), np.float32)
        buf[:, :c] = a
        self._chunks.append(buf)
        self._off[name] = (self._rows, r, c)
        self._rows += r

    def finalize(self):
        pad = (-self._rows) % 8
        if pad:
            self._chunks.append(np.zeros((pad, self.WIDTH), np.float32))
            self._rows += pad
        return jnp.asarray(np.concatenate(self._chunks, axis=0)), dict(self._off)


# ------------------------------ parameters -----------------------------------
def init_params(seed=0):
    """PyTorch-layout parameters mirroring the nn.Module structure."""
    rng = np.random.default_rng(seed)

    def lin(out_f, in_f, bias=True):
        w = rng.normal(0.0, 0.02, (out_f, in_f)).astype(np.float32)
        b = rng.normal(0.0, 0.02, (out_f,)).astype(np.float32) if bias else None
        return w, b

    def attn_proj():
        wq, bq = lin(D_MODEL, D_MODEL)
        wk, bk = lin(D_MODEL, D_MODEL)
        wv, bv = lin(D_MODEL, D_MODEL)
        wo, bo = lin(D_MODEL, D_MODEL)
        return dict(wq=wq, bq=bq, wk=wk, bk=bk, wv=wv, bv=bv, wo=wo, bo=bo)

    def ln():
        return np.ones((D_MODEL,), np.float32), np.zeros((D_MODEL,), np.float32)

    def embedding(c_in):
        conv_w = rng.normal(0.0, 0.02, (D_MODEL, c_in, 3)).astype(np.float32)
        temp_w, _ = lin(D_MODEL, MARK_DIM, bias=False)
        return dict(conv_w=conv_w, temp_w=temp_w)

    def enc_layer():
        c1w, c1b = lin(D_FF, D_MODEL)
        c2w, c2b = lin(D_MODEL, D_FF)
        g1, b1 = ln(); g2, b2 = ln()
        return dict(attn=attn_proj(), conv1_w=c1w, conv1_b=c1b,
                    conv2_w=c2w, conv2_b=c2b,
                    ln1_g=g1, ln1_b=b1, ln2_g=g2, ln2_b=b2)

    def dec_layer():
        c1w, c1b = lin(D_FF, D_MODEL)
        c2w, c2b = lin(D_MODEL, D_FF)
        g1, b1 = ln(); g2, b2 = ln(); g3, b3 = ln()
        return dict(self_attn=attn_proj(), cross_attn=attn_proj(),
                    conv1_w=c1w, conv1_b=c1b, conv2_w=c2w, conv2_b=c2b,
                    ln1_g=g1, ln1_b=b1, ln2_g=g2, ln2_b=b2, ln3_g=g3, ln3_b=b3)

    enc_norm_g, enc_norm_b = ln()
    dec_norm_g, dec_norm_b = ln()
    proj_w, proj_b = lin(C_OUT, D_MODEL)
    return dict(enc_emb=embedding(ENC_IN), dec_emb=embedding(DEC_IN),
                enc_layers=[enc_layer() for _ in range(E_LAYERS)],
                dec_layers=[dec_layer() for _ in range(D_LAYERS)],
                enc_norm_g=enc_norm_g, enc_norm_b=enc_norm_b,
                dec_norm_g=dec_norm_g, dec_norm_b=dec_norm_b,
                proj_w=proj_w, proj_b=proj_b)


def pack_params(p):
    """One-time host-side packing into a single 128-lane VMEM slab:
    fuse QKV weights, pre-transpose everything to (in,out), fold the circular
    conv + time-feature embedding into one matrix, tile positional embeddings
    over the folded batch, and precompute additive attention masks."""
    pk = _SlabPacker()

    def t(w):                      # PyTorch Linear (out,in) -> matmul-ready (in,out)
        return np.asarray(w, np.float32).T

    def add_attn(prefix, a):
        pk.add(prefix + "_wqkv",
               np.concatenate([t(a["wq"]), t(a["wk"]), t(a["wv"])], axis=1))  # (32,96)
        pk.add(prefix + "_bqkv", np.concatenate([a["bq"], a["bk"], a["bv"]]))  # (96,)
        pk.add(prefix + "_wo", t(a["wo"]))                                     # (32,32)
        pk.add(prefix + "_bo", a["bo"])                                        # (32,)

    def emb_w(emb):
        # (d_model, c_in, 3) -> (d_model, 3*c_in), k-major to match the
        # [x(t-1), x(t), x(t+1)] concat order; append temporal weights; transpose.
        conv2 = np.transpose(np.asarray(emb["conv_w"]), (0, 2, 1)).reshape(D_MODEL, -1)
        return np.concatenate([conv2, np.asarray(emb["temp_w"])], axis=1).T   # (16,32)

    pk.add("enc_emb_w", emb_w(p["enc_emb"]))
    pk.add("dec_emb_w", emb_w(p["dec_emb"]))
    pk.add("pe_enc", np.tile(positional_embedding(SEQ_LEN, D_MODEL), (B, 1)))  # (32,32)
    pk.add("pe_dec", np.tile(positional_embedding(DEC_LEN, D_MODEL), (B, 1)))  # (32,32)

    # Additive attention masks for the batch-folded (B*L, B*L) score matrices.
    ri = np.arange(ENC_ROWS)[:, None]
    ci = np.arange(ENC_ROWS)[None, :]
    same = (ri // SEQ_LEN) == (ci // SEQ_LEN)                       # block-diagonal
    causal = same & ((ci % DEC_LEN) <= (ri % DEC_LEN))
    pk.add("attn_mask_full", np.where(same, 0.0, -1e30).astype(np.float32))
    pk.add("attn_mask_causal", np.where(causal, 0.0, -1e30).astype(np.float32))

    for l, lp in enumerate(p["enc_layers"]):
        add_attn(f"enc{l}", lp["attn"])
        pk.add(f"enc{l}_ln1_g", lp["ln1_g"]); pk.add(f"enc{l}_ln1_b", lp["ln1_b"])
        pk.add(f"enc{l}_ffn1_w", t(lp["conv1_w"])); pk.add(f"enc{l}_ffn1_b", lp["conv1_b"])
        pk.add(f"enc{l}_ffn2_w", t(lp["conv2_w"])); pk.add(f"enc{l}_ffn2_b", lp["conv2_b"])
        pk.add(f"enc{l}_ln2_g", lp["ln2_g"]); pk.add(f"enc{l}_ln2_b", lp["ln2_b"])
    pk.add("enc_norm_g", p["enc_norm_g"]); pk.add("enc_norm_b", p["enc_norm_b"])

    for l, lp in enumerate(p["dec_layers"]):
        add_attn(f"dec{l}_s", lp["self_attn"])
        add_attn(f"dec{l}_c", lp["cross_attn"])
        pk.add(f"dec{l}_ln1_g", lp["ln1_g"]); pk.add(f"dec{l}_ln1_b", lp["ln1_b"])
        pk.add(f"dec{l}_ln2_g", lp["ln2_g"]); pk.add(f"dec{l}_ln2_b", lp["ln2_b"])
        pk.add(f"dec{l}_ffn1_w", t(lp["conv1_w"])); pk.add(f"dec{l}_ffn1_b", lp["conv1_b"])
        pk.add(f"dec{l}_ffn2_w", t(lp["conv2_w"])); pk.add(f"dec{l}_ffn2_b", lp["conv2_b"])
        pk.add(f"dec{l}_ln3_g", lp["ln3_g"]); pk.add(f"dec{l}_ln3_b", lp["ln3_b"])
    pk.add("dec_norm_g", p["dec_norm_g"]); pk.add("dec_norm_b", p["dec_norm_b"])
    pk.add("proj_w", t(p["proj_w"]))       # (32, 4)
    pk.add("proj_b", p["proj_b"])          # (4,)

    return pk.finalize()


# ------------------------------ fused kernel ----------------------------------
def make_informer_kernel(off):
    """Builds the single fused encoder+decoder kernel with the slab offset table
    `off` (name -> (row0, nrows, ncols)) baked in as static Python ints."""
    scale = 1.0 / math.sqrt(D_HEAD)

    def _layernorm(x, g, b):
        mu = jnp.mean(x, axis=-1, keepdims=True)
        xc = x - mu
        var = jnp.mean(xc * xc, axis=-1, keepdims=True)
        return xc * jax.lax.rsqrt(var + 1e-5) * g + b

    def _mha(q_src, kv_src, wqkv, bqkv, wo, bo, mask_add):
        """Multi-head attention on batch-folded rows.
        wqkv: (32, 96) [Wq|Wk|Wv] in (in,out) layout; wo: (32, 32) (in,out);
        mask_add: (rows, rows) additive mask (0 / -1e30) enforcing the per-batch
        block-diagonal (and causality for the decoder self-attention).
        TODO(synk): general ProbSparse sample+top-k+scatter path not implemented;
        factor*ceil(ln(L)) >= L here so ProbAttention is exactly this softmax."""
        if kv_src is None:                               # self-attention: fused QKV matmul
            qkv = jnp.dot(q_src, wqkv, preferred_element_type=jnp.float32) + bqkv
            q = qkv[:, 0:D_MODEL]
            k = qkv[:, D_MODEL:2 * D_MODEL]
            v = qkv[:, 2 * D_MODEL:3 * D_MODEL]
        else:                                            # cross-attention
            q = jnp.dot(q_src, wqkv[:, 0:D_MODEL],
                        preferred_element_type=jnp.float32) + bqkv[:, 0:D_MODEL]
            kv = jnp.dot(kv_src, wqkv[:, D_MODEL:],
                         preferred_element_type=jnp.float32) + bqkv[:, D_MODEL:]
            k = kv[:, 0:D_MODEL]
            v = kv[:, D_MODEL:2 * D_MODEL]

        acc = None
        for h in range(N_HEADS):                         # static unroll; Wo folded per head
            sl = slice(h * D_HEAD, (h + 1) * D_HEAD)
            s = jax.lax.dot_general(q[:, sl], k[:, sl],
                                    (((1,), (1,)), ((), ())),
                                    preferred_element_type=jnp.float32) * scale
            s = s + mask_add
            m = jnp.max(s, axis=-1, keepdims=True)
            p = jnp.exp(s - m)
            p = p * pl.reciprocal(jnp.sum(p, axis=-1, keepdims=True), approx=True)
            pv = jnp.dot(p, v[:, sl], preferred_element_type=jnp.float32)       # (R, 8)
            contrib = jnp.dot(pv, wo[sl, :], preferred_element_type=jnp.float32)  # (R, 32)
            acc = contrib if acc is None else acc + contrib
        return acc + bo

    def kernel(enc_in_ref, dec_in_ref, slab_ref, o_ref):
        def W(name):
            r0, nr, nc = off[name]
            return slab_ref[r0:r0 + nr, 0:nc]

        mask_full = W("attn_mask_full")       # (32,32): per-batch block-diagonal
        mask_causal = W("attn_mask_causal")   # (32,32): block-diagonal + causal

        # ------------------------------ encoder ------------------------------
        # DataEmbedding: fused (circular-conv im2col | time-features) matmul + pos-emb.
        x = jnp.dot(enc_in_ref[...], W("enc_emb_w"),
                    preferred_element_type=jnp.float32) + W("pe_enc")   # (32, 32)
        for l in range(E_LAYERS):
            a = _mha(x, None, W(f"enc{l}_wqkv"), W(f"enc{l}_bqkv"),
                     W(f"enc{l}_wo"), W(f"enc{l}_bo"), mask_full)
            x = _layernorm(x + a, W(f"enc{l}_ln1_g"), W(f"enc{l}_ln1_b"))
            y = jnp.maximum(jnp.dot(x, W(f"enc{l}_ffn1_w"),                 # Conv1d k=1
                                    preferred_element_type=jnp.float32)
                            + W(f"enc{l}_ffn1_b"), 0.0)
            y = jnp.dot(y, W(f"enc{l}_ffn2_w"),
                        preferred_element_type=jnp.float32) + W(f"enc{l}_ffn2_b")
            x = _layernorm(x + y, W(f"enc{l}_ln2_g"), W(f"enc{l}_ln2_b"))
        enc = _layernorm(x, W("enc_norm_g"), W("enc_norm_b"))               # stays in VMEM

        # ------------------------------ decoder ------------------------------
        x = jnp.dot(dec_in_ref[...], W("dec_emb_w"),
                    preferred_element_type=jnp.float32) + W("pe_dec")   # (32, 32)
        for l in range(D_LAYERS):
            sa = _mha(x, None, W(f"dec{l}_s_wqkv"), W(f"dec{l}_s_bqkv"),
                      W(f"dec{l}_s_wo"), W(f"dec{l}_s_bo"), mask_causal)
            x = _layernorm(x + sa, W(f"dec{l}_ln1_g"), W(f"dec{l}_ln1_b"))
            ca = _mha(x, enc, W(f"dec{l}_c_wqkv"), W(f"dec{l}_c_bqkv"),
                      W(f"dec{l}_c_wo"), W(f"dec{l}_c_bo"), mask_full)
            x = _layernorm(x + ca, W(f"dec{l}_ln2_g"), W(f"dec{l}_ln2_b"))
            y = jnp.maximum(jnp.dot(x, W(f"dec{l}_ffn1_w"),
                                    preferred_element_type=jnp.float32)
                            + W(f"dec{l}_ffn1_b"), 0.0)
            y = jnp.dot(y, W(f"dec{l}_ffn2_w"),
                        preferred_element_type=jnp.float32) + W(f"dec{l}_ffn2_b")
            x = _layernorm(x + y, W(f"dec{l}_ln3_g"), W(f"dec{l}_ln3_b"))
        x = _layernorm(x, W("dec_norm_g"), W("dec_norm_b"))
        proj = jnp.dot(x, W("proj_w"),
                       preferred_element_type=jnp.float32) + W("proj_b")    # (32, 4)
        # keep only the last pred_len steps of each (folded) batch element
        for b in range(B):
            o_ref[b * PRED_LEN:(b + 1) * PRED_LEN, :] = \
                proj[b * DEC_LEN + LABEL_LEN:(b + 1) * DEC_LEN, :]

    return kernel


# --------------------------- pallas_call wrapper -------------------------------
def build_forward(off, slab_shape):
    kernel = make_informer_kernel(off)

    def _full_spec(shape):
        nd = len(shape)
        return pl.BlockSpec(shape, lambda i, _n=nd: (0,) * _n)

    pcall = pl.pallas_call(
        kernel,
        out_shape=jax.ShapeDtypeStruct((B * PRED_LEN, C_OUT), jnp.float32),
        grid=(1,),
        in_specs=[_full_spec((ENC_ROWS, EMB_IN)),
                  _full_spec((DEC_ROWS, EMB_IN)),
                  _full_spec(slab_shape)],
        out_specs=_full_spec((B * PRED_LEN, C_OUT)),
        compiler_params=pltpu.CompilerParams(dimension_semantics=("arbitrary",)),
    )

    @jax.jit
    def forward(slab, x_enc, x_mark_enc, x_dec, x_mark_dec):
        enc_in = _embed_inputs(x_enc, x_mark_enc).reshape(ENC_ROWS, EMB_IN)
        dec_in = _embed_inputs(x_dec, x_mark_dec).reshape(DEC_ROWS, EMB_IN)
        out = pcall(enc_in, dec_in, slab)
        return out.reshape(B, PRED_LEN, C_OUT)

    return forward


# --------------------------------- main ----------------------------------------
if __name__ == "__main__":
    params = init_params(0)
    slab, off = pack_params(params)
    fwd = build_forward(off, slab.shape)

    key = jax.random.PRNGKey(0)
    k1, k2, k3, k4 = jax.random.split(key, 4)
    x_enc = jax.random.normal(k1, (B, SEQ_LEN, ENC_IN), jnp.float32)
    x_mark_enc = jax.random.normal(k2, (B, SEQ_LEN, MARK_DIM), jnp.float32)
    x_dec = jax.random.normal(k3, (B, DEC_LEN, DEC_IN), jnp.float32)
    x_mark_dec = jax.random.normal(k4, (B, DEC_LEN, MARK_DIM), jnp.float32)

    out = fwd(slab, x_enc, x_mark_enc, x_dec, x_mark_dec)
    jax.block_until_ready(out)
    assert out.shape == (B, PRED_LEN, C_OUT), out.shape
    assert bool(jnp.all(jnp.isfinite(out)))
    print("KERNEL_OK")
</pallas_src>

<mosaic_0001>
module attributes {stable_mosaic.version = 11 : i64} {
  func.func @kernel(%arg0: i32, %arg1: memref<32x16xf32, #tpu.memory_space<vmem>>, %arg2: memref<32x16xf32, #tpu.memory_space<vmem>>, %arg3: memref<1000x128xf32, #tpu.memory_space<vmem>>, %arg4: memref<16x4xf32, #tpu.memory_space<vmem>>) attributes {dimension_semantics = [#tpu.dimension_semantics<arbitrary>], iteration_bounds = array<i64: 1>, scalar_prefetch = 0 : i64, scratch_operands = 0 : i64, tpu.core_type = #tpu.core_type<tc>, window_params = [{pipeline_mode = #tpu.pipeline_mode<synchronous>, transform_indices = @transform_0, window_bounds = array<i64: 32, 16>}, {pipeline_mode = #tpu.pipeline_mode<synchronous>, transform_indices = @transform_1, window_bounds = array<i64: 32, 16>}, {pipeline_mode = #tpu.pipeline_mode<synchronous>, transform_indices = @transform_2, window_bounds = array<i64: 1000, 128>}, {pipeline_mode = #tpu.pipeline_mode<synchronous>, transform_indices = @transform_3, window_bounds = array<i64: 16, 4>}]} {
    %c96 = arith.constant 96 : index
    %c0 = arith.constant 0 : index
    %0 = vector.load %arg3[%c96, %c0] : memref<1000x128xf32, #tpu.memory_space<vmem>>, vector<32x32xf32>
    %c128 = arith.constant 128 : index
    %c0_0 = arith.constant 0 : index
    %1 = vector.load %arg3[%c128, %c0_0] : memref<1000x128xf32, #tpu.memory_space<vmem>>, vector<32x32xf32>
    %c0_1 = arith.constant 0 : index
    %c0_2 = arith.constant 0 : index
    %2 = vector.load %arg1[%c0_1, %c0_2] : memref<32x16xf32, #tpu.memory_space<vmem>>, vector<32x16xf32>
    %c0_3 = arith.constant 0 : index
    %c0_4 = arith.constant 0 : index
    %3 = vector.load %arg3[%c0_3, %c0_4] : memref<1000x128xf32, #tpu.memory_space<vmem>>, vector<16x32xf32>
    %cst = arith.constant dense<0.000000e+00> : vector<32x32xf32>
    %4 = tpu.matmul %2, %3, %cst {dimension_numbers = #tpu.dot_dimension_numbers<[1], [0], [0], [1], [0, 0, 1, 1], [], []>} : vector<32x16xf32>, vector<16x32xf32>, vector<32x32xf32> -> vector<32x32xf32>
    %c32 = arith.constant 32 : index
    %c0_5 = arith.constant 0 : index
    %5 = vector.load %arg3[%c32, %c0_5] : memref<1000x128xf32, #tpu.memory_space<vmem>>, vector<32x32xf32>
    %6 = arith.addf %4, %5 : vector<32x32xf32>
    %c160 = arith.constant 160 : index
    %c0_6 = arith.constant 0 : index
    %7 = vector.load %arg3[%c160, %c0_6] : memref<1000x128xf32, #tpu.memory_space<vmem>>, vector<32x96xf32>
    %c192 = arith.constant 192 : index
    %c0_7 = arith.constant 0 : index
    %8 = vector.load %arg3[%c192, %c0_7] : memref<1000x128xf32, #tpu.memory_space<vmem>>, vector<1x96xf32>
    %c200 = arith.constant 200 : index
    %c0_8 = arith.constant 0 : index
    %9 = vector.load %arg3[%c200, %c0_8] : memref<1000x128xf32, #tpu.memory_space<vmem>>, vector<32x32xf32>
    %c232 = arith.constant 232 : index
    %c0_9 = arith.constant 0 : index
    %10 = vector.load %arg3[%c232, %c0_9] : memref<1000x128xf32, #tpu.memory_space<vmem>>, vector<1x32xf32>
    %cst_10 = arith.constant dense<0.000000e+00> : vector<32x96xf32>
    %11 = tpu.matmul %6, %7, %cst_10 {dimension_numbers = #tpu.dot_dimension_numbers<[1], [0], [0], [1], [0, 0, 1, 1], [], []>} : vector<32x32xf32>, vector<32x96xf32>, vector<32x96xf32> -> vector<32x96xf32>
    %12 = vector.broadcast %8 : vector<1x96xf32> to vector<32x96xf32>
    %13 = arith.addf %11, %12 : vector<32x96xf32>
    %14 = vector.extract_strided_slice %13 {offsets = [0, 0], sizes = [32, 32], strides = [1, 1]} : vector<32x96xf32> to vector<32x32xf32>
    %15 = vector.extract_strided_slice %13 {offsets = [0, 32], sizes = [32, 32], strides = [1, 1]} : vector<32x96xf32> to vector<32x32xf32>
    %16 = vector.extract_strided_slice %13 {offsets = [0, 64], sizes = [32, 32], strides = [1, 1]} : vector<32x96xf32> to vector<32x32xf32>
    %17 = vector.extract_strided_slice %14 {offsets = [0, 0], sizes = [32, 8], strides = [1, 1]} : vector<32x32xf32> to vector<32x8xf32>
    %18 = vector.extract_strided_slice %15 {offsets = [0, 0], sizes = [32, 8], strides = [1, 1]} : vector<32x32xf32> to vector<32x8xf32>
    %cst_11 = arith.constant dense<0.000000e+00> : vector<32x32xf32>
    %19 = tpu.matmul %17, %18, %cst_11 {dimension_numbers = #tpu.dot_dimension_numbers<[1], [1], [0], [0], [0, 0, 1, 0], [], []>} : vector<32x8xf32>, vector<32x8xf32>, vector<32x32xf32> -> vector<32x32xf32>
    %cst_12 = arith.constant 0.353553385 : f32
    %20 = vector.broadcast %cst_12 : f32 to vector<32x32xf32>
    %21 = arith.mulf %19, %20 : vector<32x32xf32>
    %22 = arith.addf %21, %0 : vector<32x32xf32>
    %cst_13 = arith.constant dense<0xFF800000> : vector<32xf32>
    %23 = vector.multi_reduction <maximumf>, %22, %cst_13 [1] : vector<32x32xf32> to vector<32xf32>
    %24 = vector.shape_cast %23 : vector<32xf32> to vector<32x1xf32>
    %25 = vector.broadcast %24 : vector<32x1xf32> to vector<32x32xf32>
    %26 = arith.subf %22, %25 : vector<32x32xf32>
    %27 = math.exp %26 : vector<32x32xf32>
    %cst_14 = arith.constant dense<0.000000e+00> : vector<32xf32>
    %28 = vector.multi_reduction <add>, %27, %cst_14 [1] : vector<32x32xf32> to vector<32xf32>
    %29 = vector.shape_cast %28 : vector<32xf32> to vector<32x1xf32>
    %30 = tpu.reciprocal %29 {approx = true} : vector<32x1xf32> -> vector<32x1xf32>
    %31 = vector.broadcast %30 : vector<32x1xf32> to vector<32x32xf32>
    %32 = arith.mulf %27, %31 : vector<32x32xf32>
    %33 = vector.extract_strided_slice %16 {offsets = [0, 0], sizes = [32, 8], strides = [1, 1]} : vector<32x32xf32> to vector<32x8xf32>
    %cst_15 = arith.constant dense<0.000000e+00> : vector<32x8xf32>
    %34 = tpu.matmul %32, %33, %cst_15 {dimension_numbers = #tpu.dot_dimension_numbers<[1], [0], [0], [1], [0, 0, 1, 1], [], []>} : vector<32x32xf32>, vector<32x8xf32>, vector<32x8xf32> -> vector<32x8xf32>
    %35 = vector.extract_strided_slice %9 {offsets = [0, 0], sizes = [8, 32], strides = [1, 1]} : vector<32x32xf32> to vector<8x32xf32>
    %cst_16 = arith.constant dense<0.000000e+00> : vector<32x32xf32>
    %36 = tpu.matmul %34, %35, %cst_16 {dimension_numbers = #tpu.dot_dimension_numbers<[1], [0], [0], [1], [0, 0, 1, 1], [], []>} : vector<32x8xf32>, vector<8x32xf32>, vector<32x32xf32> -> vector<32x32xf32>
    %37 = vector.extract_strided_slice %14 {offsets = [0, 8], sizes = [32, 8], strides = [1, 1]} : vector<32x32xf32> to vector<32x8xf32>
    %38 = vector.extract_strided_slice %15 {offsets = [0, 8], sizes = [32, 8], strides = [1, 1]} : vector<32x32xf32> to vector<32x8xf32>
    %cst_17 = arith.constant dense<0.000000e+00> : vector<32x32xf32>
    %39 = tpu.matmul %37, %38, %cst_17 {dimension_numbers = #tpu.dot_dimension_numbers<[1], [1], [0], [0], [0, 0, 1, 0], [], []>} : vector<32x8xf32>, vector<32x8xf32>, vector<32x32xf32> -> vector<32x32xf32>
    %cst_18 = arith.constant 0.353553385 : f32
    %40 = vector.broadcast %cst_18 : f32 to vector<32x32xf32>
    %41 = arith.mulf %39, %40 : vector<32x32xf32>
    %42 = arith.addf %41, %0 : vector<32x32xf32>
    %cst_19 = arith.constant dense<0xFF800000> : vector<32xf32>
    %43 = vector.multi_reduction <maximumf>, %42, %cst_19 [1] : vector<32x32xf32> to vector<32xf32>
    %44 = vector.shape_cast %43 : vector<32xf32> to vector<32x1xf32>
    %45 = vector.broadcast %44 : vector<32x1xf32> to vector<32x32xf32>
    %46 = arith.subf %42, %45 : vector<32x32xf32>
    %47 = math.exp %46 : vector<32x32xf32>
    %cst_20 = arith.constant dense<0.000000e+00> : vector<32xf32>
    %48 = vector.multi_reduction <add>, %47, %cst_20 [1] : vector<32x32xf32> to vector<32xf32>
    %49 = vector.shape_cast %48 : vector<32xf32> to vector<32x1xf32>
    %50 = tpu.reciprocal %49 {approx = true} : vector<32x1xf32> -> vector<32x1xf32>
    %51 = vector.broadcast %50 : vector<32x1xf32> to vector<32x32xf32>
    %52 = arith.mulf %47, %51 : vector<32x32xf32>
    %53 = vector.extract_strided_slice %16 {offsets = [0, 8], sizes = [32, 8], strides = [1, 1]} : vector<32x32xf32> to vector<32x8xf32>
    %cst_21 = arith.constant dense<0.000000e+00> : vector<32x8xf32>
    %54 = tpu.matmul %52, %53, %cst_21 {dimension_numbers = #tpu.dot_dimension_numbers<[1], [0], [0], [1], [0, 0, 1, 1], [], []>} : vector<32x32xf32>, vector<32x8xf32>, vector<32x8xf32> -> vector<32x8xf32>
    %55 = vector.extract_strided_slice %9 {offsets = [8, 0], sizes = [8, 32], strides = [1, 1]} : vector<32x32xf32> to vector<8x32xf32>
    %cst_22 = arith.constant dense<0.000000e+00> : vector<32x32xf32>
    %56 = tpu.matmul %54, %55, %cst_22 {dimension_numbers = #tpu.dot_dimension_numbers<[1], [0], [0], [1], [0, 0, 1, 1], [], []>} : vector<32x8xf32>, vector<8x32xf32>, vector<32x32xf32> -> vector<32x32xf32>
    %57 = arith.addf %36, %56 : vector<32x32xf32>
    %58 = vector.extract_strided_slice %14 {offsets = [0, 16], sizes = [32, 8], strides = [1, 1]} : vector<32x32xf32> to vector<32x8xf32>
    %59 = vector.extract_strided_slice %15 {offsets = [0, 16], sizes = [32, 8], strides = [1, 1]} : vector<32x32xf32> to vector<32x8xf32>
    %cst_23 = arith.constant dense<0.000000e+00> : vector<32x32xf32>
    %60 = tpu.matmul %58, %59, %cst_23 {dimension_numbers = #tpu.dot_dimension_numbers<[1], [1], [0], [0], [0, 0, 1, 0], [], []>} : vector<32x8xf32>, vector<32x8xf32>, vector<32x32xf32> -> vector<32x32xf32>
    %cst_24 = arith.constant 0.353553385 : f32
    %61 = vector.broadcast %cst_24 : f32 to vector<32x32xf32>
    %62 = arith.mulf %60, %61 : vector<32x32xf32>
    %63 = arith.addf %62, %0 : vector<32x32xf32>
    %cst_25 = arith.constant dense<0xFF800000> : vector<32xf32>
    %64 = vector.multi_reduction <maximumf>, %63, %cst_25 [1] : vector<32x32xf32> to vector<32xf32>
    %65 = vector.shape_cast %64 : vector<32xf32> to vector<32x1xf32>
    %66 = vector.broadcast %65 : vector<32x1xf32> to vector<32x32xf32>
    %67 = arith.subf %63, %66 : vector<32x32xf32>
    %68 = math.exp %67 : vector<32x32xf32>
    %cst_26 = arith.constant dense<0.000000e+00> : vector<32xf32>
    %69 = vector.multi_reduction <add>, %68, %cst_26 [1] : vector<32x32xf32> to vector<32xf32>
    %70 = vector.shape_cast %69 : vector<32xf32> to vector<32x1xf32>
    %71 = tpu.reciprocal %70 {approx = true} : vector<32x1xf32> -> vector<32x1xf32>
    %72 = vector.broadcast %71 : vector<32x1xf32> to vector<32x32xf32>
    %73 = arith.mulf %68, %72 : vector<32x32xf32>
    %74 = vector.extract_strided_slice %16 {offsets = [0, 16], sizes = [32, 8], strides = [1, 1]} : vector<32x32xf32> to vector<32x8xf32>
    %cst_27 = arith.constant dense<0.000000e+00> : vector<32x8xf32>
    %75 = tpu.matmul %73, %74, %cst_27 {dimension_numbers = #tpu.dot_dimension_numbers<[1], [0], [0], [1], [0, 0, 1, 1], [], []>} : vector<32x32xf32>, vector<32x8xf32>, vector<32x8xf32> -> vector<32x8xf32>
    %76 = vector.extract_strided_slice %9 {offsets = [16, 0], sizes = [8, 32], strides = [1, 1]} : vector<32x32xf32> to vector<8x32xf32>
    %cst_28 = arith.constant dense<0.000000e+00> : vector<32x32xf32>
    %77 = tpu.matmul %75, %76, %cst_28 {dimension_numbers = #tpu.dot_dimension_numbers<[1], [0], [0], [1], [0, 0, 1, 1], [], []>} : vector<32x8xf32>, vector<8x32xf32>, vector<32x32xf32> -> vector<32x32xf32>
    %78 = arith.addf %57, %77 : vector<32x32xf32>
    %79 = vector.extract_strided_slice %14 {offsets = [0, 24], sizes = [32, 8], strides = [1, 1]} : vector<32x32xf32> to vector<32x8xf32>
    %80 = vector.extract_strided_slice %15 {offsets = [0, 24], sizes = [32, 8], strides = [1, 1]} : vector<32x32xf32> to vector<32x8xf32>
    %cst_29 = arith.constant dense<0.000000e+00> : vector<32x32xf32>
    %81 = tpu.matmul %79, %80, %cst_29 {dimension_numbers = #tpu.dot_dimension_numbers<[1], [1], [0], [0], [0, 0, 1, 0], [], []>} : vector<32x8xf32>, vector<32x8xf32>, vector<32x32xf32> -> vector<32x32xf32>
    %cst_30 = arith.constant 0.353553385 : f32
    %82 = vector.broadcast %cst_30 : f32 to vector<32x32xf32>
    %83 = arith.mulf %81, %82 : vector<32x32xf32>
    %84 = arith.addf %83, %0 : vector<32x32xf32>
    %cst_31 = arith.constant dense<0xFF800000> : vector<32xf32>
    %85 = vector.multi_reduction <maximumf>, %84, %cst_31 [1] : vector<32x32xf32> to vector<32xf32>
    %86 = vector.shape_cast %85 : vector<32xf32> to vector<32x1xf32>
    %87 = vector.broadcast %86 : vector<32x1xf32> to vector<32x32xf32>
    %88 = arith.subf %84, %87 : vector<32x32xf32>
    %89 = math.exp %88 : vector<32x32xf32>
    %cst_32 = arith.constant dense<0.000000e+00> : vector<32xf32>
    %90 = vector.multi_reduction <add>, %89, %cst_32 [1] : vector<32x32xf32> to vector<32xf32>
    %91 = vector.shape_cast %90 : vector<32xf32> to vector<32x1xf32>
    %92 = tpu.reciprocal %91 {approx = true} : vector<32x1xf32> -> vector<32x1xf32>
    %93 = vector.broadcast %92 : vector<32x1xf32> to vector<32x32xf32>
    %94 = arith.mulf %89, %93 : vector<32x32xf32>
    %95 = vector.extract_strided_slice %16 {offsets = [0, 24], sizes = [32, 8], strides = [1, 1]} : vector<32x32xf32> to vector<32x8xf32>
    %cst_33 = arith.constant dense<0.000000e+00> : vector<32x8xf32>
    %96 = tpu.matmul %94, %95, %cst_33 {dimension_numbers = #tpu.dot_dimension_numbers<[1], [0], [0], [1], [0, 0, 1, 1], [], []>} : vector<32x32xf32>, vector<32x8xf32>, vector<32x8xf32> -> vector<32x8xf32>
    %97 = vector.extract_strided_slice %9 {offsets = [24, 0], sizes = [8, 32], strides = [1, 1]} : vector<32x32xf32> to vector<8x32xf32>
    %cst_34 = arith.constant dense<0.000000e+00> : vector<32x32xf32>
    %98 = tpu.matmul %96, %97, %cst_34 {dimension_numbers = #tpu.dot_dimension_numbers<[1], [0], [0], [1], [0, 0, 1, 1], [], []>} : vector<32x8xf32>, vector<8x32xf32>, vector<32x32xf32> -> vector<32x32xf32>
    %99 = arith.addf %78, %98 : vector<32x32xf32>
    %100 = vector.broadcast %10 : vector<1x32xf32> to vector<32x32xf32>
    %101 = arith.addf %99, %100 : vector<32x32xf32>
    %102 = arith.addf %6, %101 : vector<32x32xf32>
    %c240 = arith.constant 240 : index
    %c0_35 = arith.constant 0 : index
    %103 = vector.load %arg3[%c240, %c0_35] : memref<1000x128xf32, #tpu.memory_space<vmem>>, vector<1x32xf32>
    %c248 = arith.constant 248 : index
    %c0_36 = arith.constant 0 : index
    %104 = vector.load %arg3[%c248, %c0_36] : memref<1000x128xf32, #tpu.memory_space<vmem>>, vector<1x32xf32>
    %cst_37 = arith.constant dense<0.000000e+00> : vector<32xf32>
    %105 = vector.multi_reduction <add>, %102, %cst_37 [1] : vector<32x32xf32> to vector<32xf32>
    %106 = vector.shape_cast %105 : vector<32xf32> to vector<32x1xf32>
    %cst_38 = arith.constant 3.200000e+01 : f32
    %107 = vector.broadcast %cst_38 : f32 to vector<32x1xf32>
    %108 = arith.divf %106, %107 : vector<32x1xf32>
    %109 = vector.broadcast %108 : vector<32x1xf32> to vector<32x32xf32>
    %110 = arith.subf %102, %109 : vector<32x32xf32>
    %111 = arith.mulf %110, %110 : vector<32x32xf32>
    %cst_39 = arith.constant dense<0.000000e+00> : vector<32xf32>
    %112 = vector.multi_reduction <add>, %111, %cst_39 [1] : vector<32x32xf32> to vector<32xf32>
    %113 = vector.shape_cast %112 : vector<32xf32> to vector<32x1xf32>
    %cst_40 = arith.constant 3.200000e+01 : f32
    %114 = vector.broadcast %cst_40 : f32 to vector<32x1xf32>
    %115 = arith.divf %113, %114 : vector<32x1xf32>
    %cst_41 = arith.constant 9.99999974E-6 : f32
    %116 = vector.broadcast %cst_41 : f32 to vector<32x1xf32>
    %117 = arith.addf %115, %116 : vector<32x1xf32>
    %118 = math.rsqrt %117 : vector<32x1xf32>
    %119 = vector.broadcast %118 : vector<32x1xf32> to vector<32x32xf32>
    %120 = arith.mulf %110, %119 : vector<32x32xf32>
    %121 = vector.broadcast %103 : vector<1x32xf32> to vector<32x32xf32>
    %122 = arith.mulf %120, %121 : vector<32x32xf32>
    %123 = vector.broadcast %104 : vector<1x32xf32> to vector<32x32xf32>
    %124 = arith.addf %122, %123 : vector<32x32xf32>
    %c256 = arith.constant 256 : index
    %c0_42 = arith.constant 0 : index
    %125 = vector.load %arg3[%c256, %c0_42] : memref<1000x128xf32, #tpu.memory_space<vmem>>, vector<32x64xf32>
    %cst_43 = arith.constant dense<0.000000e+00> : vector<32x64xf32>
    %126 = tpu.matmul %124, %125, %cst_43 {dimension_numbers = #tpu.dot_dimension_numbers<[1], [0], [0], [1], [0, 0, 1, 1], [], []>} : vector<32x32xf32>, vector<32x64xf32>, vector<32x64xf32> -> vector<32x64xf32>
    %c288 = arith.constant 288 : index
    %c0_44 = arith.constant 0 : index
    %127 = vector.load %arg3[%c288, %c0_44] : memref<1000x128xf32, #tpu.memory_space<vmem>>, vector<1x64xf32>
    %128 = vector.broadcast %127 : vector<1x64xf32> to vector<32x64xf32>
    %129 = arith.addf %126, %128 : vector<32x64xf32>
    %cst_45 = arith.constant 0.000000e+00 : f32
    %130 = vector.broadcast %cst_45 : f32 to vector<32x64xf32>
    %131 = arith.maximumf %129, %130 : vector<32x64xf32>
    %c296 = arith.constant 296 : index
    %c0_46 = arith.constant 0 : index
    %132 = vector.load %arg3[%c296, %c0_46] : memref<1000x128xf32, #tpu.memory_space<vmem>>, vector<64x32xf32>
    %cst_47 = arith.constant dense<0.000000e+00> : vector<32x32xf32>
    %133 = tpu.matmul %131, %132, %cst_47 {dimension_numbers = #tpu.dot_dimension_numbers<[1], [0], [0], [1], [0, 0, 1, 1], [], []>} : vector<32x64xf32>, vector<64x32xf32>, vector<32x32xf32> -> vector<32x32xf32>
    %c360 = arith.constant 360 : index
    %c0_48 = arith.constant 0 : index
    %134 = vector.load %arg3[%c360, %c0_48] : memref<1000x128xf32, #tpu.memory_space<vmem>>, vector<1x32xf32>
    %135 = vector.broadcast %134 : vector<1x32xf32> to vector<32x32xf32>
    %136 = arith.addf %133, %135 : vector<32x32xf32>
    %137 = arith.addf %124, %136 : vector<32x32xf32>
    %c368 = arith.constant 368 : index
    %c0_49 = arith.constant 0 : index
    %138 = vector.load %arg3[%c368, %c0_49] : memref<1000x128xf32, #tpu.memory_space<vmem>>, vector<1x32xf32>
    %c376 = arith.constant 376 : index
    %c0_50 = arith.constant 0 : index
    %139 = vector.load %arg3[%c376, %c0_50] : memref<1000x128xf32, #tpu.memory_space<vmem>>, vector<1x32xf32>
    %cst_51 = arith.constant dense<0.000000e+00> : vector<32xf32>
    %140 = vector.multi_reduction <add>, %137, %cst_51 [1] : vector<32x32xf32> to vector<32xf32>
    %141 = vector.shape_cast %140 : vector<32xf32> to vector<32x1xf32>
    %cst_52 = arith.constant 3.200000e+01 : f32
    %142 = vector.broadcast %cst_52 : f32 to vector<32x1xf32>
    %143 = arith.divf %141, %142 : vector<32x1xf32>
    %144 = vector.broadcast %143 : vector<32x1xf32> to vector<32x32xf32>
    %145 = arith.subf %137, %144 : vector<32x32xf32>
    %146 = arith.mulf %145, %145 : vector<32x32xf32>
    %cst_53 = arith.constant dense<0.000000e+00> : vector<32xf32>
    %147 = vector.multi_reduction <add>, %146, %cst_53 [1] : vector<32x32xf32> to vector<32xf32>
    %148 = vector.shape_cast %147 : vector<32xf32> to vector<32x1xf32>
    %cst_54 = arith.constant 3.200000e+01 : f32
    %149 = vector.broadcast %cst_54 : f32 to vector<32x1xf32>
    %150 = arith.divf %148, %149 : vector<32x1xf32>
    %cst_55 = arith.constant 9.99999974E-6 : f32
    %151 = vector.broadcast %cst_55 : f32 to vector<32x1xf32>
    %152 = arith.addf %150, %151 : vector<32x1xf32>
    %153 = math.rsqrt %152 : vector<32x1xf32>
    %154 = vector.broadcast %153 : vector<32x1xf32> to vector<32x32xf32>
    %155 = arith.mulf %145, %154 : vector<32x32xf32>
    %156 = vector.broadcast %138 : vector<1x32xf32> to vector<32x32xf32>
    %157 = arith.mulf %155, %156 : vector<32x32xf32>
    %158 = vector.broadcast %139 : vector<1x32xf32> to vector<32x32xf32>
    %159 = arith.addf %157, %158 : vector<32x32xf32>
    %c384 = arith.constant 384 : index
    %c0_56 = arith.constant 0 : index
    %160 = vector.load %arg3[%c384, %c0_56] : memref<1000x128xf32, #tpu.memory_space<vmem>>, vector<32x96xf32>
    %c416 = arith.constant 416 : index
    %c0_57 = arith.constant 0 : index
    %161 = vector.load %arg3[%c416, %c0_57] : memref<1000x128xf32, #tpu.memory_space<vmem>>, vector<1x96xf32>
    %c424 = arith.constant 424 : index
    %c0_58 = arith.constant 0 : index
    %162 = vector.load %arg3[%c424, %c0_58] : memref<1000x128xf32, #tpu.memory_space<vmem>>, vector<32x32xf32>
    %c456 = arith.constant 456 : index
    %c0_59 = arith.constant 0 : index
    %163 = vector.load %arg3[%c456, %c0_59] : memref<1000x128xf32, #tpu.memory_space<vmem>>, vector<1x32xf32>
    %cst_60 = arith.constant dense<0.000000e+00> : vector<32x96xf32>
    %164 = tpu.matmul %159, %160, %cst_60 {dimension_numbers = #tpu.dot_dimension_numbers<[1], [0], [0], [1], [0, 0, 1, 1], [], []>} : vector<32x32xf32>, vector<32x96xf32>, vector<32x96xf32> -> vector<32x96xf32>
    %165 = vector.broadcast %161 : vector<1x96xf32> to vector<32x96xf32>
    %166 = arith.addf %164, %165 : vector<32x96xf32>
    %167 = vector.extract_strided_slice %166 {offsets = [0, 0], sizes = [32, 32], strides = [1, 1]} : vector<32x96xf32> to vector<32x32xf32>
    %168 = vector.extract_strided_slice %166 {offsets = [0, 32], sizes = [32, 32], strides = [1, 1]} : vector<32x96xf32> to vector<32x32xf32>
    %169 = vector.extract_strided_slice %166 {offsets = [0, 64], sizes = [32, 32], strides = [1, 1]} : vector<32x96xf32> to vector<32x32xf32>
    %170 = vector.extract_strided_slice %167 {offsets = [0, 0], sizes = [32, 8], strides = [1, 1]} : vector<32x32xf32> to vector<32x8xf32>
    %171 = vector.extract_strided_slice %168 {offsets = [0, 0], sizes = [32, 8], strides = [1, 1]} : vector<32x32xf32> to vector<32x8xf32>
    %cst_61 = arith.constant dense<0.000000e+00> : vector<32x32xf32>
    %172 = tpu.matmul %170, %171, %cst_61 {dimension_numbers = #tpu.dot_dimension_numbers<[1], [1], [0], [0], [0, 0, 1, 0], [], []>} : vector<32x8xf32>, vector<32x8xf32>, vector<32x32xf32> -> vector<32x32xf32>
    %cst_62 = arith.constant 0.353553385 : f32
    %173 = vector.broadcast %cst_62 : f32 to vector<32x32xf32>
    %174 = arith.mulf %172, %173 : vector<32x32xf32>
    %175 = arith.addf %174, %0 : vector<32x32xf32>
    %cst_63 = arith.constant dense<0xFF800000> : vector<32xf32>
    %176 = vector.multi_reduction <maximumf>, %175, %cst_63 [1] : vector<32x32xf32> to vector<32xf32>
    %177 = vector.shape_cast %176 : vector<32xf32> to vector<32x1xf32>
    %178 = vector.broadcast %177 : vector<32x1xf32> to vector<32x32xf32>
    %179 = arith.subf %175, %178 : vector<32x32xf32>
    %180 = math.exp %179 : vector<32x32xf32>
    %cst_64 = arith.constant dense<0.000000e+00> : vector<32xf32>
    %181 = vector.multi_reduction <add>, %180, %cst_64 [1] : vector<32x32xf32> to vector<32xf32>
    %182 = vector.shape_cast %181 : vector<32xf32> to vector<32x1xf32>
    %183 = tpu.reciprocal %182 {approx = true} : vector<32x1xf32> -> vector<32x1xf32>
    %184 = vector.broadcast %183 : vector<32x1xf32> to vector<32x32xf32>
    %185 = arith.mulf %180, %184 : vector<32x32xf32>
    %186 = vector.extract_strided_slice %169 {offsets = [0, 0], sizes = [32, 8], strides = [1, 1]} : vector<32x32xf32> to vector<32x8xf32>
    %cst_65 = arith.constant dense<0.000000e+00> : vector<32x8xf32>
    %187 = tpu.matmul %185, %186, %cst_65 {dimension_numbers = #tpu.dot_dimension_numbers<[1], [0], [0], [1], [0, 0, 1, 1], [], []>} : vector<32x32xf32>, vector<32x8xf32>, vector<32x8xf32> -> vector<32x8xf32>
    %188 = vector.extract_strided_slice %162 {offsets = [0, 0], sizes = [8, 32], strides = [1, 1]} : vector<32x32xf32> to vector<8x32xf32>
    %cst_66 = arith.constant dense<0.000000e+00> : vector<32x32xf32>
    %189 = tpu.matmul %187, %188, %cst_66 {dimension_numbers = #tpu.dot_dimension_numbers<[1], [0], [0], [1], [0, 0, 1, 1], [], []>} : vector<32x8xf32>, vector<8x32xf32>, vector<32x32xf32> -> vector<32x32xf32>
    %190 = vector.extract_strided_slice %167 {offsets = [0, 8], sizes = [32, 8], strides = [1, 1]} : vector<32x32xf32> to vector<32x8xf32>
    %191 = vector.extract_strided_slice %168 {offsets = [0, 8], sizes = [32, 8], strides = [1, 1]} : vector<32x32xf32> to vector<32x8xf32>
    %cst_67 = arith.constant dense<0.000000e+00> : vector<32x32xf32>
    %192 = tpu.matmul %190, %191, %cst_67 {dimension_numbers = #tpu.dot_dimension_numbers<[1], [1], [0], [0], [0, 0, 1, 0], [], []>} : vector<32x8xf32>, vector<32x8xf32>, vector<32x32xf32> -> vector<32x32xf32>
    %cst_68 = arith.constant 0.353553385 : f32
    %193 = vector.broadcast %cst_68 : f32 to vector<32x32xf32>
    %194 = arith.mulf %192, %193 : vector<32x32xf32>
    %195 = arith.addf %194, %0 : vector<32x32xf32>
    %cst_69 = arith.constant dense<0xFF800000> : vector<32xf32>
    %196 = vector.multi_reduction <maximumf>, %195, %cst_69 [1] : vector<32x32xf32> to vector<32xf32>
    %197 = vector.shape_cast %196 : vector<32xf32> to vector<32x1xf32>
    %198 = vector.broadcast %197 : vector<32x1xf32> to vector<32x32xf32>
    %199 = arith.subf %195, %198 : vector<32x32xf32>
    %200 = math.exp %199 : vector<32x32xf32>
    %cst_70 = arith.constant dense<0.000000e+00> : vector<32xf32>
    %201 = vector.multi_reduction <add>, %200, %cst_70 [1] : vector<32x32xf32> to vector<32xf32>
    %202 = vector.shape_cast %201 : vector<32xf32> to vector<32x1xf32>
    %203 = tpu.reciprocal %202 {approx = true} : vector<32x1xf32> -> vector<32x1xf32>
    %204 = vector.broadcast %203 : vector<32x1xf32> to vector<32x32xf32>
    %205 = arith.mulf %200, %204 : vector<32x32xf32>
    %206 = vector.extract_strided_slice %169 {offsets = [0, 8], sizes = [32, 8], strides = [1, 1]} : vector<32x32xf32> to vector<32x8xf32>
    %cst_71 = arith.constant dense<0.000000e+00> : vector<32x8xf32>
    %207 = tpu.matmul %205, %206, %cst_71 {dimension_numbers = #tpu.dot_dimension_numbers<[1], [0], [0], [1], [0, 0, 1, 1], [], []>} : vector<32x32xf32>, vector<32x8xf32>, vector<32x8xf32> -> vector<32x8xf32>
    %208 = vector.extract_strided_slice %162 {offsets = [8, 0], sizes = [8, 32], strides = [1, 1]} : vector<32x32xf32> to vector<8x32xf32>
    %cst_72 = arith.constant dense<0.000000e+00> : vector<32x32xf32>
    %209 = tpu.matmul %207, %208, %cst_72 {dimension_numbers = #tpu.dot_dimension_numbers<[1], [0], [0], [1], [0, 0, 1, 1], [], []>} : vector<32x8xf32>, vector<8x32xf32>, vector<32x32xf32> -> vector<32x32xf32>
    %210 = arith.addf %189, %209 : vector<32x32xf32>
    %211 = vector.extract_strided_slice %167 {offsets = [0, 16], sizes = [32, 8], strides = [1, 1]} : vector<32x32xf32> to vector<32x8xf32>
    %212 = vector.extract_strided_slice %168 {offsets = [0, 16], sizes = [32, 8], strides = [1, 1]} : vector<32x32xf32> to vector<32x8xf32>
    %cst_73 = arith.constant dense<0.000000e+00> : vector<32x32xf32>
    %213 = tpu.matmul %211, %212, %cst_73 {dimension_numbers = #tpu.dot_dimension_numbers<[1], [1], [0], [0], [0, 0, 1, 0], [], []>} : vector<32x8xf32>, vector<32x8xf32>, vector<32x32xf32> -> vector<32x32xf32>
    %cst_74 = arith.constant 0.353553385 : f32
    %214 = vector.broadcast %cst_74 : f32 to vector<32x32xf32>
    %215 = arith.mulf %213, %214 : vector<32x32xf32>
    %216 = arith.addf %215, %0 : vector<32x32xf32>
    %cst_75 = arith.constant dense<0xFF800000> : vector<32xf32>
    %217 = vector.multi_reduction <maximumf>, %216, %cst_75 [1] : vector<32x32xf32> to vector<32xf32>
    %218 = vector.shape_cast %217 : vector<32xf32> to vector<32x1xf32>
    %219 = vector.broadcast %218 : vector<32x1xf32> to vector<32x32xf32>
    %220 = arith.subf %216, %219 : vector<32x32xf32>
    %221 = math.exp %220 : vector<32x32xf32>
    %cst_76 = arith.constant dense<0.000000e+00> : vector<32xf32>
    %222 = vector.multi_reduction <add>, %221, %cst_76 [1] : vector<32x32xf32> to vector<32xf32>
    %223 = vector.shape_cast %222 : vector<32xf32> to vector<32x1xf32>
    %224 = tpu.reciprocal %223 {approx = true} : vector<32x1xf32> -> vector<32x1xf32>
    %225 = vector.broadcast %224 : vector<32x1xf32> to vector<32x32xf32>
    %226 = arith.mulf %221, %225 : vector<32x32xf32>
    %227 = vector.extract_strided_slice %169 {offsets = [0, 16], sizes = [32, 8], strides = [1, 1]} : vector<32x32xf32> to vector<32x8xf32>
    %cst_77 = arith.constant dense<0.000000e+00> : vector<32x8xf32>
    %228 = tpu.matmul %226, %227, %cst_77 {dimension_numbers = #tpu.dot_dimension_numbers<[1], [0], [0], [1], [0, 0, 1, 1], [], []>} : vector<32x32xf32>, vector<32x8xf32>, vector<32x8xf32> -> vector<32x8xf32>
    %229 = vector.extract_strided_slice %162 {offsets = [16, 0], sizes = [8, 32], strides = [1, 1]} : vector<32x32xf32> to vector<8x32xf32>
    %cst_78 = arith.constant dense<0.000000e+00> : vector<32x32xf32>
    %230 = tpu.matmul %228, %229, %cst_78 {dimension_numbers = #tpu.dot_dimension_numbers<[1], [0], [0], [1], [0, 0, 1, 1], [], []>} : vector<32x8xf32>, vector<8x32xf32>, vector<32x32xf32> -> vector<32x32xf32>
    %231 = arith.addf %210, %230 : vector<32x32xf32>
    %232 = vector.extract_strided_slice %167 {offsets = [0, 24], sizes = [32, 8], strides = [1, 1]} : vector<32x32xf32> to vector<32x8xf32>
    %233 = vector.extract_strided_slice %168 {offsets = [0, 24], sizes = [32, 8], strides = [1, 1]} : vector<32x32xf32> to vector<32x8xf32>
    %cst_79 = arith.constant dense<0.000000e+00> : vector<32x32xf32>
    %234 = tpu.matmul %232, %233, %cst_79 {dimension_numbers = #tpu.dot_dimension_numbers<[1], [1], [0], [0], [0, 0, 1, 0], [], []>} : vector<32x8xf32>, vector<32x8xf32>, vector<32x32xf32> -> vector<32x32xf32>
    %cst_80 = arith.constant 0.353553385 : f32
    %235 = vector.broadcast %cst_80 : f32 to vector<32x32xf32>
    %236 = arith.mulf %234, %235 : vector<32x32xf32>
    %237 = arith.addf %236, %0 : vector<32x32xf32>
    %cst_81 = arith.constant dense<0xFF800000> : vector<32xf32>
    %238 = vector.multi_reduction <maximumf>, %237, %cst_81 [1] : vector<32x32xf32> to vector<32xf32>
    %239 = vector.shape_cast %238 : vector<32xf32> to vector<32x1xf32>
    %240 = vector.broadcast %239 : vector<32x1xf32> to vector<32x32xf32>
    %241 = arith.subf %237, %240 : vector<32x32xf32>
    %242 = math.exp %241 : vector<32x32xf32>
    %cst_82 = arith.constant dense<0.000000e+00> : vector<32xf32>
    %243 = vector.multi_reduction <add>, %242, %cst_82 [1] : vector<32x32xf32> to vector<32xf32>
    %244 = vector.shape_cast %243 : vector<32xf32> to vector<32x1xf32>
    %245 = tpu.reciprocal %244 {approx = true} : vector<32x1xf32> -> vector<32x1xf32>
    %246 = vector.broadcast %245 : vector<32x1xf32> to vector<32x32xf32>
    %247 = arith.mulf %242, %246 : vector<32x32xf32>
    %248 = vector.extract_strided_slice %169 {offsets = [0, 24], sizes = [32, 8], strides = [1, 1]} : vector<32x32xf32> to vector<32x8xf32>
    %cst_83 = arith.constant dense<0.000000e+00> : vector<32x8xf32>
    %249 = tpu.matmul %247, %248, %cst_83 {dimension_numbers = #tpu.dot_dimension_numbers<[1], [0], [0], [1], [0, 0, 1, 1], [], []>} : vector<32x32xf32>, vector<32x8xf32>, vector<32x8xf32> -> vector<32x8xf32>
    %250 = vector.extract_strided_slice %162 {offsets = [24, 0], sizes = [8, 32], strides = [1, 1]} : vector<32x32xf32> to vector<8x32xf32>
    %cst_84 = arith.constant dense<0.000000e+00> : vector<32x32xf32>
    %251 = tpu.matmul %249, %250, %cst_84 {dimension_numbers = #tpu.dot_dimension_numbers<[1], [0], [0], [1], [0, 0, 1, 1], [], []>} : vector<32x8xf32>, vector<8x32xf32>, vector<32x32xf32> -> vector<32x32xf32>
    %252 = arith.addf %231, %251 : vector<32x32xf32>
    %253 = vector.broadcast %163 : vector<1x32xf32> to vector<32x32xf32>
    %254 = arith.addf %252, %253 : vector<32x32xf32>
    %255 = arith.addf %159, %254 : vector<32x32xf32>
    %c464 = arith.constant 464 : index
    %c0_85 = arith.constant 0 : index
    %256 = vector.load %arg3[%c464, %c0_85] : memref<1000x128xf32, #tpu.memory_space<vmem>>, vector<1x32xf32>
    %c472 = arith.constant 472 : index
    %c0_86 = arith.constant 0 : index
    %257 = vector.load %arg3[%c472, %c0_86] : memref<1000x128xf32, #tpu.memory_space<vmem>>, vector<1x32xf32>
    %cst_87 = arith.constant dense<0.000000e+00> : vector<32xf32>
    %258 = vector.multi_reduction <add>, %255, %cst_87 [1] : vector<32x32xf32> to vector<32xf32>
    %259 = vector.shape_cast %258 : vector<32xf32> to vector<32x1xf32>
    %cst_88 = arith.constant 3.200000e+01 : f32
    %260 = vector.broadcast %cst_88 : f32 to vector<32x1xf32>
    %261 = arith.divf %259, %260 : vector<32x1xf32>
    %262 = vector.broadcast %261 : vector<32x1xf32> to vector<32x32xf32>
    %263 = arith.subf %255, %262 : vector<32x32xf32>
    %264 = arith.mulf %263, %263 : vector<32x32xf32>
    %cst_89 = arith.constant dense<0.000000e+00> : vector<32xf32>
    %265 = vector.multi_reduction <add>, %264, %cst_89 [1] : vector<32x32xf32> to vector<32xf32>
    %266 = vector.shape_cast %265 : vector<32xf32> to vector<32x1xf32>
    %cst_90 = arith.constant 3.200000e+01 : f32
    %267 = vector.broadcast %cst_90 : f32 to vector<32x1xf32>
    %268 = arith.divf %266, %267 : vector<32x1xf32>
    %cst_91 = arith.constant 9.99999974E-6 : f32
    %269 = vector.broadcast %cst_91 : f32 to vector<32x1xf32>
    %270 = arith.addf %268, %269 : vector<32x1xf32>
    %271 = math.rsqrt %270 : vector<32x1xf32>
    %272 = vector.broadcast %271 : vector<32x1xf32> to vector<32x32xf32>
    %273 = arith.mulf %263, %272 : vector<32x32xf32>
    %274 = vector.broadcast %256 : vector<1x32xf32> to vector<32x32xf32>
    %275 = arith.mulf %273, %274 : vector<32x32xf32>
    %276 = vector.broadcast %257 : vector<1x32xf32> to vector<32x32xf32>
    %277 = arith.addf %275, %276 : vector<32x32xf32>
    %c480 = arith.constant 480 : index
    %c0_92 = arith.constant 0 : index
    %278 = vector.load %arg3[%c480, %c0_92] : memref<1000x128xf32, #tpu.memory_space<vmem>>, vector<32x64xf32>
    %cst_93 = arith.constant dense<0.000000e+00> : vector<32x64xf32>
    %279 = tpu.matmul %277, %278, %cst_93 {dimension_numbers = #tpu.dot_dimension_numbers<[1], [0], [0], [1], [0, 0, 1, 1], [], []>} : vector<32x32xf32>, vector<32x64xf32>, vector<32x64xf32> -> vector<32x64xf32>
    %c512 = arith.constant 512 : index
    %c0_94 = arith.constant 0 : index
    %280 = vector.load %arg3[%c512, %c0_94] : memref<1000x128xf32, #tpu.memory_space<vmem>>, vector<1x64xf32>
    %281 = vector.broadcast %280 : vector<1x64xf32> to vector<32x64xf32>
    %282 = arith.addf %279, %281 : vector<32x64xf32>
    %cst_95 = arith.constant 0.000000e+00 : f32
    %283 = vector.broadcast %cst_95 : f32 to vector<32x64xf32>
    %284 = arith.maximumf %282, %283 : vector<32x64xf32>
    %c520 = arith.constant 520 : index
    %c0_96 = arith.constant 0 : index
    %285 = vector.load %arg3[%c520, %c0_96] : memref<1000x128xf32, #tpu.memory_space<vmem>>, vector<64x32xf32>
    %cst_97 = arith.constant dense<0.000000e+00> : vector<32x32xf32>
    %286 = tpu.matmul %284, %285, %cst_97 {dimension_numbers = #tpu.dot_dimension_numbers<[1], [0], [0], [1], [0, 0, 1, 1], [], []>} : vector<32x64xf32>, vector<64x32xf32>, vector<32x32xf32> -> vector<32x32xf32>
    %c584 = arith.constant 584 : index
    %c0_98 = arith.constant 0 : index
    %287 = vector.load %arg3[%c584, %c0_98] : memref<1000x128xf32, #tpu.memory_space<vmem>>, vector<1x32xf32>
    %288 = vector.broadcast %287 : vector<1x32xf32> to vector<32x32xf32>
    %289 = arith.addf %286, %288 : vector<32x32xf32>
    %290 = arith.addf %277, %289 : vector<32x32xf32>
    %c592 = arith.constant 592 : index
    %c0_99 = arith.constant 0 : index
    %291 = vector.load %arg3[%c592, %c0_99] : memref<1000x128xf32, #tpu.memory_space<vmem>>, vector<1x32xf32>
    %c600 = arith.constant 600 : index
    %c0_100 = arith.constant 0 : index
    %292 = vector.load %arg3[%c600, %c0_100] : memref<1000x128xf32, #tpu.memory_space<vmem>>, vector<1x32xf32>
    %cst_101 = arith.constant dense<0.000000e+00> : vector<32xf32>
    %293 = vector.multi_reduction <add>, %290, %cst_101 [1] : vector<32x32xf32> to vector<32xf32>
    %294 = vector.shape_cast %293 : vector<32xf32> to vector<32x1xf32>
    %cst_102 = arith.constant 3.200000e+01 : f32
    %295 = vector.broadcast %cst_102 : f32 to vector<32x1xf32>
    %296 = arith.divf %294, %295 : vector<32x1xf32>
    %297 = vector.broadcast %296 : vector<32x1xf32> to vector<32x32xf32>
    %298 = arith.subf %290, %297 : vector<32x32xf32>
    %299 = arith.mulf %298, %298 : vector<32x32xf32>
    %cst_103 = arith.constant dense<0.000000e+00> : vector<32xf32>
    %300 = vector.multi_reduction <add>, %299, %cst_103 [1] : vector<32x32xf32> to vector<32xf32>
    %301 = vector.shape_cast %300 : vector<32xf32> to vector<32x1xf32>
    %cst_104 = arith.constant 3.200000e+01 : f32
    %302 = vector.broadcast %cst_104 : f32 to vector<32x1xf32>
    %303 = arith.divf %301, %302 : vector<32x1xf32>
    %cst_105 = arith.constant 9.99999974E-6 : f32
    %304 = vector.broadcast %cst_105 : f32 to vector<32x1xf32>
    %305 = arith.addf %303, %304 : vector<32x1xf32>
    %306 = math.rsqrt %305 : vector<32x1xf32>
    %307 = vector.broadcast %306 : vector<32x1xf32> to vector<32x32xf32>
    %308 = arith.mulf %298, %307 : vector<32x32xf32>
    %309 = vector.broadcast %291 : vector<1x32xf32> to vector<32x32xf32>
    %310 = arith.mulf %308, %309 : vector<32x32xf32>
    %311 = vector.broadcast %292 : vector<1x32xf32> to vector<32x32xf32>
    %312 = arith.addf %310, %311 : vector<32x32xf32>
    %c608 = arith.constant 608 : index
    %c0_106 = arith.constant 0 : index
    %313 = vector.load %arg3[%c608, %c0_106] : memref<1000x128xf32, #tpu.memory_space<vmem>>, vector<1x32xf32>
    %c616 = arith.constant 616 : index
    %c0_107 = arith.constant 0 : index
    %314 = vector.load %arg3[%c616, %c0_107] : memref<1000x128xf32, #tpu.memory_space<vmem>>, vector<1x32xf32>
    %cst_108 = arith.constant dense<0.000000e+00> : vector<32xf32>
    %315 = vector.multi_reduction <add>, %312, %cst_108 [1] : vector<32x32xf32> to vector<32xf32>
    %316 = vector.shape_cast %315 : vector<32xf32> to vector<32x1xf32>
    %cst_109 = arith.constant 3.200000e+01 : f32
    %317 = vector.broadcast %cst_109 : f32 to vector<32x1xf32>
    %318 = arith.divf %316, %317 : vector<32x1xf32>
    %319 = vector.broadcast %318 : vector<32x1xf32> to vector<32x32xf32>
    %320 = arith.subf %312, %319 : vector<32x32xf32>
    %321 = arith.mulf %320, %320 : vector<32x32xf32>
    %cst_110 = arith.constant dense<0.000000e+00> : vector<32xf32>
    %322 = vector.multi_reduction <add>, %321, %cst_110 [1] : vector<32x32xf32> to vector<32xf32>
    %323 = vector.shape_cast %322 : vector<32xf32> to vector<32x1xf32>
    %cst_111 = arith.constant 3.200000e+01 : f32
    %324 = vector.broadcast %cst_111 : f32 to vector<32x1xf32>
    %325 = arith.divf %323, %324 : vector<32x1xf32>
    %cst_112 = arith.constant 9.99999974E-6 : f32
    %326 = vector.broadcast %cst_112 : f32 to vector<32x1xf32>
    %327 = arith.addf %325, %326 : vector<32x1xf32>
    %328 = math.rsqrt %327 : vector<32x1xf32>
    %329 = vector.broadcast %328 : vector<32x1xf32> to vector<32x32xf32>
    %330 = arith.mulf %320, %329 : vector<32x32xf32>
    %331 = vector.broadcast %313 : vector<1x32xf32> to vector<32x32xf32>
    %332 = arith.mulf %330, %331 : vector<32x32xf32>
    %333 = vector.broadcast %314 : vector<1x32xf32> to vector<32x32xf32>
    %334 = arith.addf %332, %333 : vector<32x32xf32>
    %c0_113 = arith.constant 0 : index
    %c0_114 = arith.constant 0 : index
    %335 = vector.load %arg2[%c0_113, %c0_114] : memref<32x16xf32, #tpu.memory_space<vmem>>, vector<32x16xf32>
    %c16 = arith.constant 16 : index
    %c0_115 = arith.constant 0 : index
    %336 = vector.load %arg3[%c16, %c0_115] : memref<1000x128xf32, #tpu.memory_space<vmem>>, vector<16x32xf32>
    %cst_116 = arith.constant dense<0.000000e+00> : vector<32x32xf32>
    %337 = tpu.matmul %335, %336, %cst_116 {dimension_numbers = #tpu.dot_dimension_numbers<[1], [0], [0], [1], [0, 0, 1, 1], [], []>} : vector<32x16xf32>, vector<16x32xf32>, vector<32x32xf32> -> vector<32x32xf32>
    %c64 = arith.constant 64 : index
    %c0_117 = arith.constant 0 : index
    %338 = vector.load %arg3[%c64, %c0_117] : memref<1000x128xf32, #tpu.memory_space<vmem>>, vector<32x32xf32>
    %339 = arith.addf %337, %338 : vector<32x32xf32>
    %c624 = arith.constant 624 : index
    %c0_118 = arith.constant 0 : index
    %340 = vector.load %arg3[%c624, %c0_118] : memref<1000x128xf32, #tpu.memory_space<vmem>>, vector<32x96xf32>
    %c656 = arith.constant 656 : index
    %c0_119 = arith.constant 0 : index
    %341 = vector.load %arg3[%c656, %c0_119] : memref<1000x128xf32, #tpu.memory_space<vmem>>, vector<1x96xf32>
    %c664 = arith.constant 664 : index
    %c0_120 = arith.constant 0 : index
    %342 = vector.load %arg3[%c664, %c0_120] : memref<1000x128xf32, #tpu.memory_space<vmem>>, vector<32x32xf32>
    %c696 = arith.constant 696 : index
    %c0_121 = arith.constant 0 : index
    %343 = vector.load %arg3[%c696, %c0_121] : memref<1000x128xf32, #tpu.memory_space<vmem>>, vector<1x32xf32>
    %cst_122 = arith.constant dense<0.000000e+00> : vector<32x96xf32>
    %344 = tpu.matmul %339, %340, %cst_122 {dimension_numbers = #tpu.dot_dimension_numbers<[1], [0], [0], [1], [0, 0, 1, 1], [], []>} : vector<32x32xf32>, vector<32x96xf32>, vector<32x96xf32> -> vector<32x96xf32>
    %345 = vector.broadcast %341 : vector<1x96xf32> to vector<32x96xf32>
    %346 = arith.addf %344, %345 : vector<32x96xf32>
    %347 = vector.extract_strided_slice %346 {offsets = [0, 0], sizes = [32, 32], strides = [1, 1]} : vector<32x96xf32> to vector<32x32xf32>
    %348 = vector.extract_strided_slice %346 {offsets = [0, 32], sizes = [32, 32], strides = [1, 1]} : vector<32x96xf32> to vector<32x32xf32>
    %349 = vector.extract_strided_slice %346 {offsets = [0, 64], sizes = [32, 32], strides = [1, 1]} : vector<32x96xf32> to vector<32x32xf32>
    %350 = vector.extract_strided_slice %347 {offsets = [0, 0], sizes = [32, 8], strides = [1, 1]} : vector<32x32xf32> to vector<32x8xf32>
    %351 = vector.extract_strided_slice %348 {offsets = [0, 0], sizes = [32, 8], strides = [1, 1]} : vector<32x32xf32> to vector<32x8xf32>
    %cst_123 = arith.constant dense<0.000000e+00> : vector<32x32xf32>
    %352 = tpu.matmul %350, %351, %cst_123 {dimension_numbers = #tpu.dot_dimension_numbers<[1], [1], [0], [0], [0, 0, 1, 0], [], []>} : vector<32x8xf32>, vector<32x8xf32>, vector<32x32xf32> -> vector<32x32xf32>
    %cst_124 = arith.constant 0.353553385 : f32
    %353 = vector.broadcast %cst_124 : f32 to vector<32x32xf32>
    %354 = arith.mulf %352, %353 : vector<32x32xf32>
    %355 = arith.addf %354, %1 : vector<32x32xf32>
    %cst_125 = arith.constant dense<0xFF800000> : vector<32xf32>
    %356 = vector.multi_reduction <maximumf>, %355, %cst_125 [1] : vector<32x32xf32> to vector<32xf32>
    %357 = vector.shape_cast %356 : vector<32xf32> to vector<32x1xf32>
    %358 = vector.broadcast %357 : vector<32x1xf32> to vector<32x32xf32>
    %359 = arith.subf %355, %358 : vector<32x32xf32>
    %360 = math.exp %359 : vector<32x32xf32>
    %cst_126 = arith.constant dense<0.000000e+00> : vector<32xf32>
    %361 = vector.multi_reduction <add>, %360, %cst_126 [1] : vector<32x32xf32> to vector<32xf32>
    %362 = vector.shape_cast %361 : vector<32xf32> to vector<32x1xf32>
    %363 = tpu.reciprocal %362 {approx = true} : vector<32x1xf32> -> vector<32x1xf32>
    %364 = vector.broadcast %363 : vector<32x1xf32> to vector<32x32xf32>
    %365 = arith.mulf %360, %364 : vector<32x32xf32>
    %366 = vector.extract_strided_slice %349 {offsets = [0, 0], sizes = [32, 8], strides = [1, 1]} : vector<32x32xf32> to vector<32x8xf32>
    %cst_127 = arith.constant dense<0.000000e+00> : vector<32x8xf32>
    %367 = tpu.matmul %365, %366, %cst_127 {dimension_numbers = #tpu.dot_dimension_numbers<[1], [0], [0], [1], [0, 0, 1, 1], [], []>} : vector<32x32xf32>, vector<32x8xf32>, vector<32x8xf32> -> vector<32x8xf32>
    %368 = vector.extract_strided_slice %342 {offsets = [0, 0], sizes = [8, 32], strides = [1, 1]} : vector<32x32xf32> to vector<8x32xf32>
    %cst_128 = arith.constant dense<0.000000e+00> : vector<32x32xf32>
    %369 = tpu.matmul %367, %368, %cst_128 {dimension_numbers = #tpu.dot_dimension_numbers<[1], [0], [0], [1], [0, 0, 1, 1], [], []>} : vector<32x8xf32>, vector<8x32xf32>, vector<32x32xf32> -> vector<32x32xf32>
    %370 = vector.extract_strided_slice %347 {offsets = [0, 8], sizes = [32, 8], strides = [1, 1]} : vector<32x32xf32> to vector<32x8xf32>
    %371 = vector.extract_strided_slice %348 {offsets = [0, 8], sizes = [32, 8], strides = [1, 1]} : vector<32x32xf32> to vector<32x8xf32>
    %cst_129 = arith.constant dense<0.000000e+00> : vector<32x32xf32>
    %372 = tpu.matmul %370, %371, %cst_129 {dimension_numbers = #tpu.dot_dimension_numbers<[1], [1], [0], [0], [0, 0, 1, 0], [], []>} : vector<32x8xf32>, vector<32x8xf32>, vector<32x32xf32> -> vector<32x32xf32>
    %cst_130 = arith.constant 0.353553385 : f32
    %373 = vector.broadcast %cst_130 : f32 to vector<32x32xf32>
    %374 = arith.mulf %372, %373 : vector<32x32xf32>
    %375 = arith.addf %374, %1 : vector<32x32xf32>
    %cst_131 = arith.constant dense<0xFF800000> : vector<32xf32>
    %376 = vector.multi_reduction <maximumf>, %375, %cst_131 [1] : vector<32x32xf32> to vector<32xf32>
    %377 = vector.shape_cast %376 : vector<32xf32> to vector<32x1xf32>
    %378 = vector.broadcast %377 : vector<32x1xf32> to vector<32x32xf32>
    %379 = arith.subf %375, %378 : vector<32x32xf32>
    %380 = math.exp %379 : vector<32x32xf32>
    %cst_132 = arith.constant dense<0.000000e+00> : vector<32xf32>
    %381 = vector.multi_reduction <add>, %380, %cst_132 [1] : vector<32x32xf32> to vector<32xf32>
    %382 = vector.shape_cast %381 : vector<32xf32> to vector<32x1xf32>
    %383 = tpu.reciprocal %382 {approx = true} : vector<32x1xf32> -> vector<32x1xf32>
    %384 = vector.broadcast %383 : vector<32x1xf32> to vector<32x32xf32>
    %385 = arith.mulf %380, %384 : vector<32x32xf32>
    %386 = vector.extract_strided_slice %349 {offsets = [0, 8], sizes = [32, 8], strides = [1, 1]} : vector<32x32xf32> to vector<32x8xf32>
    %cst_133 = arith.constant dense<0.000000e+00> : vector<32x8xf32>
    %387 = tpu.matmul %385, %386, %cst_133 {dimension_numbers = #tpu.dot_dimension_numbers<[1], [0], [0], [1], [0, 0, 1, 1], [], []>} : vector<32x32xf32>, vector<32x8xf32>, vector<32x8xf32> -> vector<32x8xf32>
    %388 = vector.extract_strided_slice %342 {offsets = [8, 0], sizes = [8, 32], strides = [1, 1]} : vector<32x32xf32> to vector<8x32xf32>
    %cst_134 = arith.constant dense<0.000000e+00> : vector<32x32xf32>
    %389 = tpu.matmul %387, %388, %cst_134 {dimension_numbers = #tpu.dot_dimension_numbers<[1], [0], [0], [1], [0, 0, 1, 1], [], []>} : vector<32x8xf32>, vector<8x32xf32>, vector<32x32xf32> -> vector<32x32xf32>
    %390 = arith.addf %369, %389 : vector<32x32xf32>
    %391 = vector.extract_strided_slice %347 {offsets = [0, 16], sizes = [32, 8], strides = [1, 1]} : vector<32x32xf32> to vector<32x8xf32>
    %392 = vector.extract_strided_slice %348 {offsets = [0, 16], sizes = [32, 8], strides = [1, 1]} : vector<32x32xf32> to vector<32x8xf32>
    %cst_135 = arith.constant dense<0.000000e+00> : vector<32x32xf32>
    %393 = tpu.matmul %391, %392, %cst_135 {dimension_numbers = #tpu.dot_dimension_numbers<[1], [1], [0], [0], [0, 0, 1, 0], [], []>} : vector<32x8xf32>, vector<32x8xf32>, vector<32x32xf32> -> vector<32x32xf32>
    %cst_136 = arith.constant 0.353553385 : f32
    %394 = vector.broadcast %cst_136 : f32 to vector<32x32xf32>
    %395 = arith.mulf %393, %394 : vector<32x32xf32>
    %396 = arith.addf %395, %1 : vector<32x32xf32>
    %cst_137 = arith.constant dense<0xFF800000> : vector<32xf32>
    %397 = vector.multi_reduction <maximumf>, %396, %cst_137 [1] : vector<32x32xf32> to vector<32xf32>
    %398 = vector.shape_cast %397 : vector<32xf32> to vector<32x1xf32>
    %399 = vector.broadcast %398 : vector<32x1xf32> to vector<32x32xf32>
    %400 = arith.subf %396, %399 : vector<32x32xf32>
    %401 = math.exp %400 : vector<32x32xf32>
    %cst_138 = arith.constant dense<0.000000e+00> : vector<32xf32>
    %402 = vector.multi_reduction <add>, %401, %cst_138 [1] : vector<32x32xf32> to vector<32xf32>
    %403 = vector.shape_cast %402 : vector<32xf32> to vector<32x1xf32>
    %404 = tpu.reciprocal %403 {approx = true} : vector<32x1xf32> -> vector<32x1xf32>
    %405 = vector.broadcast %404 : vector<32x1xf32> to vector<32x32xf32>
    %406 = arith.mulf %401, %405 : vector<32x32xf32>
    %407 = vector.extract_strided_slice %349 {offsets = [0, 16], sizes = [32, 8], strides = [1, 1]} : vector<32x32xf32> to vector<32x8xf32>
    %cst_139 = arith.constant dense<0.000000e+00> : vector<32x8xf32>
    %408 = tpu.matmul %406, %407, %cst_139 {dimension_numbers = #tpu.dot_dimension_numbers<[1], [0], [0], [1], [0, 0, 1, 1], [], []>} : vector<32x32xf32>, vector<32x8xf32>, vector<32x8xf32> -> vector<32x8xf32>
    %409 = vector.extract_strided_slice %342 {offsets = [16, 0], sizes = [8, 32], strides = [1, 1]} : vector<32x32xf32> to vector<8x32xf32>
    %cst_140 = arith.constant dense<0.000000e+00> : vector<32x32xf32>
    %410 = tpu.matmul %408, %409, %cst_140 {dimension_numbers = #tpu.dot_dimension_numbers<[1], [0], [0], [1], [0, 0, 1, 1], [], []>} : vector<32x8xf32>, vector<8x32xf32>, vector<32x32xf32> -> vector<32x32xf32>
    %411 = arith.addf %390, %410 : vector<32x32xf32>
    %412 = vector.extract_strided_slice %347 {offsets = [0, 24], sizes = [32, 8], strides = [1, 1]} : vector<32x32xf32> to vector<32x8xf32>
    %413 = vector.extract_strided_slice %348 {offsets = [0, 24], sizes = [32, 8], strides = [1, 1]} : vector<32x32xf32> to vector<32x8xf32>
    %cst_141 = arith.constant dense<0.000000e+00> : vector<32x32xf32>
    %414 = tpu.matmul %412, %413, %cst_141 {dimension_numbers = #tpu.dot_dimension_numbers<[1], [1], [0], [0], [0, 0, 1, 0], [], []>} : vector<32x8xf32>, vector<32x8xf32>, vector<32x32xf32> -> vector<32x32xf32>
    %cst_142 = arith.constant 0.353553385 : f32
    %415 = vector.broadcast %cst_142 : f32 to vector<32x32xf32>
    %416 = arith.mulf %414, %415 : vector<32x32xf32>
    %417 = arith.addf %416, %1 : vector<32x32xf32>
    %cst_143 = arith.constant dense<0xFF800000> : vector<32xf32>
    %418 = vector.multi_reduction <maximumf>, %417, %cst_143 [1] : vector<32x32xf32> to vector<32xf32>
    %419 = vector.shape_cast %418 : vector<32xf32> to vector<32x1xf32>
    %420 = vector.broadcast %419 : vector<32x1xf32> to vector<32x32xf32>
    %421 = arith.subf %417, %420 : vector<32x32xf32>
    %422 = math.exp %421 : vector<32x32xf32>
    %cst_144 = arith.constant dense<0.000000e+00> : vector<32xf32>
    %423 = vector.multi_reduction <add>, %422, %cst_144 [1] : vector<32x32xf32> to vector<32xf32>
    %424 = vector.shape_cast %423 : vector<32xf32> to vector<32x1xf32>
    %425 = tpu.reciprocal %424 {approx = true} : vector<32x1xf32> -> vector<32x1xf32>
    %426 = vector.broadcast %425 : vector<32x1xf32> to vector<32x32xf32>
    %427 = arith.mulf %422, %426 : vector<32x32xf32>
    %428 = vector.extract_strided_slice %349 {offsets = [0, 24], sizes = [32, 8], strides = [1, 1]} : vector<32x32xf32> to vector<32x8xf32>
    %cst_145 = arith.constant dense<0.000000e+00> : vector<32x8xf32>
    %429 = tpu.matmul %427, %428, %cst_145 {dimension_numbers = #tpu.dot_dimension_numbers<[1], [0], [0], [1], [0, 0, 1, 1], [], []>} : vector<32x32xf32>, vector<32x8xf32>, vector<32x8xf32> -> vector<32x8xf32>
    %430 = vector.extract_strided_slice %342 {offsets = [24, 0], sizes = [8, 32], strides = [1, 1]} : vector<32x32xf32> to vector<8x32xf32>
    %cst_146 = arith.constant dense<0.000000e+00> : vector<32x32xf32>
    %431 = tpu.matmul %429, %430, %cst_146 {dimension_numbers = #tpu.dot_dimension_numbers<[1], [0], [0], [1], [0, 0, 1, 1], [], []>} : vector<32x8xf32>, vector<8x32xf32>, vector<32x32xf32> -> vector<32x32xf32>
    %432 = arith.addf %411, %431 : vector<32x32xf32>
    %433 = vector.broadcast %343 : vector<1x32xf32> to vector<32x32xf32>
    %434 = arith.addf %432, %433 : vector<32x32xf32>
    %435 = arith.addf %339, %434 : vector<32x32xf32>
    %c784 = arith.constant 784 : index
    %c0_147 = arith.constant 0 : index
    %436 = vector.load %arg3[%c784, %c0_147] : memref<1000x128xf32, #tpu.memory_space<vmem>>, vector<1x32xf32>
    %c792 = arith.constant 792 : index
    %c0_148 = arith.constant 0 : index
    %437 = vector.load %arg3[%c792, %c0_148] : memref<1000x128xf32, #tpu.memory_space<vmem>>, vector<1x32xf32>
    %cst_149 = arith.constant dense<0.000000e+00> : vector<32xf32>
    %438 = vector.multi_reduction <add>, %435, %cst_149 [1] : vector<32x32xf32> to vector<32xf32>
    %439 = vector.shape_cast %438 : vector<32xf32> to vector<32x1xf32>
    %cst_150 = arith.constant 3.200000e+01 : f32
    %440 = vector.broadcast %cst_150 : f32 to vector<32x1xf32>
    %441 = arith.divf %439, %440 : vector<32x1xf32>
    %442 = vector.broadcast %441 : vector<32x1xf32> to vector<32x32xf32>
    %443 = arith.subf %435, %442 : vector<32x32xf32>
    %444 = arith.mulf %443, %443 : vector<32x32xf32>
    %cst_151 = arith.constant dense<0.000000e+00> : vector<32xf32>
    %445 = vector.multi_reduction <add>, %444, %cst_151 [1] : vector<32x32xf32> to vector<32xf32>
    %446 = vector.shape_cast %445 : vector<32xf32> to vector<32x1xf32>
    %cst_152 = arith.constant 3.200000e+01 : f32
    %447 = vector.broadcast %cst_152 : f32 to vector<32x1xf32>
    %448 = arith.divf %446, %447 : vector<32x1xf32>
    %cst_153 = arith.constant 9.99999974E-6 : f32
    %449 = vector.broadcast %cst_153 : f32 to vector<32x1xf32>
    %450 = arith.addf %448, %449 : vector<32x1xf32>
    %451 = math.rsqrt %450 : vector<32x1xf32>
    %452 = vector.broadcast %451 : vector<32x1xf32> to vector<32x32xf32>
    %453 = arith.mulf %443, %452 : vector<32x32xf32>
    %454 = vector.broadcast %436 : vector<1x32xf32> to vector<32x32xf32>
    %455 = arith.mulf %453, %454 : vector<32x32xf32>
    %456 = vector.broadcast %437 : vector<1x32xf32> to vector<32x32xf32>
    %457 = arith.addf %455, %456 : vector<32x32xf32>
    %c704 = arith.constant 704 : index
    %c0_154 = arith.constant 0 : index
    %458 = vector.load %arg3[%c704, %c0_154] : memref<1000x128xf32, #tpu.memory_space<vmem>>, vector<32x96xf32>
    %c736 = arith.constant 736 : index
    %c0_155 = arith.constant 0 : index
    %459 = vector.load %arg3[%c736, %c0_155] : memref<1000x128xf32, #tpu.memory_space<vmem>>, vector<1x96xf32>
    %c744 = arith.constant 744 : index
    %c0_156 = arith.constant 0 : index
    %460 = vector.load %arg3[%c744, %c0_156] : memref<1000x128xf32, #tpu.memory_space<vmem>>, vector<32x32xf32>
    %c776 = arith.constant 776 : index
    %c0_157 = arith.constant 0 : index
    %461 = vector.load %arg3[%c776, %c0_157] : memref<1000x128xf32, #tpu.memory_space<vmem>>, vector<1x32xf32>
    %462 = vector.extract_strided_slice %458 {offsets = [0, 0], sizes = [32, 32], strides = [1, 1]} : vector<32x96xf32> to vector<32x32xf32>
    %cst_158 = arith.constant dense<0.000000e+00> : vector<32x32xf32>
    %463 = tpu.matmul %457, %462, %cst_158 {dimension_numbers = #tpu.dot_dimension_numbers<[1], [0], [0], [1], [0, 0, 1, 1], [], []>} : vector<32x32xf32>, vector<32x32xf32>, vector<32x32xf32> -> vector<32x32xf32>
    %464 = vector.extract_strided_slice %459 {offsets = [0, 0], sizes = [1, 32], strides = [1, 1]} : vector<1x96xf32> to vector<1x32xf32>
    %465 = vector.broadcast %464 : vector<1x32xf32> to vector<32x32xf32>
    %466 = arith.addf %463, %465 : vector<32x32xf32>
    %467 = vector.extract_strided_slice %458 {offsets = [0, 32], sizes = [32, 64], strides = [1, 1]} : vector<32x96xf32> to vector<32x64xf32>
    %cst_159 = arith.constant dense<0.000000e+00> : vector<32x64xf32>
    %468 = tpu.matmul %334, %467, %cst_159 {dimension_numbers = #tpu.dot_dimension_numbers<[1], [0], [0], [1], [0, 0, 1, 1], [], []>} : vector<32x32xf32>, vector<32x64xf32>, vector<32x64xf32> -> vector<32x64xf32>
    %469 = vector.extract_strided_slice %459 {offsets = [0, 32], sizes = [1, 64], strides = [1, 1]} : vector<1x96xf32> to vector<1x64xf32>
    %470 = vector.broadcast %469 : vector<1x64xf32> to vector<32x64xf32>
    %471 = arith.addf %468, %470 : vector<32x64xf32>
    %472 = vector.extract_strided_slice %471 {offsets = [0, 0], sizes = [32, 32], strides = [1, 1]} : vector<32x64xf32> to vector<32x32xf32>
    %473 = vector.extract_strided_slice %471 {offsets = [0, 32], sizes = [32, 32], strides = [1, 1]} : vector<32x64xf32> to vector<32x32xf32>
    %474 = vector.extract_strided_slice %466 {offsets = [0, 0], sizes = [32, 8], strides = [1, 1]} : vector<32x32xf32> to vector<32x8xf32>
    %475 = vector.extract_strided_slice %472 {offsets = [0, 0], sizes = [32, 8], strides = [1, 1]} : vector<32x32xf32> to vector<32x8xf32>
    %cst_160 = arith.constant dense<0.000000e+00> : vector<32x32xf32>
    %476 = tpu.matmul %474, %475, %cst_160 {dimension_numbers = #tpu.dot_dimension_numbers<[1], [1], [0], [0], [0, 0, 1, 0], [], []>} : vector<32x8xf32>, vector<32x8xf32>, vector<32x32xf32> -> vector<32x32xf32>
    %cst_161 = arith.constant 0.353553385 : f32
    %477 = vector.broadcast %cst_161 : f32 to vector<32x32xf32>
    %478 = arith.mulf %476, %477 : vector<32x32xf32>
    %479 = arith.addf %478, %0 : vector<32x32xf32>
    %cst_162 = arith.constant dense<0xFF800000> : vector<32xf32>
    %480 = vector.multi_reduction <maximumf>, %479, %cst_162 [1] : vector<32x32xf32> to vector<32xf32>
    %481 = vector.shape_cast %480 : vector<32xf32> to vector<32x1xf32>
    %482 = vector.broadcast %481 : vector<32x1xf32> to vector<32x32xf32>
    %483 = arith.subf %479, %482 : vector<32x32xf32>
    %484 = math.exp %483 : vector<32x32xf32>
    %cst_163 = arith.constant dense<0.000000e+00> : vector<32xf32>
    %485 = vector.multi_reduction <add>, %484, %cst_163 [1] : vector<32x32xf32> to vector<32xf32>
    %486 = vector.shape_cast %485 : vector<32xf32> to vector<32x1xf32>
    %487 = tpu.reciprocal %486 {approx = true} : vector<32x1xf32> -> vector<32x1xf32>
    %488 = vector.broadcast %487 : vector<32x1xf32> to vector<32x32xf32>
    %489 = arith.mulf %484, %488 : vector<32x32xf32>
    %490 = vector.extract_strided_slice %473 {offsets = [0, 0], sizes = [32, 8], strides = [1, 1]} : vector<32x32xf32> to vector<32x8xf32>
    %cst_164 = arith.constant dense<0.000000e+00> : vector<32x8xf32>
    %491 = tpu.matmul %489, %490, %cst_164 {dimension_numbers = #tpu.dot_dimension_numbers<[1], [0], [0], [1], [0, 0, 1, 1], [], []>} : vector<32x32xf32>, vector<32x8xf32>, vector<32x8xf32> -> vector<32x8xf32>
    %492 = vector.extract_strided_slice %460 {offsets = [0, 0], sizes = [8, 32], strides = [1, 1]} : vector<32x32xf32> to vector<8x32xf32>
    %cst_165 = arith.constant dense<0.000000e+00> : vector<32x32xf32>
    %493 = tpu.matmul %491, %492, %cst_165 {dimension_numbers = #tpu.dot_dimension_numbers<[1], [0], [0], [1], [0, 0, 1, 1], [], []>} : vector<32x8xf32>, vector<8x32xf32>, vector<32x32xf32> -> vector<32x32xf32>
    %494 = vector.extract_strided_slice %466 {offsets = [0, 8], sizes = [32, 8], strides = [1, 1]} : vector<32x32xf32> to vector<32x8xf32>
    %495 = vector.extract_strided_slice %472 {offsets = [0, 8], sizes = [32, 8], strides = [1, 1]} : vector<32x32xf32> to vector<32x8xf32>
    %cst_166 = arith.constant dense<0.000000e+00> : vector<32x32xf32>
    %496 = tpu.matmul %494, %495, %cst_166 {dimension_numbers = #tpu.dot_dimension_numbers<[1], [1], [0], [0], [0, 0, 1, 0], [], []>} : vector<32x8xf32>, vector<32x8xf32>, vector<32x32xf32> -> vector<32x32xf32>
    %cst_167 = arith.constant 0.353553385 : f32
    %497 = vector.broadcast %cst_167 : f32 to vector<32x32xf32>
    %498 = arith.mulf %496, %497 : vector<32x32xf32>
    %499 = arith.addf %498, %0 : vector<32x32xf32>
    %cst_168 = arith.constant dense<0xFF800000> : vector<32xf32>
    %500 = vector.multi_reduction <maximumf>, %499, %cst_168 [1] : vector<32x32xf32> to vector<32xf32>
    %501 = vector.shape_cast %500 : vector<32xf32> to vector<32x1xf32>
    %502 = vector.broadcast %501 : vector<32x1xf32> to vector<32x32xf32>
    %503 = arith.subf %499, %502 : vector<32x32xf32>
    %504 = math.exp %503 : vector<32x32xf32>
    %cst_169 = arith.constant dense<0.000000e+00> : vector<32xf32>
    %505 = vector.multi_reduction <add>, %504, %cst_169 [1] : vector<32x32xf32> to vector<32xf32>
    %506 = vector.shape_cast %505 : vector<32xf32> to vector<32x1xf32>
    %507 = tpu.reciprocal %506 {approx = true} : vector<32x1xf32> -> vector<32x1xf32>
    %508 = vector.broadcast %507 : vector<32x1xf32> to vector<32x32xf32>
    %509 = arith.mulf %504, %508 : vector<32x32xf32>
    %510 = vector.extract_strided_slice %473 {offsets = [0, 8], sizes = [32, 8], strides = [1, 1]} : vector<32x32xf32> to vector<32x8xf32>
    %cst_170 = arith.constant dense<0.000000e+00> : vector<32x8xf32>
    %511 = tpu.matmul %509, %510, %cst_170 {dimension_numbers = #tpu.dot_dimension_numbers<[1], [0], [0], [1], [0, 0, 1, 1], [], []>} : vector<32x32xf32>, vector<32x8xf32>, vector<32x8xf32> -> vector<32x8xf32>
    %512 = vector.extract_strided_slice %460 {offsets = [8, 0], sizes = [8, 32], strides = [1, 1]} : vector<32x32xf32> to vector<8x32xf32>
    %cst_171 = arith.constant dense<0.000000e+00> : vector<32x32xf32>
    %513 = tpu.matmul %511, %512, %cst_171 {dimension_numbers = #tpu.dot_dimension_numbers<[1], [0], [0], [1], [0, 0, 1, 1], [], []>} : vector<32x8xf32>, vector<8x32xf32>, vector<32x32xf32> -> vector<32x32xf32>
    %514 = arith.addf %493, %513 : vector<32x32xf32>
    %515 = vector.extract_strided_slice %466 {offsets = [0, 16], sizes = [32, 8], strides = [1, 1]} : vector<32x32xf32> to vector<32x8xf32>
    %516 = vector.extract_strided_slice %472 {offsets = [0, 16], sizes = [32, 8], strides = [1, 1]} : vector<32x32xf32> to vector<32x8xf32>
    %cst_172 = arith.constant dense<0.000000e+00> : vector<32x32xf32>
    %517 = tpu.matmul %515, %516, %cst_172 {dimension_numbers = #tpu.dot_dimension_numbers<[1], [1], [0], [0], [0, 0, 1, 0], [], []>} : vector<32x8xf32>, vector<32x8xf32>, vector<32x32xf32> -> vector<32x32xf32>
    %cst_173 = arith.constant 0.353553385 : f32
    %518 = vector.broadcast %cst_173 : f32 to vector<32x32xf32>
    %519 = arith.mulf %517, %518 : vector<32x32xf32>
    %520 = arith.addf %519, %0 : vector<32x32xf32>
    %cst_174 = arith.constant dense<0xFF800000> : vector<32xf32>
    %521 = vector.multi_reduction <maximumf>, %520, %cst_174 [1] : vector<32x32xf32> to vector<32xf32>
    %522 = vector.shape_cast %521 : vector<32xf32> to vector<32x1xf32>
    %523 = vector.broadcast %522 : vector<32x1xf32> to vector<32x32xf32>
    %524 = arith.subf %520, %523 : vector<32x32xf32>
    %525 = math.exp %524 : vector<32x32xf32>
    %cst_175 = arith.constant dense<0.000000e+00> : vector<32xf32>
    %526 = vector.multi_reduction <add>, %525, %cst_175 [1] : vector<32x32xf32> to vector<32xf32>
    %527 = vector.shape_cast %526 : vector<32xf32> to vector<32x1xf32>
    %528 = tpu.reciprocal %527 {approx = true} : vector<32x1xf32> -> vector<32x1xf32>
    %529 = vector.broadcast %528 : vector<32x1xf32> to vector<32x32xf32>
    %530 = arith.mulf %525, %529 : vector<32x32xf32>
    %531 = vector.extract_strided_slice %473 {offsets = [0, 16], sizes = [32, 8], strides = [1, 1]} : vector<32x32xf32> to vector<32x8xf32>
    %cst_176 = arith.constant dense<0.000000e+00> : vector<32x8xf32>
    %532 = tpu.matmul %530, %531, %cst_176 {dimension_numbers = #tpu.dot_dimension_numbers<[1], [0], [0], [1], [0, 0, 1, 1], [], []>} : vector<32x32xf32>, vector<32x8xf32>, vector<32x8xf32> -> vector<32x8xf32>
    %533 = vector.extract_strided_slice %460 {offsets = [16, 0], sizes = [8, 32], strides = [1, 1]} : vector<32x32xf32> to vector<8x32xf32>
    %cst_177 = arith.constant dense<0.000000e+00> : vector<32x32xf32>
    %534 = tpu.matmul %532, %533, %cst_177 {dimension_numbers = #tpu.dot_dimension_numbers<[1], [0], [0], [1], [0, 0, 1, 1], [], []>} : vector<32x8xf32>, vector<8x32xf32>, vector<32x32xf32> -> vector<32x32xf32>
    %535 = arith.addf %514, %534 : vector<32x32xf32>
    %536 = vector.extract_strided_slice %466 {offsets = [0, 24], sizes = [32, 8], strides = [1, 1]} : vector<32x32xf32> to vector<32x8xf32>
    %537 = vector.extract_strided_slice %472 {offsets = [0, 24], sizes = [32, 8], strides = [1, 1]} : vector<32x32xf32> to vector<32x8xf32>
    %cst_178 = arith.constant dense<0.000000e+00> : vector<32x32xf32>
    %538 = tpu.matmul %536, %537, %cst_178 {dimension_numbers = #tpu.dot_dimension_numbers<[1], [1], [0], [0], [0, 0, 1, 0], [], []>} : vector<32x8xf32>, vector<32x8xf32>, vector<32x32xf32> -> vector<32x32xf32>
    %cst_179 = arith.constant 0.353553385 : f32
    %539 = vector.broadcast %cst_179 : f32 to vector<32x32xf32>
    %540 = arith.mulf %538, %539 : vector<32x32xf32>
    %541 = arith.addf %540, %0 : vector<32x32xf32>
    %cst_180 = arith.constant dense<0xFF800000> : vector<32xf32>
    %542 = vector.multi_reduction <maximumf>, %541, %cst_180 [1] : vector<32x32xf32> to vector<32xf32>
    %543 = vector.shape_cast %542 : vector<32xf32> to vector<32x1xf32>
    %544 = vector.broadcast %543 : vector<32x1xf32> to vector<32x32xf32>
    %545 = arith.subf %541, %544 : vector<32x32xf32>
    %546 = math.exp %545 : vector<32x32xf32>
    %cst_181 = arith.constant dense<0.000000e+00> : vector<32xf32>
    %547 = vector.multi_reduction <add>, %546, %cst_181 [1] : vector<32x32xf32> to vector<32xf32>
    %548 = vector.shape_cast %547 : vector<32xf32> to vector<32x1xf32>
    %549 = tpu.reciprocal %548 {approx = true} : vector<32x1xf32> -> vector<32x1xf32>
    %550 = vector.broadcast %549 : vector<32x1xf32> to vector<32x32xf32>
    %551 = arith.mulf %546, %550 : vector<32x32xf32>
    %552 = vector.extract_strided_slice %473 {offsets = [0, 24], sizes = [32, 8], strides = [1, 1]} : vector<32x32xf32> to vector<32x8xf32>
    %cst_182 = arith.constant dense<0.000000e+00> : vector<32x8xf32>
    %553 = tpu.matmul %551, %552, %cst_182 {dimension_numbers = #tpu.dot_dimension_numbers<[1], [0], [0], [1], [0, 0, 1, 1], [], []>} : vector<32x32xf32>, vector<32x8xf32>, vector<32x8xf32> -> vector<32x8xf32>
    %554 = vector.extract_strided_slice %460 {offsets = [24, 0], sizes = [8, 32], strides = [1, 1]} : vector<32x32xf32> to vector<8x32xf32>
    %cst_183 = arith.constant dense<0.000000e+00> : vector<32x32xf32>
    %555 = tpu.matmul %553, %554, %cst_183 {dimension_numbers = #tpu.dot_dimension_numbers<[1], [0], [0], [1], [0, 0, 1, 1], [], []>} : vector<32x8xf32>, vector<8x32xf32>, vector<32x32xf32> -> vector<32x32xf32>
    %556 = arith.addf %535, %555 : vector<32x32xf32>
    %557 = vector.broadcast %461 : vector<1x32xf32> to vector<32x32xf32>
    %558 = arith.addf %556, %557 : vector<32x32xf32>
    %559 = arith.addf %457, %558 : vector<32x32xf32>
    %c800 = arith.constant 800 : index
    %c0_184 = arith.constant 0 : index
    %560 = vector.load %arg3[%c800, %c0_184] : memref<1000x128xf32, #tpu.memory_space<vmem>>, vector<1x32xf32>
    %c808 = arith.constant 808 : index
    %c0_185 = arith.constant 0 : index
    %561 = vector.load %arg3[%c808, %c0_185] : memref<1000x128xf32, #tpu.memory_space<vmem>>, vector<1x32xf32>
    %cst_186 = arith.constant dense<0.000000e+00> : vector<32xf32>
    %562 = vector.multi_reduction <add>, %559, %cst_186 [1] : vector<32x32xf32> to vector<32xf32>
    %563 = vector.shape_cast %562 : vector<32xf32> to vector<32x1xf32>
    %cst_187 = arith.constant 3.200000e+01 : f32
    %564 = vector.broadcast %cst_187 : f32 to vector<32x1xf32>
    %565 = arith.divf %563, %564 : vector<32x1xf32>
    %566 = vector.broadcast %565 : vector<32x1xf32> to vector<32x32xf32>
    %567 = arith.subf %559, %566 : vector<32x32xf32>
    %568 = arith.mulf %567, %567 : vector<32x32xf32>
    %cst_188 = arith.constant dense<0.000000e+00> : vector<32xf32>
    %569 = vector.multi_reduction <add>, %568, %cst_188 [1] : vector<32x32xf32> to vector<32xf32>
    %570 = vector.shape_cast %569 : vector<32xf32> to vector<32x1xf32>
    %cst_189 = arith.constant 3.200000e+01 : f32
    %571 = vector.broadcast %cst_189 : f32 to vector<32x1xf32>
    %572 = arith.divf %570, %571 : vector<32x1xf32>
    %cst_190 = arith.constant 9.99999974E-6 : f32
    %573 = vector.broadcast %cst_190 : f32 to vector<32x1xf32>
    %574 = arith.addf %572, %573 : vector<32x1xf32>
    %575 = math.rsqrt %574 : vector<32x1xf32>
    %576 = vector.broadcast %575 : vector<32x1xf32> to vector<32x32xf32>
    %577 = arith.mulf %567, %576 : vector<32x32xf32>
    %578 = vector.broadcast %560 : vector<1x32xf32> to vector<32x32xf32>
    %579 = arith.mulf %577, %578 : vector<32x32xf32>
    %580 = vector.broadcast %561 : vector<1x32xf32> to vector<32x32xf32>
    %581 = arith.addf %579, %580 : vector<32x32xf32>
    %c816 = arith.constant 816 : index
    %c0_191 = arith.constant 0 : index
    %582 = vector.load %arg3[%c816, %c0_191] : memref<1000x128xf32, #tpu.memory_space<vmem>>, vector<32x64xf32>
    %cst_192 = arith.constant dense<0.000000e+00> : vector<32x64xf32>
    %583 = tpu.matmul %581, %582, %cst_192 {dimension_numbers = #tpu.dot_dimension_numbers<[1], [0], [0], [1], [0, 0, 1, 1], [], []>} : vector<32x32xf32>, vector<32x64xf32>, vector<32x64xf32> -> vector<32x64xf32>
    %c848 = arith.constant 848 : index
    %c0_193 = arith.constant 0 : index
    %584 = vector.load %arg3[%c848, %c0_193] : memref<1000x128xf32, #tpu.memory_space<vmem>>, vector<1x64xf32>
    %585 = vector.broadcast %584 : vector<1x64xf32> to vector<32x64xf32>
    %586 = arith.addf %583, %585 : vector<32x64xf32>
    %cst_194 = arith.constant 0.000000e+00 : f32
    %587 = vector.broadcast %cst_194 : f32 to vector<32x64xf32>
    %588 = arith.maximumf %586, %587 : vector<32x64xf32>
    %c856 = arith.constant 856 : index
    %c0_195 = arith.constant 0 : index
    %589 = vector.load %arg3[%c856, %c0_195] : memref<1000x128xf32, #tpu.memory_space<vmem>>, vector<64x32xf32>
    %cst_196 = arith.constant dense<0.000000e+00> : vector<32x32xf32>
    %590 = tpu.matmul %588, %589, %cst_196 {dimension_numbers = #tpu.dot_dimension_numbers<[1], [0], [0], [1], [0, 0, 1, 1], [], []>} : vector<32x64xf32>, vector<64x32xf32>, vector<32x32xf32> -> vector<32x32xf32>
    %c920 = arith.constant 920 : index
    %c0_197 = arith.constant 0 : index
    %591 = vector.load %arg3[%c920, %c0_197] : memref<1000x128xf32, #tpu.memory_space<vmem>>, vector<1x32xf32>
    %592 = vector.broadcast %591 : vector<1x32xf32> to vector<32x32xf32>
    %593 = arith.addf %590, %592 : vector<32x32xf32>
    %594 = arith.addf %581, %593 : vector<32x32xf32>
    %c928 = arith.constant 928 : index
    %c0_198 = arith.constant 0 : index
    %595 = vector.load %arg3[%c928, %c0_198] : memref<1000x128xf32, #tpu.memory_space<vmem>>, vector<1x32xf32>
    %c936 = arith.constant 936 : index
    %c0_199 = arith.constant 0 : index
    %596 = vector.load %arg3[%c936, %c0_199] : memref<1000x128xf32, #tpu.memory_space<vmem>>, vector<1x32xf32>
    %cst_200 = arith.constant dense<0.000000e+00> : vector<32xf32>
    %597 = vector.multi_reduction <add>, %594, %cst_200 [1] : vector<32x32xf32> to vector<32xf32>
    %598 = vector.shape_cast %597 : vector<32xf32> to vector<32x1xf32>
    %cst_201 = arith.constant 3.200000e+01 : f32
    %599 = vector.broadcast %cst_201 : f32 to vector<32x1xf32>
    %600 = arith.divf %598, %599 : vector<32x1xf32>
    %601 = vector.broadcast %600 : vector<32x1xf32> to vector<32x32xf32>
    %602 = arith.subf %594, %601 : vector<32x32xf32>
    %603 = arith.mulf %602, %602 : vector<32x32xf32>
    %cst_202 = arith.constant dense<0.000000e+00> : vector<32xf32>
    %604 = vector.multi_reduction <add>, %603, %cst_202 [1] : vector<32x32xf32> to vector<32xf32>
    %605 = vector.shape_cast %604 : vector<32xf32> to vector<32x1xf32>
    %cst_203 = arith.constant 3.200000e+01 : f32
    %606 = vector.broadcast %cst_203 : f32 to vector<32x1xf32>
    %607 = arith.divf %605, %606 : vector<32x1xf32>
    %cst_204 = arith.constant 9.99999974E-6 : f32
    %608 = vector.broadcast %cst_204 : f32 to vector<32x1xf32>
    %609 = arith.addf %607, %608 : vector<32x1xf32>
    %610 = math.rsqrt %609 : vector<32x1xf32>
    %611 = vector.broadcast %610 : vector<32x1xf32> to vector<32x32xf32>
    %612 = arith.mulf %602, %611 : vector<32x32xf32>
    %613 = vector.broadcast %595 : vector<1x32xf32> to vector<32x32xf32>
    %614 = arith.mulf %612, %613 : vector<32x32xf32>
    %615 = vector.broadcast %596 : vector<1x32xf32> to vector<32x32xf32>
    %616 = arith.addf %614, %615 : vector<32x32xf32>
    %c944 = arith.constant 944 : index
    %c0_205 = arith.constant 0 : index
    %617 = vector.load %arg3[%c944, %c0_205] : memref<1000x128xf32, #tpu.memory_space<vmem>>, vector<1x32xf32>
    %c952 = arith.constant 952 : index
    %c0_206 = arith.constant 0 : index
    %618 = vector.load %arg3[%c952, %c0_206] : memref<1000x128xf32, #tpu.memory_space<vmem>>, vector<1x32xf32>
    %cst_207 = arith.constant dense<0.000000e+00> : vector<32xf32>
    %619 = vector.multi_reduction <add>, %616, %cst_207 [1] : vector<32x32xf32> to vector<32xf32>
    %620 = vector.shape_cast %619 : vector<32xf32> to vector<32x1xf32>
    %cst_208 = arith.constant 3.200000e+01 : f32
    %621 = vector.broadcast %cst_208 : f32 to vector<32x1xf32>
    %622 = arith.divf %620, %621 : vector<32x1xf32>
    %623 = vector.broadcast %622 : vector<32x1xf32> to vector<32x32xf32>
    %624 = arith.subf %616, %623 : vector<32x32xf32>
    %625 = arith.mulf %624, %624 : vector<32x32xf32>
    %cst_209 = arith.constant dense<0.000000e+00> : vector<32xf32>
    %626 = vector.multi_reduction <add>, %625, %cst_209 [1] : vector<32x32xf32> to vector<32xf32>
    %627 = vector.shape_cast %626 : vector<32xf32> to vector<32x1xf32>
    %cst_210 = arith.constant 3.200000e+01 : f32
    %628 = vector.broadcast %cst_210 : f32 to vector<32x1xf32>
    %629 = arith.divf %627, %628 : vector<32x1xf32>
    %cst_211 = arith.constant 9.99999974E-6 : f32
    %630 = vector.broadcast %cst_211 : f32 to vector<32x1xf32>
    %631 = arith.addf %629, %630 : vector<32x1xf32>
    %632 = math.rsqrt %631 : vector<32x1xf32>
    %633 = vector.broadcast %632 : vector<32x1xf32> to vector<32x32xf32>
    %634 = arith.mulf %624, %633 : vector<32x32xf32>
    %635 = vector.broadcast %617 : vector<1x32xf32> to vector<32x32xf32>
    %636 = arith.mulf %634, %635 : vector<32x32xf32>
    %637 = vector.broadcast %618 : vector<1x32xf32> to vector<32x32xf32>
    %638 = arith.addf %636, %637 : vector<32x32xf32>
    %c960 = arith.constant 960 : index
    %c0_212 = arith.constant 0 : index
    %639 = vector.load %arg3[%c960, %c0_212] : memref<1000x128xf32, #tpu.memory_space<vmem>>, vector<32x4xf32>
    %cst_213 = arith.constant dense<0.000000e+00> : vector<32x4xf32>
    %640 = tpu.matmul %638, %639, %cst_213 {dimension_numbers = #tpu.dot_dimension_numbers<[1], [0], [0], [1], [0, 0, 1, 1], [], []>} : vector<32x32xf32>, vector<32x4xf32>, vector<32x4xf32> -> vector<32x4xf32>
    %c992 = arith.constant 992 : index
    %c0_214 = arith.constant 0 : index
    %641 = vector.load %arg3[%c992, %c0_214] : memref<1000x128xf32, #tpu.memory_space<vmem>>, vector<1x4xf32>
    %642 = vector.broadcast %641 : vector<1x4xf32> to vector<32x4xf32>
    %643 = arith.addf %640, %642 : vector<32x4xf32>
    %644 = vector.extract_strided_slice %643 {offsets = [8, 0], sizes = [8, 4], strides = [1, 1]} : vector<32x4xf32> to vector<8x4xf32>
    %c0_215 = arith.constant 0 : index
    %c0_216 = arith.constant 0 : index
    %645 = vector.load %arg4[%c0_215, %c0_216] : memref<16x4xf32, #tpu.memory_space<vmem>>, vector<8x4xf32>
    tpu.vector_store %arg4[%c0_215, %c0_216], %644 {strides = array<i32>} : memref<16x4xf32, #tpu.memory_space<vmem>>, vector<8x4xf32>,
    %646 = vector.extract_strided_slice %643 {offsets = [24, 0], sizes = [8, 4], strides = [1, 1]} : vector<32x4xf32> to vector<8x4xf32>
    %c8 = arith.constant 8 : index
    %c0_217 = arith.constant 0 : index
    %647 = vector.load %arg4[%c8, %c0_217] : memref<16x4xf32, #tpu.memory_space<vmem>>, vector<8x4xf32>
    tpu.vector_store %arg4[%c8, %c0_217], %646 {strides = array<i32>} : memref<16x4xf32, #tpu.memory_space<vmem>>, vector<8x4xf32>,
    return
  }
  func.func @transform_0(%arg0: i32) -> (i32, i32) {
    %c0_i32 = arith.constant 0 : i32
    %c0_i32_0 = arith.constant 0 : i32
    %c0_i32_1 = arith.constant 0 : i32
    return %c0_i32, %c0_i32_0 : i32, i32
  }
  func.func @transform_1(%arg0: i32) -> (i32, i32) {
    %c0_i32 = arith.constant 0 : i32
    %c0_i32_0 = arith.constant 0 : i32
    %c0_i32_1 = arith.constant 0 : i32
    return %c0_i32, %c0_i32_0 : i32, i32
  }
  func.func @transform_2(%arg0: i32) -> (i32, i32) {
    %c0_i32 = arith.constant 0 : i32
    %c0_i32_0 = arith.constant 0 : i32
    %c0_i32_1 = arith.constant 0 : i32
    return %c0_i32, %c0_i32_0 : i32, i32
  }
  func.func @transform_3(%arg0: i32) -> (i32, i32) {
    %c0_i32 = arith.constant 0 : i32
    %c0_i32_0 = arith.constant 0 : i32
    %c0_i32_1 = arith.constant 0 : i32
    return %c0_i32, %c0_i32_0 : i32, i32
  }
}

</mosaic_0001>

<llo_original>
// kernel: forward.1
$region0: #{forward.1}
  #allocation0 [shape = 'u32[]', space=smem, size = 0x4, offset = 0x4, fixed_abs, tag = 'smem constant byte address 0x4 - core index']
  #allocation1 [shape = 'u32[72,128]{1,0:T(1,128)}', space=vmem, size = 0x9000, scoped, tag = 'internal scratch']
  %s0 = inlined_call_operand.vmem [shape: f32[32,16], index: 0, kind: input, shape index: {}]
  %s1 = inlined_call_operand.vmem [shape: f32[32,16], index: 1, kind: input, shape index: {}]
  %s2 = inlined_call_operand.hbm [shape: f32[1000,128], index: 2, kind: input, shape index: {}]
  %s3 = inlined_call_operand.vmem [shape: f32[16,4], index: 3, kind: output, shape index: {}]
  %s4 = sld [smem:[#allocation0]]
  $region26: #{forward.1} parent=0
    _
  %s6 = ssub.s32 1, %s4
  %s7 = scalar_select 0, %s6, %s4
  $region1: #{forward.1} parent=0
    #allocation2 [shape = 'u8[512000]{0}', space=vmem, size = 0x7d000, scoped, tag = 'input window, operand 2, single buffered']
    #allocation3 [shape = 's32[1]{0}', space=sflag, size = 0x4, scoped, tag = 'scoped memory for forward.1']
    %8 = vsyncpa [#allocation3], 0
    // Predicated region
    $region2: #{forward.1} parent=1 // pred_check
      _
    $region3: #{forward.1} parent=1 // pred_check_branch
      %10 = sbr.rel (0) target = $region5
    $region4: #{forward.1} parent=1 // pred_region
      _
    $region5: #{forward.1} parent=1 // pred_fallthru
      _
    // Predicated region
    $region6: #{forward.1} parent=1 // pred_check
      _
    $region7: #{forward.1} parent=1 // pred_check_branch
      %12 = sbr.rel (0) target = $region9
    $region8: #{forward.1} parent=1 // pred_region
      _
    $region9: #{forward.1} parent=1 // pred_fallthru
      _
    // Predicated region
    $region10: #{forward.1} parent=1 // pred_check
      _
    $region11: #{forward.1} parent=1 // pred_check_branch
      %14 = sbr.rel (0) target = $region13
    $region12: #{forward.1} parent=1 // pred_region
      %16 = vsyncadd [#allocation3], 0
      %s17 = sshll.u32 %s2, 4
      %s18 = int_to_ptr.hbm [resolvable:$true] %s17
      %s19 = sshll.u32 [#allocation2], 4
      %s20 = int_to_ptr.vmem [resolvable:$true] %s19
      %25 = dma.hbm_to_vmem [thread:$0]  %s18, 16000, %s20, [#allocation3], 128, 128, 8
    $region13: #{forward.1} parent=1 // pred_fallthru
      _
    // Predicated region
    $region14: #{forward.1} parent=1 // pred_check
      _
    $region15: #{forward.1} parent=1 // pred_check_branch
      %27 = sbr.rel (0) target = $region17
    $region16: #{forward.1} parent=1 // pred_region
      %29 = dma.done [#allocation3], 16000
    $region17: #{forward.1} parent=1 // pred_fallthru
      _
    %v30 = vld [vmem:[#allocation2 + $0x60] sm:$0xff]
    %v31 = vld [vmem:[#allocation2 + $0x68] sm:$0xff]
    %v32 = vld [vmem:[#allocation2 + $0x70] sm:$0xff]
    %v33 = vld [vmem:[#allocation2 + $0x78] sm:$0xff]
    %v34 = vld [vmem:[#allocation2 + $0x80] sm:$0xff]
    %v35 = vld [vmem:[#allocation2 + $0x88] sm:$0xff]
    %v36 = vld [vmem:[#allocation2 + $0x90] sm:$0xff]
    %v37 = vld [vmem:[#allocation2 + $0x98] sm:$0xff]
    %v38 = vld [vmem:[%s0] sm:$0xff]
    %v39 = vld [vmem:[%s0 + $0x8] sm:$0xff]
    %v40 = vld [vmem:[%s0 + $0x10] sm:$0xff]
    %v41 = vld [vmem:[%s0 + $0x18] sm:$0xff]
    %v42 = vld [vmem:[#allocation2] sm:$0xff]
    %v43 = vld [vmem:[#allocation2 + $0x8] sm:$0xff]
    %v44 = vld [vmem:[#allocation2 + $0x20] sm:$0xff]
    %v45 = vld [vmem:[#allocation2 + $0x28] sm:$0xff]
    %v46 = vld [vmem:[#allocation2 + $0x30] sm:$0xff]
    %v47 = vld [vmem:[#allocation2 + $0x38] sm:$0xff]
    %vm48 = vcmask 130048
    %v50 = vsel %vm48, %v38, 0
    %v53 = vsel %vm48, %v39, 0
    %v56 = vsel %vm48, %v40, 0
    %v59 = vsel %vm48, %v41, 0
    %61 = vmatpush.msra.mxu0 0.0
    %62 = vmatpush.msra.mxu0 0.0
    %63 = vmatpush.msra.mxu0 0.0
    %64 = vmatpush.msra.mxu0 0.0
    %65 = vmatpush.msra.mxu0 0.0
    %66 = vmatpush.msra.mxu0 0.0
    %67 = vmatpush.msra.mxu0 0.0
    %68 = vmatpush.msra.mxu0 0.0
    %69 = vmatpush.msra.mxu0 0.0
    %70 = vmatpush.msra.mxu0 0.0
    %71 = vmatpush.msra.mxu0 0.0
    %72 = vmatpush.msra.mxu0 0.0
    %73 = vmatpush.msra.mxu0 0.0
    %74 = vmatpush.msra.mxu0 0.0
    %75 = vmatpush.msra.mxu0 %v43
    %76 = vmatpush.msra.mxu0 %v42
    %77 = vmatmul.f32.gmra.mxu0 %v50
    %v78 = vpop.f32.mrf.mxu0
    %v79 = vadd.f32 %v44, %v78
    %80 = vmatmul.f32.gmra.mxu0 %v53
    %v81 = vpop.f32.mrf.mxu0
    %v82 = vadd.f32 %v45, %v81
    %83 = vmatmul.f32.gmra.mxu0 %v56
    %v84 = vpop.f32.mrf.mxu0
    %v85 = vadd.f32 %v46, %v84
    %86 = vmatmul.f32.gmra.mxu0 %v59
    %v87 = vpop.f32.mrf.mxu0
    %v88 = vadd.f32 %v47, %v87
    %89 = vdwg.mxu0
    %v90 = vld [vmem:[#allocation2 + $0xa0] sm:$0xff]
    %v91 = vld [vmem:[#allocation2 + $0xa8] sm:$0xff]
    %v92 = vld [vmem:[#allocation2 + $0xb0] sm:$0xff]
    %v93 = vld [vmem:[#allocation2 + $0xb8] sm:$0xff]
    %v94 = vld [vmem:[#allocation2 + $0xc0] sm:$0x1]
    %v95 = vld [vmem:[#allocation2 + $0xc8] sm:$0xff]
    %v96 = vld [vmem:[#allocation2 + $0xd0] sm:$0xff]
    %v97 = vld [vmem:[#allocation2 + $0xd8] sm:$0xff]
    %v98 = vld [vmem:[#allocation2 + $0xe0] sm:$0xff]
    %v99 = vld [vmem:[#allocation2 + $0xe8] sm:$0x1]
    %v100 = vperm.slane %v94, 0
    %vm101 = vcmask 261120
    %v103 = vsel %vm101, %v79, 0
    %v106 = vsel %vm101, %v82, 0
    %v109 = vsel %vm101, %v85, 0
    %v112 = vsel %vm101, %v88, 0
    %114 = vmatpush.msra.mxu0 0.0
    %115 = vmatpush.msra.mxu0 0.0
    %116 = vmatpush.msra.mxu0 0.0
    %117 = vmatpush.msra.mxu0 0.0
    %118 = vmatpush.msra.mxu0 0.0
    %119 = vmatpush.msra.mxu0 0.0
    %120 = vmatpush.msra.mxu0 0.0
    %121 = vmatpush.msra.mxu0 0.0
    %122 = vmatpush.msra.mxu0 0.0
    %123 = vmatpush.msra.mxu0 0.0
    %124 = vmatpush.msra.mxu0 0.0
    %125 = vmatpush.msra.mxu0 0.0
    %126 = vmatpush.msra.mxu0 %v93
    %127 = vmatpush.msra.mxu0 %v92
    %128 = vmatpush.msra.mxu0 %v91
    %129 = vmatpush.msra.mxu0 %v90
    %130 = vmatmul.f32.gmra.mxu0 %v103
    %v131 = vpop.f32.mrf.mxu0
    %v132 = vadd.f32 %v100, %v131
    %133 = vmatmul.f32.gmra.mxu0 %v106
    %v134 = vpop.f32.mrf.mxu0
    %v135 = vadd.f32 %v100, %v134
    %136 = vmatmul.f32.gmra.mxu0 %v109
    %v137 = vpop.f32.mrf.mxu0
    %v138 = vadd.f32 %v100, %v137
    %139 = vmatmul.f32.gmra.mxu0 %v112
    %v140 = vpop.f32.mrf.mxu0
    %v141 = vadd.f32 %v100, %v140
    %142 = vdwg.mxu0
    %147 = vrot.lane.b32.xlu0 %v132, 96
    %v148 = vpop.permute.xlu0 %147
    %149 = vrot.lane.b32.xlu0 %v135, 96
    %v150 = vpop.permute.xlu0 %149
    %151 = vrot.lane.b32.xlu0 %v138, 96
    %v152 = vpop.permute.xlu0 %151
    %153 = vrot.lane.b32.xlu0 %v141, 96
    %v154 = vpop.permute.xlu0 %153
    %vm155 = vcmask 64512
    %v156 = vsel %vm155, %v132, 0
    %v158 = vsel %vm155, %v135, 0
    %v160 = vsel %vm155, %v138, 0
    %v162 = vsel %vm155, %v141, 0
    %v164 = vsel %vm155, %v148, 0
    %v166 = vsel %vm155, %v150, 0
    %v168 = vsel %vm155, %v152, 0
    %v170 = vsel %vm155, %v154, 0
    %172 = vmatpush.xpose.msra.mxu0 0.0
    %173 = vmatpush.xpose.msra.mxu0 0.0
    %174 = vmatpush.xpose.msra.mxu0 0.0
    %175 = vmatpush.xpose.msra.mxu0 0.0
    %176 = vmatpush.xpose.msra.mxu0 0.0
    %177 = vmatpush.xpose.msra.mxu0 0.0
    %178 = vmatpush.xpose.msra.mxu0 0.0
    %179 = vmatpush.xpose.msra.mxu0 0.0
    %180 = vmatpush.xpose.msra.mxu0 0.0
    %181 = vmatpush.xpose.msra.mxu0 0.0
    %182 = vmatpush.xpose.msra.mxu0 0.0
    %183 = vmatpush.xpose.msra.mxu0 0.0
    %184 = vmatpush.xpose.msra.mxu0 %v170
    %185 = vmatpush.xpose.msra.mxu0 %v168
    %186 = vmatpush.xpose.msra.mxu0 %v166
    %187 = vmatpush.xpose.msra.mxu0 %v164
    %188 = vmatmul.f32.gmra.mxu0 %v156
    %v189 = vpop.f32.mrf.mxu0
    %v190 = vadd.f32 0.0, %v189
    %191 = vmatmul.f32.gmra.mxu0 %v158
    %v192 = vpop.f32.mrf.mxu0
    %v193 = vadd.f32 0.0, %v192
    %194 = vmatmul.f32.gmra.mxu0 %v160
    %v195 = vpop.f32.mrf.mxu0
    %v196 = vadd.f32 0.0, %v195
    %197 = vmatmul.f32.gmra.mxu0 %v162
    %v198 = vpop.f32.mrf.mxu0
    %v199 = vadd.f32 0.0, %v198
    %200 = vdwg.mxu0
    %v201 = vmul.f32 %v190, 0.35355338
    %v202 = vmul.f32 %v193, 0.35355338
    %v203 = vmul.f32 %v196, 0.35355338
    %v204 = vmul.f32 %v199, 0.35355338
    %v205 = vadd.f32 %v201, %v30
    %v206 = vadd.f32 %v202, %v31
    %v207 = vadd.f32 %v203, %v32
    %v208 = vadd.f32 %v204, %v33
    %v209 = vsel %vm101, %v205, -inf
    %210 = vmax.xlane.f32.xlu0 %v209
    %v211 = vpop.xlane.xlu0 %210
    %v212 = vsel %vm101, %v206, -inf
    %213 = vmax.xlane.f32.xlu0 %v212
    %v214 = vpop.xlane.xlu0 %213
    %v215 = vsel %vm101, %v207, -inf
    %216 = vmax.xlane.f32.xlu0 %v215
    %v217 = vpop.xlane.xlu0 %216
    %v218 = vsel %vm101, %v208, -inf
    %219 = vmax.xlane.f32.xlu0 %v218
    %v220 = vpop.xlane.xlu0 %219
    %v221 = vsub.f32 %v205, %v211
    %v222 = vsub.f32 %v206, %v214
    %v223 = vsub.f32 %v207, %v217
    %v224 = vsub.f32 %v208, %v220
    %v225 = vmul.f32 %v221, 1.442695
    %v226 = vpow.pop %v225
    %v227 = vmul.f32 %v222, 1.442695
    %v228 = vpow.pop %v227
    %v229 = vmul.f32 %v223, 1.442695
    %v230 = vpow.pop %v229
    %v231 = vmul.f32 %v224, 1.442695
    %v232 = vpow.pop %v231
    %v233 = vsel %vm101, %v226, 0.0
    %234 = vadd.xlane.f32.xlu0 %v233
    %v235 = vpop.xlane.xlu0 %234
    %v236 = vsel %vm101, %v228, 0.0
    %237 = vadd.xlane.f32.xlu0 %v236
    %v238 = vpop.xlane.xlu0 %237
    %v239 = vsel %vm101, %v230, 0.0
    %240 = vadd.xlane.f32.xlu0 %v239
    %v241 = vpop.xlane.xlu0 %240
    %v242 = vsel %vm101, %v232, 0.0
    %243 = vadd.xlane.f32.xlu0 %v242
    %v244 = vpop.xlane.xlu0 %243
    %v245 = vrcp.pop %v235
    %v246 = vrcp.pop %v238
    %v247 = vrcp.pop %v241
    %v248 = vrcp.pop %v244
    %v249 = vmul.f32 %v226, %v245
    %v250 = vmul.f32 %v228, %v246
    %v251 = vmul.f32 %v230, %v247
    %v252 = vmul.f32 %v232, %v248
    %253 = vrot.lane.b32.xlu0 %v132, 64
    %v254 = vpop.permute.xlu0 %253
    %255 = vrot.lane.b32.xlu0 %v135, 64
    %v256 = vpop.permute.xlu0 %255
    %257 = vrot.lane.b32.xlu0 %v138, 64
    %v258 = vpop.permute.xlu0 %257
    %259 = vrot.lane.b32.xlu0 %v141, 64
    %v260 = vpop.permute.xlu0 %259
    %v266 = vsel %vm101, %v249, 0
    %v269 = vsel %vm101, %v250, 0
    %v272 = vsel %vm101, %v251, 0
    %v275 = vsel %vm101, %v252, 0
    %277 = vmatpush.msra.mxu0 0.0
    %278 = vmatpush.msra.mxu0 0.0
    %279 = vmatpush.msra.mxu0 0.0
    %280 = vmatpush.msra.mxu0 0.0
    %281 = vmatpush.msra.mxu0 0.0
    %282 = vmatpush.msra.mxu0 0.0
    %283 = vmatpush.msra.mxu0 0.0
    %284 = vmatpush.msra.mxu0 0.0
    %285 = vmatpush.msra.mxu0 0.0
    %286 = vmatpush.msra.mxu0 0.0
    %287 = vmatpush.msra.mxu0 0.0
    %288 = vmatpush.msra.mxu0 0.0
    %289 = vmatpush.msra.mxu0 %v260
    %290 = vmatpush.msra.mxu0 %v258
    %291 = vmatpush.msra.mxu0 %v256
    %292 = vmatpush.msra.mxu0 %v254
    %293 = vmatmul.f32.gmra.mxu0 %v266
    %v294 = vpop.f32.mrf.mxu0
    %v295 = vadd.f32 0.0, %v294
    %296 = vmatmul.f32.gmra.mxu0 %v269
    %v297 = vpop.f32.mrf.mxu0
    %v298 = vadd.f32 0.0, %v297
    %299 = vmatmul.f32.gmra.mxu0 %v272
    %v300 = vpop.f32.mrf.mxu0
    %v301 = vadd.f32 0.0, %v300
    %302 = vmatmul.f32.gmra.mxu0 %v275
    %v303 = vpop.f32.mrf.mxu0
    %v304 = vadd.f32 0.0, %v303
    %305 = vdwg.mxu0
    %306 = vrot.lane.b32.xlu0 %v132, 120
    %v307 = vpop.permute.xlu0 %306
    %308 = vrot.lane.b32.xlu0 %v135, 120
    %v309 = vpop.permute.xlu0 %308
    %310 = vrot.lane.b32.xlu0 %v138, 120
    %v311 = vpop.permute.xlu0 %310
    %312 = vrot.lane.b32.xlu0 %v141, 120
    %v313 = vpop.permute.xlu0 %312
    %314 = vrot.lane.b32.xlu0 %v132, 88
    %v315 = vpop.permute.xlu0 %314
    %316 = vrot.lane.b32.xlu0 %v135, 88
    %v317 = vpop.permute.xlu0 %316
    %318 = vrot.lane.b32.xlu0 %v138, 88
    %v319 = vpop.permute.xlu0 %318
    %320 = vrot.lane.b32.xlu0 %v141, 88
    %v321 = vpop.permute.xlu0 %320
    %v322 = vsel %vm155, %v307, 0
    %v324 = vsel %vm155, %v309, 0
    %v326 = vsel %vm155, %v311, 0
    %v328 = vsel %vm155, %v313, 0
    %v330 = vsel %vm155, %v315, 0
    %v332 = vsel %vm155, %v317, 0
    %v334 = vsel %vm155, %v319, 0
    %v336 = vsel %vm155, %v321, 0
    %338 = vmatpush.xpose.msra.mxu0 0.0
    %339 = vmatpush.xpose.msra.mxu0 0.0
    %340 = vmatpush.xpose.msra.mxu0 0.0
    %341 = vmatpush.xpose.msra.mxu0 0.0
    %342 = vmatpush.xpose.msra.mxu0 0.0
    %343 = vmatpush.xpose.msra.mxu0 0.0
    %344 = vmatpush.xpose.msra.mxu0 0.0
    %345 = vmatpush.xpose.msra.mxu0 0.0
    %346 = vmatpush.xpose.msra.mxu0 0.0
    %347 = vmatpush.xpose.msra.mxu0 0.0
    %348 = vmatpush.xpose.msra.mxu0 0.0
    %349 = vmatpush.xpose.msra.mxu0 0.0
    %350 = vmatpush.xpose.msra.mxu0 %v336
    %351 = vmatpush.xpose.msra.mxu0 %v334
    %352 = vmatpush.xpose.msra.mxu0 %v332
    %353 = vmatpush.xpose.msra.mxu0 %v330
    %354 = vmatmul.f32.gmra.mxu0 %v322
    %v355 = vpop.f32.mrf.mxu0
    %v356 = vadd.f32 0.0, %v355
    %357 = vmatmul.f32.gmra.mxu0 %v324
    %v358 = vpop.f32.mrf.mxu0
    %v359 = vadd.f32 0.0, %v358
    %360 = vmatmul.f32.gmra.mxu0 %v326
    %v361 = vpop.f32.mrf.mxu0
    %v362 = vadd.f32 0.0, %v361
    %363 = vmatmul.f32.gmra.mxu0 %v328
    %v364 = vpop.f32.mrf.mxu0
    %v365 = vadd.f32 0.0, %v364
    %366 = vdwg.mxu0
    %v367 = vmul.f32 %v356, 0.35355338
    %v368 = vmul.f32 %v359, 0.35355338
    %v369 = vmul.f32 %v362, 0.35355338
    %v370 = vmul.f32 %v365, 0.35355338
    %v371 = vadd.f32 %v367, %v30
    %v372 = vadd.f32 %v368, %v31
    %v373 = vadd.f32 %v369, %v32
    %v374 = vadd.f32 %v370, %v33
    %v375 = vsel %vm101, %v371, -inf
    %376 = vmax.xlane.f32.xlu0 %v375
    %v377 = vpop.xlane.xlu0 %376
    %v378 = vsel %vm101, %v372, -inf
    %379 = vmax.xlane.f32.xlu0 %v378
    %v380 = vpop.xlane.xlu0 %379
    %v381 = vsel %vm101, %v373, -inf
    %382 = vmax.xlane.f32.xlu0 %v381
    %v383 = vpop.xlane.xlu0 %382
    %v384 = vsel %vm101, %v374, -inf
    %385 = vmax.xlane.f32.xlu0 %v384
    %v386 = vpop.xlane.xlu0 %385
    %v387 = vsub.f32 %v371, %v377
    %v388 = vsub.f32 %v372, %v380
    %v389 = vsub.f32 %v373, %v383
    %v390 = vsub.f32 %v374, %v386
    %v391 = vmul.f32 %v387, 1.442695
    %v392 = vpow.pop %v391
    %v393 = vmul.f32 %v388, 1.442695
    %v394 = vpow.pop %v393
    %v395 = vmul.f32 %v389, 1.442695
    %v396 = vpow.pop %v395
    %v397 = vmul.f32 %v390, 1.442695
    %v398 = vpow.pop %v397
    %v399 = vsel %vm101, %v392, 0.0
    %400 = vadd.xlane.f32.xlu0 %v399
    %v401 = vpop.xlane.xlu0 %400
    %v402 = vsel %vm101, %v394, 0.0
    %403 = vadd.xlane.f32.xlu0 %v402
    %v404 = vpop.xlane.xlu0 %403
    %v405 = vsel %vm101, %v396, 0.0
    %406 = vadd.xlane.f32.xlu0 %v405
    %v407 = vpop.xlane.xlu0 %406
    %v408 = vsel %vm101, %v398, 0.0
    %409 = vadd.xlane.f32.xlu0 %v408
    %v410 = vpop.xlane.xlu0 %409
    %v411 = vrcp.pop %v401
    %v412 = vrcp.pop %v404
    %v413 = vrcp.pop %v407
    %v414 = vrcp.pop %v410
    %v415 = vmul.f32 %v392, %v411
    %v416 = vmul.f32 %v394, %v412
    %v417 = vmul.f32 %v396, %v413
    %v418 = vmul.f32 %v398, %v414
    %419 = vrot.lane.b32.xlu0 %v132, 56
    %v420 = vpop.permute.xlu0 %419
    %421 = vrot.lane.b32.xlu0 %v135, 56
    %v422 = vpop.permute.xlu0 %421
    %423 = vrot.lane.b32.xlu0 %v138, 56
    %v424 = vpop.permute.xlu0 %423
    %425 = vrot.lane.b32.xlu0 %v141, 56
    %v426 = vpop.permute.xlu0 %425
    %v432 = vsel %vm101, %v415, 0
    %v435 = vsel %vm101, %v416, 0
    %v438 = vsel %vm101, %v417, 0
    %v441 = vsel %vm101, %v418, 0
    %443 = vmatpush.msra.mxu0 0.0
    %444 = vmatpush.msra.mxu0 0.0
    %445 = vmatpush.msra.mxu0 0.0
    %446 = vmatpush.msra.mxu0 0.0
    %447 = vmatpush.msra.mxu0 0.0
    %448 = vmatpush.msra.mxu0 0.0
    %449 = vmatpush.msra.mxu0 0.0
    %450 = vmatpush.msra.mxu0 0.0
    %451 = vmatpush.msra.mxu0 0.0
    %452 = vmatpush.msra.mxu0 0.0
    %453 = vmatpush.msra.mxu0 0.0
    %454 = vmatpush.msra.mxu0 0.0
    %455 = vmatpush.msra.mxu0 %v426
    %456 = vmatpush.msra.mxu0 %v424
    %457 = vmatpush.msra.mxu0 %v422
    %458 = vmatpush.msra.mxu0 %v420
    %459 = vmatmul.f32.gmra.mxu0 %v432
    %v460 = vpop.f32.mrf.mxu0
    %v461 = vadd.f32 0.0, %v460
    %462 = vmatmul.f32.gmra.mxu0 %v435
    %v463 = vpop.f32.mrf.mxu0
    %v464 = vadd.f32 0.0, %v463
    %465 = vmatmul.f32.gmra.mxu0 %v438
    %v466 = vpop.f32.mrf.mxu0
    %v467 = vadd.f32 0.0, %v466
    %468 = vmatmul.f32.gmra.mxu0 %v441
    %v469 = vpop.f32.mrf.mxu0
    %v470 = vadd.f32 0.0, %v469
    %471 = vdwg.mxu0
    %v473 = vsel %vm155, %v461, 0
    %v476 = vsel %vm155, %v464, 0
    %v479 = vsel %vm155, %v467, 0
    %v482 = vsel %vm155, %v470, 0
    %484 = vmatpush.msra.mxu0 0.0
    %485 = vmatpush.msra.mxu0 0.0
    %486 = vmatpush.msra.mxu0 0.0
    %487 = vmatpush.msra.mxu0 0.0
    %488 = vmatpush.msra.mxu0 0.0
    %489 = vmatpush.msra.mxu0 0.0
    %490 = vmatpush.msra.mxu0 0.0
    %491 = vmatpush.msra.mxu0 0.0
    %492 = vmatpush.msra.mxu0 0.0
    %493 = vmatpush.msra.mxu0 0.0
    %494 = vmatpush.msra.mxu0 0.0
    %495 = vmatpush.msra.mxu0 0.0
    %496 = vmatpush.msra.mxu0 0.0
    %497 = vmatpush.msra.mxu0 0.0
    %498 = vmatpush.msra.mxu0 0.0
    %499 = vmatpush.msra.mxu0 %v96
    %500 = vmatmul.f32.gmra.mxu0 %v473
    %v501 = vpop.f32.mrf.mxu0
    %v502 = vadd.f32 0.0, %v501
    %503 = vmatmul.f32.gmra.mxu0 %v476
    %v504 = vpop.f32.mrf.mxu0
    %v505 = vadd.f32 0.0, %v504
    %506 = vmatmul.f32.gmra.mxu0 %v479
    %v507 = vpop.f32.mrf.mxu0
    %v508 = vadd.f32 0.0, %v507
    %509 = vmatmul.f32.gmra.mxu0 %v482
    %v510 = vpop.f32.mrf.mxu0
    %v511 = vadd.f32 0.0, %v510
    %512 = vdwg.mxu0
    %v514 = vsel %vm155, %v295, 0
    %v517 = vsel %vm155, %v298, 0
    %v520 = vsel %vm155, %v301, 0
    %v523 = vsel %vm155, %v304, 0
    %525 = vmatpush.msra.mxu0 0.0
    %526 = vmatpush.msra.mxu0 0.0
    %527 = vmatpush.msra.mxu0 0.0
    %528 = vmatpush.msra.mxu0 0.0
    %529 = vmatpush.msra.mxu0 0.0
    %530 = vmatpush.msra.mxu0 0.0
    %531 = vmatpush.msra.mxu0 0.0
    %532 = vmatpush.msra.mxu0 0.0
    %533 = vmatpush.msra.mxu0 0.0
    %534 = vmatpush.msra.mxu0 0.0
    %535 = vmatpush.msra.mxu0 0.0
    %536 = vmatpush.msra.mxu0 0.0
    %537 = vmatpush.msra.mxu0 0.0
    %538 = vmatpush.msra.mxu0 0.0
    %539 = vmatpush.msra.mxu0 0.0
    %540 = vmatpush.msra.mxu0 %v95
    %541 = vmatmul.f32.gmra.mxu0 %v514
    %v542 = vpop.f32.mrf.mxu0
    %v543 = vadd.f32 %v502, %v542
    %544 = vmatmul.f32.gmra.mxu0 %v517
    %v545 = vpop.f32.mrf.mxu0
    %v546 = vadd.f32 %v505, %v545
    %547 = vmatmul.f32.gmra.mxu0 %v520
    %v548 = vpop.f32.mrf.mxu0
    %v549 = vadd.f32 %v508, %v548
    %550 = vmatmul.f32.gmra.mxu0 %v523
    %v551 = vpop.f32.mrf.mxu0
    %v552 = vadd.f32 %v511, %v551
    %553 = vdwg.mxu0
    %554 = vrot.lane.b32.xlu0 %v132, 112
    %v555 = vpop.permute.xlu0 %554
    %556 = vrot.lane.b32.xlu0 %v135, 112
    %v557 = vpop.permute.xlu0 %556
    %558 = vrot.lane.b32.xlu0 %v138, 112
    %v559 = vpop.permute.xlu0 %558
    %560 = vrot.lane.b32.xlu0 %v141, 112
    %v561 = vpop.permute.xlu0 %560
    %562 = vrot.lane.b32.xlu0 %v132, 80
    %v563 = vpop.permute.xlu0 %562
    %564 = vrot.lane.b32.xlu0 %v135, 80
    %v565 = vpop.permute.xlu0 %564
    %566 = vrot.lane.b32.xlu0 %v138, 80
    %v567 = vpop.permute.xlu0 %566
    %568 = vrot.lane.b32.xlu0 %v141, 80
    %v569 = vpop.permute.xlu0 %568
    %v570 = vsel %vm155, %v555, 0
    %v572 = vsel %vm155, %v557, 0
    %v574 = vsel %vm155, %v559, 0
    %v576 = vsel %vm155, %v561, 0
    %v578 = vsel %vm155, %v563, 0
    %v580 = vsel %vm155, %v565, 0
    %v582 = vsel %vm155, %v567, 0
    %v584 = vsel %vm155, %v569, 0
    %586 = vmatpush.xpose.msra.mxu0 0.0
    %587 = vmatpush.xpose.msra.mxu0 0.0
    %588 = vmatpush.xpose.msra.mxu0 0.0
    %589 = vmatpush.xpose.msra.mxu0 0.0
    %590 = vmatpush.xpose.msra.mxu0 0.0
    %591 = vmatpush.xpose.msra.mxu0 0.0
    %592 = vmatpush.xpose.msra.mxu0 0.0
    %593 = vmatpush.xpose.msra.mxu0 0.0
    %594 = vmatpush.xpose.msra.mxu0 0.0
    %595 = vmatpush.xpose.msra.mxu0 0.0
    %596 = vmatpush.xpose.msra.mxu0 0.0
    %597 = vmatpush.xpose.msra.mxu0 0.0
    %598 = vmatpush.xpose.msra.mxu0 %v584
    %599 = vmatpush.xpose.msra.mxu0 %v582
    %600 = vmatpush.xpose.msra.mxu0 %v580
    %601 = vmatpush.xpose.msra.mxu0 %v578
    %602 = vmatmul.f32.gmra.mxu0 %v570
    %v603 = vpop.f32.mrf.mxu0
    %v604 = vadd.f32 0.0, %v603
    %605 = vmatmul.f32.gmra.mxu0 %v572
    %v606 = vpop.f32.mrf.mxu0
    %v607 = vadd.f32 0.0, %v606
    %608 = vmatmul.f32.gmra.mxu0 %v574
    %v609 = vpop.f32.mrf.mxu0
    %v610 = vadd.f32 0.0, %v609
    %611 = vmatmul.f32.gmra.mxu0 %v576
    %v612 = vpop.f32.mrf.mxu0
    %v613 = vadd.f32 0.0, %v612
    %614 = vdwg.mxu0
    %v615 = vmul.f32 %v604, 0.35355338
    %v616 = vmul.f32 %v607, 0.35355338
    %v617 = vmul.f32 %v610, 0.35355338
    %v618 = vmul.f32 %v613, 0.35355338
    %v619 = vadd.f32 %v615, %v30
    %v620 = vadd.f32 %v616, %v31
    %v621 = vadd.f32 %v617, %v32
    %v622 = vadd.f32 %v618, %v33
    %v623 = vsel %vm101, %v619, -inf
    %624 = vmax.xlane.f32.xlu0 %v623
    %v625 = vpop.xlane.xlu0 %624
    %v626 = vsel %vm101, %v620, -inf
    %627 = vmax.xlane.f32.xlu0 %v626
    %v628 = vpop.xlane.xlu0 %627
    %v629 = vsel %vm101, %v621, -inf
    %630 = vmax.xlane.f32.xlu0 %v629
    %v631 = vpop.xlane.xlu0 %630
    %v632 = vsel %vm101, %v622, -inf
    %633 = vmax.xlane.f32.xlu0 %v632
    %v634 = vpop.xlane.xlu0 %633
    %v635 = vsub.f32 %v619, %v625
    %v636 = vsub.f32 %v620, %v628
    %v637 = vsub.f32 %v621, %v631
    %v638 = vsub.f32 %v622, %v634
    %v639 = vmul.f32 %v635, 1.442695
    %v640 = vpow.pop %v639
    %v641 = vmul.f32 %v636, 1.442695
    %v642 = vpow.pop %v641
    %v643 = vmul.f32 %v637, 1.442695
    %v644 = vpow.pop %v643
    %v645 = vmul.f32 %v638, 1.442695
    %v646 = vpow.pop %v645
    %v647 = vsel %vm101, %v640, 0.0
    %648 = vadd.xlane.f32.xlu0 %v647
    %v649 = vpop.xlane.xlu0 %648
    %v650 = vsel %vm101, %v642, 0.0
    %651 = vadd.xlane.f32.xlu0 %v650
    %v652 = vpop.xlane.xlu0 %651
    %v653 = vsel %vm101, %v644, 0.0
    %654 = vadd.xlane.f32.xlu0 %v653
    %v655 = vpop.xlane.xlu0 %654
    %v656 = vsel %vm101, %v646, 0.0
    %657 = vadd.xlane.f32.xlu0 %v656
    %v658 = vpop.xlane.xlu0 %657
    %v659 = vrcp.pop %v649
    %v660 = vrcp.pop %v652
    %v661 = vrcp.pop %v655
    %v662 = vrcp.pop %v658
    %v663 = vmul.f32 %v640, %v659
    %v664 = vmul.f32 %v642, %v660
    %v665 = vmul.f32 %v644, %v661
    %v666 = vmul.f32 %v646, %v662
    %667 = vrot.lane.b32.xlu0 %v132, 48
    %v668 = vpop.permute.xlu0 %667
    %669 = vrot.lane.b32.xlu0 %v135, 48
    %v670 = vpop.permute.xlu0 %669
    %671 = vrot.lane.b32.xlu0 %v138, 48
    %v672 = vpop.permute.xlu0 %671
    %673 = vrot.lane.b32.xlu0 %v141, 48
    %v674 = vpop.permute.xlu0 %673
    %v680 = vsel %vm101, %v663, 0
    %v683 = vsel %vm101, %v664, 0
    %v686 = vsel %vm101, %v665, 0
    %v689 = vsel %vm101, %v666, 0
    %691 = vmatpush.msra.mxu0 0.0
    %692 = vmatpush.msra.mxu0 0.0
    %693 = vmatpush.msra.mxu0 0.0
    %694 = vmatpush.msra.mxu0 0.0
    %695 = vmatpush.msra.mxu0 0.0
    %696 = vmatpush.msra.mxu0 0.0
    %697 = vmatpush.msra.mxu0 0.0
    %698 = vmatpush.msra.mxu0 0.0
    %699 = vmatpush.msra.mxu0 0.0
    %700 = vmatpush.msra.mxu0 0.0
    %701 = vmatpush.msra.mxu0 0.0
    %702 = vmatpush.msra.mxu0 0.0
    %703 = vmatpush.msra.mxu0 %v674
    %704 = vmatpush.msra.mxu0 %v672
    %705 = vmatpush.msra.mxu0 %v670
    %706 = vmatpush.msra.mxu0 %v668
    %707 = vmatmul.f32.gmra.mxu0 %v680
    %v708 = vpop.f32.mrf.mxu0
    %v709 = vadd.f32 0.0, %v708
    %710 = vmatmul.f32.gmra.mxu0 %v683
    %v711 = vpop.f32.mrf.mxu0
    %v712 = vadd.f32 0.0, %v711
    %713 = vmatmul.f32.gmra.mxu0 %v686
    %v714 = vpop.f32.mrf.mxu0
    %v715 = vadd.f32 0.0, %v714
    %716 = vmatmul.f32.gmra.mxu0 %v689
    %v717 = vpop.f32.mrf.mxu0
    %v718 = vadd.f32 0.0, %v717
    %719 = vdwg.mxu0
    %v721 = vsel %vm155, %v709, 0
    %v724 = vsel %vm155, %v712, 0
    %v727 = vsel %vm155, %v715, 0
    %v730 = vsel %vm155, %v718, 0
    %732 = vmatpush.msra.mxu0 0.0
    %733 = vmatpush.msra.mxu0 0.0
    %734 = vmatpush.msra.mxu0 0.0
    %735 = vmatpush.msra.mxu0 0.0
    %736 = vmatpush.msra.mxu0 0.0
    %737 = vmatpush.msra.mxu0 0.0
    %738 = vmatpush.msra.mxu0 0.0
    %739 = vmatpush.msra.mxu0 0.0
    %740 = vmatpush.msra.mxu0 0.0
    %741 = vmatpush.msra.mxu0 0.0
    %742 = vmatpush.msra.mxu0 0.0
    %743 = vmatpush.msra.mxu0 0.0
    %744 = vmatpush.msra.mxu0 0.0
    %745 = vmatpush.msra.mxu0 0.0
    %746 = vmatpush.msra.mxu0 0.0
    %747 = vmatpush.msra.mxu0 %v97
    %748 = vmatmul.f32.gmra.mxu0 %v721
    %v749 = vpop.f32.mrf.mxu0
    %v750 = vadd.f32 0.0, %v749
    %751 = vmatmul.f32.gmra.mxu0 %v724
    %v752 = vpop.f32.mrf.mxu0
    %v753 = vadd.f32 0.0, %v752
    %754 = vmatmul.f32.gmra.mxu0 %v727
    %v755 = vpop.f32.mrf.mxu0
    %v756 = vadd.f32 0.0, %v755
    %757 = vmatmul.f32.gmra.mxu0 %v730
    %v758 = vpop.f32.mrf.mxu0
    %v759 = vadd.f32 0.0, %v758
    %760 = vdwg.mxu0
    %v761 = vadd.f32 %v543, %v750
    %v762 = vadd.f32 %v546, %v753
    %v763 = vadd.f32 %v549, %v756
    %v764 = vadd.f32 %v552, %v759
    %765 = vrot.lane.b32.xlu0 %v132, 104
    %v766 = vpop.permute.xlu0 %765
    %767 = vrot.lane.b32.xlu0 %v135, 104
    %v768 = vpop.permute.xlu0 %767
    %769 = vrot.lane.b32.xlu0 %v138, 104
    %v770 = vpop.permute.xlu0 %769
    %771 = vrot.lane.b32.xlu0 %v141, 104
    %v772 = vpop.permute.xlu0 %771
    %773 = vrot.lane.b32.xlu0 %v132, 72
    %v774 = vpop.permute.xlu0 %773
    %775 = vrot.lane.b32.xlu0 %v135, 72
    %v776 = vpop.permute.xlu0 %775
    %777 = vrot.lane.b32.xlu0 %v138, 72
    %v778 = vpop.permute.xlu0 %777
    %779 = vrot.lane.b32.xlu0 %v141, 72
    %v780 = vpop.permute.xlu0 %779
    %v781 = vsel %vm155, %v766, 0
    %v783 = vsel %vm155, %v768, 0
    %v785 = vsel %vm155, %v770, 0
    %v787 = vsel %vm155, %v772, 0
    %v789 = vsel %vm155, %v774, 0
    %v791 = vsel %vm155, %v776, 0
    %v793 = vsel %vm155, %v778, 0
    %v795 = vsel %vm155, %v780, 0
    %797 = vmatpush.xpose.msra.mxu0 0.0
    %798 = vmatpush.xpose.msra.mxu0 0.0
    %799 = vmatpush.xpose.msra.mxu0 0.0
    %800 = vmatpush.xpose.msra.mxu0 0.0
    %801 = vmatpush.xpose.msra.mxu0 0.0
    %802 = vmatpush.xpose.msra.mxu0 0.0
    %803 = vmatpush.xpose.msra.mxu0 0.0
    %804 = vmatpush.xpose.msra.mxu0 0.0
    %805 = vmatpush.xpose.msra.mxu0 0.0
    %806 = vmatpush.xpose.msra.mxu0 0.0
    %807 = vmatpush.xpose.msra.mxu0 0.0
    %808 = vmatpush.xpose.msra.mxu0 0.0
    %809 = vmatpush.xpose.msra.mxu0 %v795
    %810 = vmatpush.xpose.msra.mxu0 %v793
    %811 = vmatpush.xpose.msra.mxu0 %v791
    %812 = vmatpush.xpose.msra.mxu0 %v789
    %813 = vmatmul.f32.gmra.mxu0 %v781
    %v814 = vpop.f32.mrf.mxu0
    %v815 = vadd.f32 0.0, %v814
    %816 = vmatmul.f32.gmra.mxu0 %v783
    %v817 = vpop.f32.mrf.mxu0
    %v818 = vadd.f32 0.0, %v817
    %819 = vmatmul.f32.gmra.mxu0 %v785
    %v820 = vpop.f32.mrf.mxu0
    %v821 = vadd.f32 0.0, %v820
    %822 = vmatmul.f32.gmra.mxu0 %v787
    %v823 = vpop.f32.mrf.mxu0
    %v824 = vadd.f32 0.0, %v823
    %825 = vdwg.mxu0
    %v826 = vmul.f32 %v815, 0.35355338
    %v827 = vmul.f32 %v818, 0.35355338
    %v828 = vmul.f32 %v821, 0.35355338
    %v829 = vmul.f32 %v824, 0.35355338
    %v830 = vadd.f32 %v826, %v30
    %v831 = vadd.f32 %v827, %v31
    %v832 = vadd.f32 %v828, %v32
    %v833 = vadd.f32 %v829, %v33
    %v834 = vsel %vm101, %v830, -inf
    %835 = vmax.xlane.f32.xlu0 %v834
    %v836 = vpop.xlane.xlu0 %835
    %v837 = vsel %vm101, %v831, -inf
    %838 = vmax.xlane.f32.xlu0 %v837
    %v839 = vpop.xlane.xlu0 %838
    %v840 = vsel %vm101, %v832, -inf
    %841 = vmax.xlane.f32.xlu0 %v840
    %v842 = vpop.xlane.xlu0 %841
    %v843 = vsel %vm101, %v833, -inf
    %844 = vmax.xlane.f32.xlu0 %v843
    %v845 = vpop.xlane.xlu0 %844
    %v846 = vsub.f32 %v830, %v836
    %v847 = vsub.f32 %v831, %v839
    %v848 = vsub.f32 %v832, %v842
    %v849 = vsub.f32 %v833, %v845
    %v850 = vmul.f32 %v846, 1.442695
    %v851 = vpow.pop %v850
    %v852 = vmul.f32 %v847, 1.442695
    %v853 = vpow.pop %v852
    %v854 = vmul.f32 %v848, 1.442695
    %v855 = vpow.pop %v854
    %v856 = vmul.f32 %v849, 1.442695
    %v857 = vpow.pop %v856
    %v858 = vsel %vm101, %v851, 0.0
    %859 = vadd.xlane.f32.xlu0 %v858
    %v860 = vpop.xlane.xlu0 %859
    %v861 = vsel %vm101, %v853, 0.0
    %862 = vadd.xlane.f32.xlu0 %v861
    %v863 = vpop.xlane.xlu0 %862
    %v864 = vsel %vm101, %v855, 0.0
    %865 = vadd.xlane.f32.xlu0 %v864
    %v866 = vpop.xlane.xlu0 %865
    %v867 = vsel %vm101, %v857, 0.0
    %868 = vadd.xlane.f32.xlu0 %v867
    %v869 = vpop.xlane.xlu0 %868
    %v870 = vrcp.pop %v860
    %v871 = vrcp.pop %v863
    %v872 = vrcp.pop %v866
    %v873 = vrcp.pop %v869
    %v874 = vmul.f32 %v851, %v870
    %v875 = vmul.f32 %v853, %v871
    %v876 = vmul.f32 %v855, %v872
    %v877 = vmul.f32 %v857, %v873
    %878 = vrot.lane.b32.xlu0 %v132, 40
    %v879 = vpop.permute.xlu0 %878
    %880 = vrot.lane.b32.xlu0 %v135, 40
    %v881 = vpop.permute.xlu0 %880
    %882 = vrot.lane.b32.xlu0 %v138, 40
    %v883 = vpop.permute.xlu0 %882
    %884 = vrot.lane.b32.xlu0 %v141, 40
    %v885 = vpop.permute.xlu0 %884
    %v891 = vsel %vm101, %v874, 0
    %v894 = vsel %vm101, %v875, 0
    %v897 = vsel %vm101, %v876, 0
    %v900 = vsel %vm101, %v877, 0
    %902 = vmatpush.msra.mxu0 0.0
    %903 = vmatpush.msra.mxu0 0.0
    %904 = vmatpush.msra.mxu0 0.0
    %905 = vmatpush.msra.mxu0 0.0
    %906 = vmatpush.msra.mxu0 0.0
    %907 = vmatpush.msra.mxu0 0.0
    %908 = vmatpush.msra.mxu0 0.0
    %909 = vmatpush.msra.mxu0 0.0
    %910 = vmatpush.msra.mxu0 0.0
    %911 = vmatpush.msra.mxu0 0.0
    %912 = vmatpush.msra.mxu0 0.0
    %913 = vmatpush.msra.mxu0 0.0
    %914 = vmatpush.msra.mxu0 %v885
    %915 = vmatpush.msra.mxu0 %v883
    %916 = vmatpush.msra.mxu0 %v881
    %917 = vmatpush.msra.mxu0 %v879
    %918 = vmatmul.f32.gmra.mxu0 %v891
    %v919 = vpop.f32.mrf.mxu0
    %v920 = vadd.f32 0.0, %v919
    %921 = vmatmul.f32.gmra.mxu0 %v894
    %v922 = vpop.f32.mrf.mxu0
    %v923 = vadd.f32 0.0, %v922
    %924 = vmatmul.f32.gmra.mxu0 %v897
    %v925 = vpop.f32.mrf.mxu0
    %v926 = vadd.f32 0.0, %v925
    %927 = vmatmul.f32.gmra.mxu0 %v900
    %v928 = vpop.f32.mrf.mxu0
    %v929 = vadd.f32 0.0, %v928
    %930 = vdwg.mxu0
    %v932 = vsel %vm155, %v920, 0
    %v935 = vsel %vm155, %v923, 0
    %v938 = vsel %vm155, %v926, 0
    %v941 = vsel %vm155, %v929, 0
    %943 = vmatpush.msra.mxu0 0.0
    %944 = vmatpush.msra.mxu0 0.0
    %945 = vmatpush.msra.mxu0 0.0
    %946 = vmatpush.msra.mxu0 0.0
    %947 = vmatpush.msra.mxu0 0.0
    %948 = vmatpush.msra.mxu0 0.0
    %949 = vmatpush.msra.mxu0 0.0
    %950 = vmatpush.msra.mxu0 0.0
    %951 = vmatpush.msra.mxu0 0.0
    %952 = vmatpush.msra.mxu0 0.0
    %953 = vmatpush.msra.mxu0 0.0
    %954 = vmatpush.msra.mxu0 0.0
    %955 = vmatpush.msra.mxu0 0.0
    %956 = vmatpush.msra.mxu0 0.0
    %957 = vmatpush.msra.mxu0 0.0
    %958 = vmatpush.msra.mxu0 %v98
    %959 = vmatmul.f32.gmra.mxu0 %v932
    %v960 = vpop.f32.mrf.mxu0
    %v961 = vadd.f32 0.0, %v960
    %962 = vmatmul.f32.gmra.mxu0 %v935
    %v963 = vpop.f32.mrf.mxu0
    %v964 = vadd.f32 0.0, %v963
    %965 = vmatmul.f32.gmra.mxu0 %v938
    %v966 = vpop.f32.mrf.mxu0
    %v967 = vadd.f32 0.0, %v966
    %968 = vmatmul.f32.gmra.mxu0 %v941
    %v969 = vpop.f32.mrf.mxu0
    %v970 = vadd.f32 0.0, %v969
    %971 = vdwg.mxu0
    %v972 = vadd.f32 %v761, %v961
    %v973 = vadd.f32 %v762, %v964
    %v974 = vadd.f32 %v763, %v967
    %v975 = vadd.f32 %v764, %v970
    %v976 = vperm.slane %v99, 0
    %v977 = vadd.f32 %v972, %v976
    %v978 = vadd.f32 %v973, %v976
    %v979 = vadd.f32 %v974, %v976
    %v980 = vadd.f32 %v975, %v976
    %v981 = vadd.f32 %v79, %v977
    %v982 = vadd.f32 %v82, %v978
    %v983 = vadd.f32 %v85, %v979
    %v984 = vadd.f32 %v88, %v980
    %v985 = vld [vmem:[#allocation2 + $0xf0] sm:$0x1]
    %v986 = vld [vmem:[#allocation2 + $0xf8] sm:$0x1]
    %v987 = vsel %vm101, %v981, 0.0
    %988 = vadd.xlane.f32.xlu0 %v987
    %v989 = vpop.xlane.xlu0 %988
    %v990 = vsel %vm101, %v982, 0.0
    %991 = vadd.xlane.f32.xlu0 %v990
    %v992 = vpop.xlane.xlu0 %991
    %v993 = vsel %vm101, %v983, 0.0
    %994 = vadd.xlane.f32.xlu0 %v993
    %v995 = vpop.xlane.xlu0 %994
    %v996 = vsel %vm101, %v984, 0.0
    %997 = vadd.xlane.f32.xlu0 %v996
    %v998 = vpop.xlane.xlu0 %997
    %v999 = vrcp.pop 32.0
    %v1000 = vmul.f32 32.0, %v999
    %v1001 = vsub.f32 1.0, %v1000
    %v1002 = vmul.f32 %v999, %v1001
    %v1003 = vadd.f32 %v999, %v1002
    %vm1004 = vweird.f32 %v999
    %v1005 = vsel %vm1004, %v999, %v1003
    %v1006 = vmul.f32 %v989, %v1005
    %v1007 = vmul.f32 %v992, %v1005
    %v1008 = vmul.f32 %v995, %v1005
    %v1009 = vmul.f32 %v998, %v1005
    %v1010 = vsub.f32 %v981, %v1006
    %v1011 = vsub.f32 %v982, %v1007
    %v1012 = vsub.f32 %v983, %v1008
    %v1013 = vsub.f32 %v984, %v1009
    %v1014 = vmul.f32 %v1010, %v1010
    %v1015 = vmul.f32 %v1011, %v1011
    %v1016 = vmul.f32 %v1012, %v1012
    %v1017 = vmul.f32 %v1013, %v1013
    %v1018 = vsel %vm101, %v1014, 0.0
    %1019 = vadd.xlane.f32.xlu0 %v1018
    %v1020 = vpop.xlane.xlu0 %1019
    %v1021 = vsel %vm101, %v1015, 0.0
    %1022 = vadd.xlane.f32.xlu0 %v1021
    %v1023 = vpop.xlane.xlu0 %1022
    %v1024 = vsel %vm101, %v1016, 0.0
    %1025 = vadd.xlane.f32.xlu0 %v1024
    %v1026 = vpop.xlane.xlu0 %1025
    %v1027 = vsel %vm101, %v1017, 0.0
    %1028 = vadd.xlane.f32.xlu0 %v1027
    %v1029 = vpop.xlane.xlu0 %1028
    %v1030 = vmul.f32 %v1020, %v1005
    %v1031 = vmul.f32 %v1023, %v1005
    %v1032 = vmul.f32 %v1026, %v1005
    %v1033 = vmul.f32 %v1029, %v1005
    %v1034 = vadd.f32 %v1030, 1e-05
    %v1035 = vadd.f32 %v1031, 1e-05
    %v1036 = vadd.f32 %v1032, 1e-05
    %v1037 = vadd.f32 %v1033, 1e-05
    %v1038 = vrsqrt.pop %v1034
    %v1039 = vmul.f32 %v1038, %v1034
    %v1040 = vmul.f32 %v1039, %v1038
    %v1041 = vmul.f32 0.5, %v1040
    %v1042 = vsub.f32 1.5, %v1041
    %v1043 = vmul.f32 %v1038, %v1042
    %vm1044 = vweird.f32 %v1034
    %vm1045 = vweird.f32 %v1038
    %vm1046 = vmor %vm1044, %vm1045
    %v1047 = vsel %vm1046, %v1038, %v1043
    %v1048 = vrsqrt.pop %v1035
    %v1049 = vmul.f32 %v1048, %v1035
    %v1050 = vmul.f32 %v1049, %v1048
    %v1051 = vmul.f32 0.5, %v1050
    %v1052 = vsub.f32 1.5, %v1051
    %v1053 = vmul.f32 %v1048, %v1052
    %vm1054 = vweird.f32 %v1035
    %vm1055 = vweird.f32 %v1048
    %vm1056 = vmor %vm1054, %vm1055
    %v1057 = vsel %vm1056, %v1048, %v1053
    %v1058 = vrsqrt.pop %v1036
    %v1059 = vmul.f32 %v1058, %v1036
    %v1060 = vmul.f32 %v1059, %v1058
    %v1061 = vmul.f32 0.5, %v1060
    %v1062 = vsub.f32 1.5, %v1061
    %v1063 = vmul.f32 %v1058, %v1062
    %vm1064 = vweird.f32 %v1036
    %vm1065 = vweird.f32 %v1058
    %vm1066 = vmor %vm1064, %vm1065
    %v1067 = vsel %vm1066, %v1058, %v1063
    %v1068 = vrsqrt.pop %v1037
    %v1069 = vmul.f32 %v1068, %v1037
    %v1070 = vmul.f32 %v1069, %v1068
    %v1071 = vmul.f32 0.5, %v1070
    %v1072 = vsub.f32 1.5, %v1071
    %v1073 = vmul.f32 %v1068, %v1072
    %vm1074 = vweird.f32 %v1037
    %vm1075 = vweird.f32 %v1068
    %vm1076 = vmor %vm1074, %vm1075
    %v1077 = vsel %vm1076, %v1068, %v1073
    %v1078 = vmul.f32 %v1010, %v1047
    %v1079 = vmul.f32 %v1011, %v1057
    %v1080 = vmul.f32 %v1012, %v1067
    %v1081 = vmul.f32 %v1013, %v1077
    %v1082 = vperm.slane %v985, 0
    %v1083 = vmul.f32 %v1078, %v1082
    %v1084 = vmul.f32 %v1079, %v1082
    %v1085 = vmul.f32 %v1080, %v1082
    %v1086 = vmul.f32 %v1081, %v1082
    %v1087 = vperm.slane %v986, 0
    %v1088 = vadd.f32 %v1083, %v1087
    %v1089 = vadd.f32 %v1084, %v1087
    %v1090 = vadd.f32 %v1085, %v1087
    %v1091 = vadd.f32 %v1086, %v1087
    %v1092 = vld [vmem:[#allocation2 + $0x100] sm:$0xff]
    %v1093 = vld [vmem:[#allocation2 + $0x108] sm:$0xff]
    %v1094 = vld [vmem:[#allocation2 + $0x110] sm:$0xff]
    %v1095 = vld [vmem:[#allocation2 + $0x118] sm:$0xff]
    %v1096 = vld [vmem:[#allocation2 + $0x120] sm:$0x1]
    %v1097 = vperm.slane %v1096, 0
    %v1099 = vsel %vm101, %v1088, 0
    %v1102 = vsel %vm101, %v1089, 0
    %v1105 = vsel %vm101, %v1090, 0
    %v1108 = vsel %vm101, %v1091, 0
    %1110 = vmatpush.msra.mxu0 0.0
    %1111 = vmatpush.msra.mxu0 0.0
    %1112 = vmatpush.msra.mxu0 0.0
    %1113 = vmatpush.msra.mxu0 0.0
    %1114 = vmatpush.msra.mxu0 0.0
    %1115 = vmatpush.msra.mxu0 0.0
    %1116 = vmatpush.msra.mxu0 0.0
    %1117 = vmatpush.msra.mxu0 0.0
    %1118 = vmatpush.msra.mxu0 0.0
    %1119 = vmatpush.msra.mxu0 0.0
    %1120 = vmatpush.msra.mxu0 0.0
    %1121 = vmatpush.msra.mxu0 0.0
    %1122 = vmatpush.msra.mxu0 %v1095
    %1123 = vmatpush.msra.mxu0 %v1094
    %1124 = vmatpush.msra.mxu0 %v1093
    %1125 = vmatpush.msra.mxu0 %v1092
    %1126 = vmatmul.f32.gmra.mxu0 %v1099
    %v1127 = vpop.f32.mrf.mxu0
    %v1128 = vadd.f32 %v1097, %v1127
    %1129 = vmatmul.f32.gmra.mxu0 %v1102
    %v1130 = vpop.f32.mrf.mxu0
    %v1131 = vadd.f32 %v1097, %v1130
    %1132 = vmatmul.f32.gmra.mxu0 %v1105
    %v1133 = vpop.f32.mrf.mxu0
    %v1134 = vadd.f32 %v1097, %v1133
    %1135 = vmatmul.f32.gmra.mxu0 %v1108
    %v1136 = vpop.f32.mrf.mxu0
    %v1137 = vadd.f32 %v1097, %v1136
    %1138 = vdwg.mxu0
    %v1139 = vmax.f32 %v1128, 0.0
    %v1140 = vmax.f32 %v1131, 0.0
    %v1141 = vmax.f32 %v1134, 0.0
    %v1142 = vmax.f32 %v1137, 0.0
    %v1143 = vld [vmem:[#allocation2 + $0x128] sm:$0xff]
    %v1144 = vld [vmem:[#allocation2 + $0x130] sm:$0xff]
    %v1145 = vld [vmem:[#allocation2 + $0x138] sm:$0xff]
    %v1146 = vld [vmem:[#allocation2 + $0x140] sm:$0xff]
    %v1147 = vld [vmem:[#allocation2 + $0x148] sm:$0xff]
    %v1148 = vld [vmem:[#allocation2 + $0x150] sm:$0xff]
    %v1149 = vld [vmem:[#allocation2 + $0x158] sm:$0xff]
    %v1150 = vld [vmem:[#allocation2 + $0x160] sm:$0xff]
    %v1151 = vld [vmem:[#allocation2 + $0x168] sm:$0x1]
    %v1152 = vperm.slane %v1151, 0
    %vm1153 = vcmask 523264
    %v1155 = vsel %vm1153, %v1139, 0
    %v1158 = vsel %vm1153, %v1140, 0
    %v1161 = vsel %vm1153, %v1141, 0
    %v1164 = vsel %vm1153, %v1142, 0
    %1166 = vmatpush.msra.mxu0 0.0
    %1167 = vmatpush.msra.mxu0 0.0
    %1168 = vmatpush.msra.mxu0 0.0
    %1169 = vmatpush.msra.mxu0 0.0
    %1170 = vmatpush.msra.mxu0 0.0
    %1171 = vmatpush.msra.mxu0 0.0
    %1172 = vmatpush.msra.mxu0 0.0
    %1173 = vmatpush.msra.mxu0 0.0
    %1174 = vmatpush.msra.mxu0 %v1150
    %1175 = vmatpush.msra.mxu0 %v1149
    %1176 = vmatpush.msra.mxu0 %v1148
    %1177 = vmatpush.msra.mxu0 %v1147
    %1178 = vmatpush.msra.mxu0 %v1146
    %1179 = vmatpush.msra.mxu0 %v1145
    %1180 = vmatpush.msra.mxu0 %v1144
    %1181 = vmatpush.msra.mxu0 %v1143
    %1182 = vmatmul.f32.gmra.mxu0 %v1155
    %v1183 = vpop.f32.mrf.mxu0
    %v1184 = vadd.f32 %v1152, %v1183
    %1185 = vmatmul.f32.gmra.mxu0 %v1158
    %v1186 = vpop.f32.mrf.mxu0
    %v1187 = vadd.f32 %v1152, %v1186
    %1188 = vmatmul.f32.gmra.mxu0 %v1161
    %v1189 = vpop.f32.mrf.mxu0
    %v1190 = vadd.f32 %v1152, %v1189
    %1191 = vmatmul.f32.gmra.mxu0 %v1164
    %v1192 = vpop.f32.mrf.mxu0
    %v1193 = vadd.f32 %v1152, %v1192
    %1194 = vdwg.mxu0
    %v1195 = vadd.f32 %v1088, %v1184
    %v1196 = vadd.f32 %v1089, %v1187
    %v1197 = vadd.f32 %v1090, %v1190
    %v1198 = vadd.f32 %v1091, %v1193
    %v1199 = vld [vmem:[#allocation2 + $0x170] sm:$0x1]
    %v1200 = vld [vmem:[#allocation2 + $0x178] sm:$0x1]
    %v1201 = vsel %vm101, %v1195, 0.0
    %1202 = vadd.xlane.f32.xlu0 %v1201
    %v1203 = vpop.xlane.xlu0 %1202
    %v1204 = vsel %vm101, %v1196, 0.0
    %1205 = vadd.xlane.f32.xlu0 %v1204
    %v1206 = vpop.xlane.xlu0 %1205
    %v1207 = vsel %vm101, %v1197, 0.0
    %1208 = vadd.xlane.f32.xlu0 %v1207
    %v1209 = vpop.xlane.xlu0 %1208
    %v1210 = vsel %vm101, %v1198, 0.0
    %1211 = vadd.xlane.f32.xlu0 %v1210
    %v1212 = vpop.xlane.xlu0 %1211
    %v1213 = vmul.f32 %v1203, %v1005
    %v1214 = vmul.f32 %v1206, %v1005
    %v1215 = vmul.f32 %v1209, %v1005
    %v1216 = vmul.f32 %v1212, %v1005
    %v1217 = vsub.f32 %v1195, %v1213
    %v1218 = vsub.f32 %v1196, %v1214
    %v1219 = vsub.f32 %v1197, %v1215
    %v1220 = vsub.f32 %v1198, %v1216
    %v1221 = vmul.f32 %v1217, %v1217
    %v1222 = vmul.f32 %v1218, %v1218
    %v1223 = vmul.f32 %v1219, %v1219
    %v1224 = vmul.f32 %v1220, %v1220
    %v1225 = vsel %vm101, %v1221, 0.0
    %1226 = vadd.xlane.f32.xlu0 %v1225
    %v1227 = vpop.xlane.xlu0 %1226
    %v1228 = vsel %vm101, %v1222, 0.0
    %1229 = vadd.xlane.f32.xlu0 %v1228
    %v1230 = vpop.xlane.xlu0 %1229
    %v1231 = vsel %vm101, %v1223, 0.0
    %1232 = vadd.xlane.f32.xlu0 %v1231
    %v1233 = vpop.xlane.xlu0 %1232
    %v1234 = vsel %vm101, %v1224, 0.0
    %1235 = vadd.xlane.f32.xlu0 %v1234
    %v1236 = vpop.xlane.xlu0 %1235
    %v1237 = vmul.f32 %v1227, %v1005
    %v1238 = vmul.f32 %v1230, %v1005
    %v1239 = vmul.f32 %v1233, %v1005
    %v1240 = vmul.f32 %v1236, %v1005
    %v1241 = vadd.f32 %v1237, 1e-05
    %v1242 = vadd.f32 %v1238, 1e-05
    %v1243 = vadd.f32 %v1239, 1e-05
    %v1244 = vadd.f32 %v1240, 1e-05
    %v1245 = vrsqrt.pop %v1241
    %v1246 = vmul.f32 %v1245, %v1241
    %v1247 = vmul.f32 %v1246, %v1245
    %v1248 = vmul.f32 0.5, %v1247
    %v1249 = vsub.f32 1.5, %v1248
    %v1250 = vmul.f32 %v1245, %v1249
    %vm1251 = vweird.f32 %v1241
    %vm1252 = vweird.f32 %v1245
    %vm1253 = vmor %vm1251, %vm1252
    %v1254 = vsel %vm1253, %v1245, %v1250
    %v1255 = vrsqrt.pop %v1242
    %v1256 = vmul.f32 %v1255, %v1242
    %v1257 = vmul.f32 %v1256, %v1255
    %v1258 = vmul.f32 0.5, %v1257
    %v1259 = vsub.f32 1.5, %v1258
    %v1260 = vmul.f32 %v1255, %v1259
    %vm1261 = vweird.f32 %v1242
    %vm1262 = vweird.f32 %v1255
    %vm1263 = vmor %vm1261, %vm1262
    %v1264 = vsel %vm1263, %v1255, %v1260
    %v1265 = vrsqrt.pop %v1243
    %v1266 = vmul.f32 %v1265, %v1243
    %v1267 = vmul.f32 %v1266, %v1265
    %v1268 = vmul.f32 0.5, %v1267
    %v1269 = vsub.f32 1.5, %v1268
    %v1270 = vmul.f32 %v1265, %v1269
    %vm1271 = vweird.f32 %v1243
    %vm1272 = vweird.f32 %v1265
    %vm1273 = vmor %vm1271, %vm1272
    %v1274 = vsel %vm1273, %v1265, %v1270
    %v1275 = vrsqrt.pop %v1244
    %v1276 = vmul.f32 %v1275, %v1244
    %v1277 = vmul.f32 %v1276, %v1275
    %v1278 = vmul.f32 0.5, %v1277
    %v1279 = vsub.f32 1.5, %v1278
    %v1280 = vmul.f32 %v1275, %v1279
    %vm1281 = vweird.f32 %v1244
    %vm1282 = vweird.f32 %v1275
    %vm1283 = vmor %vm1281, %vm1282
    %v1284 = vsel %vm1283, %v1275, %v1280
    %v1285 = vmul.f32 %v1217, %v1254
    %v1286 = vmul.f32 %v1218, %v1264
    %v1287 = vmul.f32 %v1219, %v1274
    %v1288 = vmul.f32 %v1220, %v1284
    %v1289 = vperm.slane %v1199, 0
    %v1290 = vmul.f32 %v1285, %v1289
    %v1291 = vmul.f32 %v1286, %v1289
    %v1292 = vmul.f32 %v1287, %v1289
    %v1293 = vmul.f32 %v1288, %v1289
    %v1294 = vperm.slane %v1200, 0
    %v1295 = vadd.f32 %v1290, %v1294
    %v1296 = vadd.f32 %v1291, %v1294
    %v1297 = vadd.f32 %v1292, %v1294
    %v1298 = vadd.f32 %v1293, %v1294
    %v1299 = vld [vmem:[#allocation2 + $0x180] sm:$0xff]
    %v1300 = vld [vmem:[#allocation2 + $0x188] sm:$0xff]
    %v1301 = vld [vmem:[#allocation2 + $0x190] sm:$0xff]
    %v1302 = vld [vmem:[#allocation2 + $0x198] sm:$0xff]
    %v1303 = vld [vmem:[#allocation2 + $0x1a0] sm:$0x1]
    %v1304 = vld [vmem:[#allocation2 + $0x1a8] sm:$0xff]
    %v1305 = vld [vmem:[#allocation2 + $0x1b0] sm:$0xff]
    %v1306 = vld [vmem:[#allocation2 + $0x1b8] sm:$0xff]
    %v1307 = vld [vmem:[#allocation2 + $0x1c0] sm:$0xff]
    %v1308 = vld [vmem:[#allocation2 + $0x1c8] sm:$0x1]
    %v1309 = vperm.slane %v1303, 0
    %v1311 = vsel %vm101, %v1295, 0
    %v1314 = vsel %vm101, %v1296, 0
    %v1317 = vsel %vm101, %v1297, 0
    %v1320 = vsel %vm101, %v1298, 0
    %1322 = vmatpush.msra.mxu0 0.0
    %1323 = vmatpush.msra.mxu0 0.0
    %1324 = vmatpush.msra.mxu0 0.0
    %1325 = vmatpush.msra.mxu0 0.0
    %1326 = vmatpush.msra.mxu0 0.0
    %1327 = vmatpush.msra.mxu0 0.0
    %1328 = vmatpush.msra.mxu0 0.0
    %1329 = vmatpush.msra.mxu0 0.0
    %1330 = vmatpush.msra.mxu0 0.0
    %1331 = vmatpush.msra.mxu0 0.0
    %1332 = vmatpush.msra.mxu0 0.0
    %1333 = vmatpush.msra.mxu0 0.0
    %1334 = vmatpush.msra.mxu0 %v1302
    %1335 = vmatpush.msra.mxu0 %v1301
    %1336 = vmatpush.msra.mxu0 %v1300
    %1337 = vmatpush.msra.mxu0 %v1299
    %1338 = vmatmul.f32.gmra.mxu0 %v1311
    %v1339 = vpop.f32.mrf.mxu0
    %v1340 = vadd.f32 %v1309, %v1339
    %1341 = vmatmul.f32.gmra.mxu0 %v1314
    %v1342 = vpop.f32.mrf.mxu0
    %v1343 = vadd.f32 %v1309, %v1342
    %1344 = vmatmul.f32.gmra.mxu0 %v1317
    %v1345 = vpop.f32.mrf.mxu0
    %v1346 = vadd.f32 %v1309, %v1345
    %1347 = vmatmul.f32.gmra.mxu0 %v1320
    %v1348 = vpop.f32.mrf.mxu0
    %v1349 = vadd.f32 %v1309, %v1348
    %1350 = vdwg.mxu0
    %1355 = vrot.lane.b32.xlu0 %v1340, 96
    %v1356 = vpop.permute.xlu0 %1355
    %1357 = vrot.lane.b32.xlu0 %v1343, 96
    %v1358 = vpop.permute.xlu0 %1357
    %1359 = vrot.lane.b32.xlu0 %v1346, 96
    %v1360 = vpop.permute.xlu0 %1359
    %1361 = vrot.lane.b32.xlu0 %v1349, 96
    %v1362 = vpop.permute.xlu0 %1361
    %v1363 = vsel %vm155, %v1340, 0
    %v1365 = vsel %vm155, %v1343, 0
    %v1367 = vsel %vm155, %v1346, 0
    %v1369 = vsel %vm155, %v1349, 0
    %v1371 = vsel %vm155, %v1356, 0
    %v1373 = vsel %vm155, %v1358, 0
    %v1375 = vsel %vm155, %v1360, 0
    %v1377 = vsel %vm155, %v1362, 0
    %1379 = vmatpush.xpose.msra.mxu0 0.0
    %1380 = vmatpush.xpose.msra.mxu0 0.0
    %1381 = vmatpush.xpose.msra.mxu0 0.0
    %1382 = vmatpush.xpose.msra.mxu0 0.0
    %1383 = vmatpush.xpose.msra.mxu0 0.0
    %1384 = vmatpush.xpose.msra.mxu0 0.0
    %1385 = vmatpush.xpose.msra.mxu0 0.0
    %1386 = vmatpush.xpose.msra.mxu0 0.0
    %1387 = vmatpush.xpose.msra.mxu0 0.0
    %1388 = vmatpush.xpose.msra.mxu0 0.0
    %1389 = vmatpush.xpose.msra.mxu0 0.0
    %1390 = vmatpush.xpose.msra.mxu0 0.0
    %1391 = vmatpush.xpose.msra.mxu0 %v1377
    %1392 = vmatpush.xpose.msra.mxu0 %v1375
    %1393 = vmatpush.xpose.msra.mxu0 %v1373
    %1394 = vmatpush.xpose.msra.mxu0 %v1371
    %1395 = vmatmul.f32.gmra.mxu0 %v1363
    %v1396 = vpop.f32.mrf.mxu0
    %v1397 = vadd.f32 0.0, %v1396
    %1398 = vmatmul.f32.gmra.mxu0 %v1365
    %v1399 = vpop.f32.mrf.mxu0
    %v1400 = vadd.f32 0.0, %v1399
    %1401 = vmatmul.f32.gmra.mxu0 %v1367
    %v1402 = vpop.f32.mrf.mxu0
    %v1403 = vadd.f32 0.0, %v1402
    %1404 = vmatmul.f32.gmra.mxu0 %v1369
    %v1405 = vpop.f32.mrf.mxu0
    %v1406 = vadd.f32 0.0, %v1405
    %1407 = vdwg.mxu0
    %v1408 = vmul.f32 %v1397, 0.35355338
    %v1409 = vmul.f32 %v1400, 0.35355338
    %v1410 = vmul.f32 %v1403, 0.35355338
    %v1411 = vmul.f32 %v1406, 0.35355338
    %v1412 = vadd.f32 %v1408, %v30
    %v1413 = vadd.f32 %v1409, %v31
    %v1414 = vadd.f32 %v1410, %v32
    %v1415 = vadd.f32 %v1411, %v33
    %v1416 = vsel %vm101, %v1412, -inf
    %1417 = vmax.xlane.f32.xlu0 %v1416
    %v1418 = vpop.xlane.xlu0 %1417
    %v1419 = vsel %vm101, %v1413, -inf
    %1420 = vmax.xlane.f32.xlu0 %v1419
    %v1421 = vpop.xlane.xlu0 %1420
    %v1422 = vsel %vm101, %v1414, -inf
    %1423 = vmax.xlane.f32.xlu0 %v1422
    %v1424 = vpop.xlane.xlu0 %1423
    %v1425 = vsel %vm101, %v1415, -inf
    %1426 = vmax.xlane.f32.xlu0 %v1425
    %v1427 = vpop.xlane.xlu0 %1426
    %v1428 = vsub.f32 %v1412, %v1418
    %v1429 = vsub.f32 %v1413, %v1421
    %v1430 = vsub.f32 %v1414, %v1424
    %v1431 = vsub.f32 %v1415, %v1427
    %v1432 = vmul.f32 %v1428, 1.442695
    %v1433 = vpow.pop %v1432
    %v1434 = vmul.f32 %v1429, 1.442695
    %v1435 = vpow.pop %v1434
    %v1436 = vmul.f32 %v1430, 1.442695
    %v1437 = vpow.pop %v1436
    %v1438 = vmul.f32 %v1431, 1.442695
    %v1439 = vpow.pop %v1438
    %v1440 = vsel %vm101, %v1433, 0.0
    %1441 = vadd.xlane.f32.xlu0 %v1440
    %v1442 = vpop.xlane.xlu0 %1441
    %v1443 = vsel %vm101, %v1435, 0.0
    %1444 = vadd.xlane.f32.xlu0 %v1443
    %v1445 = vpop.xlane.xlu0 %1444
    %v1446 = vsel %vm101, %v1437, 0.0
    %1447 = vadd.xlane.f32.xlu0 %v1446
    %v1448 = vpop.xlane.xlu0 %1447
    %v1449 = vsel %vm101, %v1439, 0.0
    %1450 = vadd.xlane.f32.xlu0 %v1449
    %v1451 = vpop.xlane.xlu0 %1450
    %v1452 = vrcp.pop %v1442
    %v1453 = vrcp.pop %v1445
    %v1454 = vrcp.pop %v1448
    %v1455 = vrcp.pop %v1451
    %v1456 = vmul.f32 %v1433, %v1452
    %v1457 = vmul.f32 %v1435, %v1453
    %v1458 = vmul.f32 %v1437, %v1454
    %v1459 = vmul.f32 %v1439, %v1455
    %1460 = vrot.lane.b32.xlu0 %v1340, 64
    %v1461 = vpop.permute.xlu0 %1460
    %1462 = vrot.lane.b32.xlu0 %v1343, 64
    %v1463 = vpop.permute.xlu0 %1462
    %1464 = vrot.lane.b32.xlu0 %v1346, 64
    %v1465 = vpop.permute.xlu0 %1464
    %1466 = vrot.lane.b32.xlu0 %v1349, 64
    %v1467 = vpop.permute.xlu0 %1466
    %v1473 = vsel %vm101, %v1456, 0
    %v1476 = vsel %vm101, %v1457, 0
    %v1479 = vsel %vm101, %v1458, 0
    %v1482 = vsel %vm101, %v1459, 0
    %1484 = vmatpush.msra.mxu0 0.0
    %1485 = vmatpush.msra.mxu0 0.0
    %1486 = vmatpush.msra.mxu0 0.0
    %1487 = vmatpush.msra.mxu0 0.0
    %1488 = vmatpush.msra.mxu0 0.0
    %1489 = vmatpush.msra.mxu0 0.0
    %1490 = vmatpush.msra.mxu0 0.0
    %1491 = vmatpush.msra.mxu0 0.0
    %1492 = vmatpush.msra.mxu0 0.0
    %1493 = vmatpush.msra.mxu0 0.0
    %1494 = vmatpush.msra.mxu0 0.0
    %1495 = vmatpush.msra.mxu0 0.0
    %1496 = vmatpush.msra.mxu0 %v1467
    %1497 = vmatpush.msra.mxu0 %v1465
    %1498 = vmatpush.msra.mxu0 %v1463
    %1499 = vmatpush.msra.mxu0 %v1461
    %1500 = vmatmul.f32.gmra.mxu0 %v1473
    %v1501 = vpop.f32.mrf.mxu0
    %v1502 = vadd.f32 0.0, %v1501
    %1503 = vmatmul.f32.gmra.mxu0 %v1476
    %v1504 = vpop.f32.mrf.mxu0
    %v1505 = vadd.f32 0.0, %v1504
    %1506 = vmatmul.f32.gmra.mxu0 %v1479
    %v1507 = vpop.f32.mrf.mxu0
    %v1508 = vadd.f32 0.0, %v1507
    %1509 = vmatmul.f32.gmra.mxu0 %v1482
    %v1510 = vpop.f32.mrf.mxu0
    %v1511 = vadd.f32 0.0, %v1510
    %1512 = vdwg.mxu0
    %1513 = vrot.lane.b32.xlu0 %v1340, 120
    %v1514 = vpop.permute.xlu0 %1513
    %1515 = vrot.lane.b32.xlu0 %v1343, 120
    %v1516 = vpop.permute.xlu0 %1515
    %1517 = vrot.lane.b32.xlu0 %v1346, 120
    %v1518 = vpop.permute.xlu0 %1517
    %1519 = vrot.lane.b32.xlu0 %v1349, 120
    %v1520 = vpop.permute.xlu0 %1519
    %1521 = vrot.lane.b32.xlu0 %v1340, 88
    %v1522 = vpop.permute.xlu0 %1521
    %1523 = vrot.lane.b32.xlu0 %v1343, 88
    %v1524 = vpop.permute.xlu0 %1523
    %1525 = vrot.lane.b32.xlu0 %v1346, 88
    %v1526 = vpop.permute.xlu0 %1525
    %1527 = vrot.lane.b32.xlu0 %v1349, 88
    %v1528 = vpop.permute.xlu0 %1527
    %v1529 = vsel %vm155, %v1514, 0
    %v1531 = vsel %vm155, %v1516, 0
    %v1533 = vsel %vm155, %v1518, 0
    %v1535 = vsel %vm155, %v1520, 0
    %v1537 = vsel %vm155, %v1522, 0
    %v1539 = vsel %vm155, %v1524, 0
    %v1541 = vsel %vm155, %v1526, 0
    %v1543 = vsel %vm155, %v1528, 0
    %1545 = vmatpush.xpose.msra.mxu0 0.0
    %1546 = vmatpush.xpose.msra.mxu0 0.0
    %1547 = vmatpush.xpose.msra.mxu0 0.0
    %1548 = vmatpush.xpose.msra.mxu0 0.0
    %1549 = vmatpush.xpose.msra.mxu0 0.0
    %1550 = vmatpush.xpose.msra.mxu0 0.0
    %1551 = vmatpush.xpose.msra.mxu0 0.0
    %1552 = vmatpush.xpose.msra.mxu0 0.0
    %1553 = vmatpush.xpose.msra.mxu0 0.0
    %1554 = vmatpush.xpose.msra.mxu0 0.0
    %1555 = vmatpush.xpose.msra.mxu0 0.0
    %1556 = vmatpush.xpose.msra.mxu0 0.0
    %1557 = vmatpush.xpose.msra.mxu0 %v1543
    %1558 = vmatpush.xpose.msra.mxu0 %v1541
    %1559 = vmatpush.xpose.msra.mxu0 %v1539
    %1560 = vmatpush.xpose.msra.mxu0 %v1537
    %1561 = vmatmul.f32.gmra.mxu0 %v1529
    %v1562 = vpop.f32.mrf.mxu0
    %v1563 = vadd.f32 0.0, %v1562
    %1564 = vmatmul.f32.gmra.mxu0 %v1531
    %v1565 = vpop.f32.mrf.mxu0
    %v1566 = vadd.f32 0.0, %v1565
    %1567 = vmatmul.f32.gmra.mxu0 %v1533
    %v1568 = vpop.f32.mrf.mxu0
    %v1569 = vadd.f32 0.0, %v1568
    %1570 = vmatmul.f32.gmra.mxu0 %v1535
    %v1571 = vpop.f32.mrf.mxu0
    %v1572 = vadd.f32 0.0, %v1571
    %1573 = vdwg.mxu0
    %v1574 = vmul.f32 %v1563, 0.35355338
    %v1575 = vmul.f32 %v1566, 0.35355338
    %v1576 = vmul.f32 %v1569, 0.35355338
    %v1577 = vmul.f32 %v1572, 0.35355338
    %v1578 = vadd.f32 %v1574, %v30
    %v1579 = vadd.f32 %v1575, %v31
    %v1580 = vadd.f32 %v1576, %v32
    %v1581 = vadd.f32 %v1577, %v33
    %v1582 = vsel %vm101, %v1578, -inf
    %1583 = vmax.xlane.f32.xlu0 %v1582
    %v1584 = vpop.xlane.xlu0 %1583
    %v1585 = vsel %vm101, %v1579, -inf
    %1586 = vmax.xlane.f32.xlu0 %v1585
    %v1587 = vpop.xlane.xlu0 %1586
    %v1588 = vsel %vm101, %v1580, -inf
    %1589 = vmax.xlane.f32.xlu0 %v1588
    %v1590 = vpop.xlane.xlu0 %1589
    %v1591 = vsel %vm101, %v1581, -inf
    %1592 = vmax.xlane.f32.xlu0 %v1591
    %v1593 = vpop.xlane.xlu0 %1592
    %v1594 = vsub.f32 %v1578, %v1584
    %v1595 = vsub.f32 %v1579, %v1587
    %v1596 = vsub.f32 %v1580, %v1590
    %v1597 = vsub.f32 %v1581, %v1593
    %v1598 = vmul.f32 %v1594, 1.442695
    %v1599 = vpow.pop %v1598
    %v1600 = vmul.f32 %v1595, 1.442695
    %v1601 = vpow.pop %v1600
    %v1602 = vmul.f32 %v1596, 1.442695
    %v1603 = vpow.pop %v1602
    %v1604 = vmul.f32 %v1597, 1.442695
    %v1605 = vpow.pop %v1604
    %v1606 = vsel %vm101, %v1599, 0.0
    %1607 = vadd.xlane.f32.xlu0 %v1606
    %v1608 = vpop.xlane.xlu0 %1607
    %v1609 = vsel %vm101, %v1601, 0.0
    %1610 = vadd.xlane.f32.xlu0 %v1609
    %v1611 = vpop.xlane.xlu0 %1610
    %v1612 = vsel %vm101, %v1603, 0.0
    %1613 = vadd.xlane.f32.xlu0 %v1612
    %v1614 = vpop.xlane.xlu0 %1613
    %v1615 = vsel %vm101, %v1605, 0.0
    %1616 = vadd.xlane.f32.xlu0 %v1615
    %v1617 = vpop.xlane.xlu0 %1616
    %v1618 = vrcp.pop %v1608
    %v1619 = vrcp.pop %v1611
    %v1620 = vrcp.pop %v1614
    %v1621 = vrcp.pop %v1617
    %v1622 = vmul.f32 %v1599, %v1618
    %v1623 = vmul.f32 %v1601, %v1619
    %v1624 = vmul.f32 %v1603, %v1620
    %v1625 = vmul.f32 %v1605, %v1621
    %1626 = vrot.lane.b32.xlu0 %v1340, 56
    %v1627 = vpop.permute.xlu0 %1626
    %1628 = vrot.lane.b32.xlu0 %v1343, 56
    %v1629 = vpop.permute.xlu0 %1628
    %1630 = vrot.lane.b32.xlu0 %v1346, 56
    %v1631 = vpop.permute.xlu0 %1630
    %1632 = vrot.lane.b32.xlu0 %v1349, 56
    %v1633 = vpop.permute.xlu0 %1632
    %v1639 = vsel %vm101, %v1622, 0
    %v1642 = vsel %vm101, %v1623, 0
    %v1645 = vsel %vm101, %v1624, 0
    %v1648 = vsel %vm101, %v1625, 0
    %1650 = vmatpush.msra.mxu0 0.0
    %1651 = vmatpush.msra.mxu0 0.0
    %1652 = vmatpush.msra.mxu0 0.0
    %1653 = vmatpush.msra.mxu0 0.0
    %1654 = vmatpush.msra.mxu0 0.0
    %1655 = vmatpush.msra.mxu0 0.0
    %1656 = vmatpush.msra.mxu0 0.0
    %1657 = vmatpush.msra.mxu0 0.0
    %1658 = vmatpush.msra.mxu0 0.0
    %1659 = vmatpush.msra.mxu0 0.0
    %1660 = vmatpush.msra.mxu0 0.0
    %1661 = vmatpush.msra.mxu0 0.0
    %1662 = vmatpush.msra.mxu0 %v1633
    %1663 = vmatpush.msra.mxu0 %v1631
    %1664 = vmatpush.msra.mxu0 %v1629
    %1665 = vmatpush.msra.mxu0 %v1627
    %1666 = vmatmul.f32.gmra.mxu0 %v1639
    %v1667 = vpop.f32.mrf.mxu0
    %v1668 = vadd.f32 0.0, %v1667
    %1669 = vmatmul.f32.gmra.mxu0 %v1642
    %v1670 = vpop.f32.mrf.mxu0
    %v1671 = vadd.f32 0.0, %v1670
    %1672 = vmatmul.f32.gmra.mxu0 %v1645
    %v1673 = vpop.f32.mrf.mxu0
    %v1674 = vadd.f32 0.0, %v1673
    %1675 = vmatmul.f32.gmra.mxu0 %v1648
    %v1676 = vpop.f32.mrf.mxu0
    %v1677 = vadd.f32 0.0, %v1676
    %1678 = vdwg.mxu0
    %v1680 = vsel %vm155, %v1668, 0
    %v1683 = vsel %vm155, %v1671, 0
    %v1686 = vsel %vm155, %v1674, 0
    %v1689 = vsel %vm155, %v1677, 0
    %1691 = vmatpush.msra.mxu0 0.0
    %1692 = vmatpush.msra.mxu0 0.0
    %1693 = vmatpush.msra.mxu0 0.0
    %1694 = vmatpush.msra.mxu0 0.0
    %1695 = vmatpush.msra.mxu0 0.0
    %1696 = vmatpush.msra.mxu0 0.0
    %1697 = vmatpush.msra.mxu0 0.0
    %1698 = vmatpush.msra.mxu0 0.0
    %1699 = vmatpush.msra.mxu0 0.0
    %1700 = vmatpush.msra.mxu0 0.0
    %1701 = vmatpush.msra.mxu0 0.0
    %1702 = vmatpush.msra.mxu0 0.0
    %1703 = vmatpush.msra.mxu0 0.0
    %1704 = vmatpush.msra.mxu0 0.0
    %1705 = vmatpush.msra.mxu0 0.0
    %1706 = vmatpush.msra.mxu0 %v1305
    %1707 = vmatmul.f32.gmra.mxu0 %v1680
    %v1708 = vpop.f32.mrf.mxu0
    %v1709 = vadd.f32 0.0, %v1708
    %1710 = vmatmul.f32.gmra.mxu0 %v1683
    %v1711 = vpop.f32.mrf.mxu0
    %v1712 = vadd.f32 0.0, %v1711
    %1713 = vmatmul.f32.gmra.mxu0 %v1686
    %v1714 = vpop.f32.mrf.mxu0
    %v1715 = vadd.f32 0.0, %v1714
    %1716 = vmatmul.f32.gmra.mxu0 %v1689
    %v1717 = vpop.f32.mrf.mxu0
    %v1718 = vadd.f32 0.0, %v1717
    %1719 = vdwg.mxu0
    %v1721 = vsel %vm155, %v1502, 0
    %v1724 = vsel %vm155, %v1505, 0
    %v1727 = vsel %vm155, %v1508, 0
    %v1730 = vsel %vm155, %v1511, 0
    %1732 = vmatpush.msra.mxu0 0.0
    %1733 = vmatpush.msra.mxu0 0.0
    %1734 = vmatpush.msra.mxu0 0.0
    %1735 = vmatpush.msra.mxu0 0.0
    %1736 = vmatpush.msra.mxu0 0.0
    %1737 = vmatpush.msra.mxu0 0.0
    %1738 = vmatpush.msra.mxu0 0.0
    %1739 = vmatpush.msra.mxu0 0.0
    %1740 = vmatpush.msra.mxu0 0.0
    %1741 = vmatpush.msra.mxu0 0.0
    %1742 = vmatpush.msra.mxu0 0.0
    %1743 = vmatpush.msra.mxu0 0.0
    %1744 = vmatpush.msra.mxu0 0.0
    %1745 = vmatpush.msra.mxu0 0.0
    %1746 = vmatpush.msra.mxu0 0.0
    %1747 = vmatpush.msra.mxu0 %v1304
    %1748 = vmatmul.f32.gmra.mxu0 %v1721
    %v1749 = vpop.f32.mrf.mxu0
    %v1750 = vadd.f32 %v1709, %v1749
    %1751 = vmatmul.f32.gmra.mxu0 %v1724
    %v1752 = vpop.f32.mrf.mxu0
    %v1753 = vadd.f32 %v1712, %v1752
    %1754 = vmatmul.f32.gmra.mxu0 %v1727
    %v1755 = vpop.f32.mrf.mxu0
    %v1756 = vadd.f32 %v1715, %v1755
    %1757 = vmatmul.f32.gmra.mxu0 %v1730
    %v1758 = vpop.f32.mrf.mxu0
    %v1759 = vadd.f32 %v1718, %v1758
    %1760 = vdwg.mxu0
    %1761 = vrot.lane.b32.xlu0 %v1340, 112
    %v1762 = vpop.permute.xlu0 %1761
    %1763 = vrot.lane.b32.xlu0 %v1343, 112
    %v1764 = vpop.permute.xlu0 %1763
    %1765 = vrot.lane.b32.xlu0 %v1346, 112
    %v1766 = vpop.permute.xlu0 %1765
    %1767 = vrot.lane.b32.xlu0 %v1349, 112
    %v1768 = vpop.permute.xlu0 %1767
    %1769 = vrot.lane.b32.xlu0 %v1340, 80
    %v1770 = vpop.permute.xlu0 %1769
    %1771 = vrot.lane.b32.xlu0 %v1343, 80
    %v1772 = vpop.permute.xlu0 %1771
    %1773 = vrot.lane.b32.xlu0 %v1346, 80
    %v1774 = vpop.permute.xlu0 %1773
    %1775 = vrot.lane.b32.xlu0 %v1349, 80
    %v1776 = vpop.permute.xlu0 %1775
    %v1777 = vsel %vm155, %v1762, 0
    %v1779 = vsel %vm155, %v1764, 0
    %v1781 = vsel %vm155, %v1766, 0
    %v1783 = vsel %vm155, %v1768, 0
    %v1785 = vsel %vm155, %v1770, 0
    %v1787 = vsel %vm155, %v1772, 0
    %v1789 = vsel %vm155, %v1774, 0
    %v1791 = vsel %vm155, %v1776, 0
    %1793 = vmatpush.xpose.msra.mxu0 0.0
    %1794 = vmatpush.xpose.msra.mxu0 0.0
    %1795 = vmatpush.xpose.msra.mxu0 0.0
    %1796 = vmatpush.xpose.msra.mxu0 0.0
    %1797 = vmatpush.xpose.msra.mxu0 0.0
    %1798 = vmatpush.xpose.msra.mxu0 0.0
    %1799 = vmatpush.xpose.msra.mxu0 0.0
    %1800 = vmatpush.xpose.msra.mxu0 0.0
    %1801 = vmatpush.xpose.msra.mxu0 0.0
    %1802 = vmatpush.xpose.msra.mxu0 0.0
    %1803 = vmatpush.xpose.msra.mxu0 0.0
    %1804 = vmatpush.xpose.msra.mxu0 0.0
    %1805 = vmatpush.xpose.msra.mxu0 %v1791
    %1806 = vmatpush.xpose.msra.mxu0 %v1789
    %1807 = vmatpush.xpose.msra.mxu0 %v1787
    %1808 = vmatpush.xpose.msra.mxu0 %v1785
    %1809 = vmatmul.f32.gmra.mxu0 %v1777
    %v1810 = vpop.f32.mrf.mxu0
    %v1811 = vadd.f32 0.0, %v1810
    %1812 = vmatmul.f32.gmra.mxu0 %v1779
    %v1813 = vpop.f32.mrf.mxu0
    %v1814 = vadd.f32 0.0, %v1813
    %1815 = vmatmul.f32.gmra.mxu0 %v1781
    %v1816 = vpop.f32.mrf.mxu0
    %v1817 = vadd.f32 0.0, %v1816
    %1818 = vmatmul.f32.gmra.mxu0 %v1783
    %v1819 = vpop.f32.mrf.mxu0
    %v1820 = vadd.f32 0.0, %v1819
    %1821 = vdwg.mxu0
    %v1822 = vmul.f32 %v1811, 0.35355338
    %v1823 = vmul.f32 %v1814, 0.35355338
    %v1824 = vmul.f32 %v1817, 0.35355338
    %v1825 = vmul.f32 %v1820, 0.35355338
    %v1826 = vadd.f32 %v1822, %v30
    %v1827 = vadd.f32 %v1823, %v31
    %v1828 = vadd.f32 %v1824, %v32
    %v1829 = vadd.f32 %v1825, %v33
    %v1830 = vsel %vm101, %v1826, -inf
    %1831 = vmax.xlane.f32.xlu0 %v1830
    %v1832 = vpop.xlane.xlu0 %1831
    %v1833 = vsel %vm101, %v1827, -inf
    %1834 = vmax.xlane.f32.xlu0 %v1833
    %v1835 = vpop.xlane.xlu0 %1834
    %v1836 = vsel %vm101, %v1828, -inf
    %1837 = vmax.xlane.f32.xlu0 %v1836
    %v1838 = vpop.xlane.xlu0 %1837
    %v1839 = vsel %vm101, %v1829, -inf
    %1840 = vmax.xlane.f32.xlu0 %v1839
    %v1841 = vpop.xlane.xlu0 %1840
    %v1842 = vsub.f32 %v1826, %v1832
    %v1843 = vsub.f32 %v1827, %v1835
    %v1844 = vsub.f32 %v1828, %v1838
    %v1845 = vsub.f32 %v1829, %v1841
    %v1846 = vmul.f32 %v1842, 1.442695
    %v1847 = vpow.pop %v1846
    %v1848 = vmul.f32 %v1843, 1.442695
    %v1849 = vpow.pop %v1848
    %v1850 = vmul.f32 %v1844, 1.442695
    %v1851 = vpow.pop %v1850
    %v1852 = vmul.f32 %v1845, 1.442695
    %v1853 = vpow.pop %v1852
    %v1854 = vsel %vm101, %v1847, 0.0
    %1855 = vadd.xlane.f32.xlu0 %v1854
    %v1856 = vpop.xlane.xlu0 %1855
    %v1857 = vsel %vm101, %v1849, 0.0
    %1858 = vadd.xlane.f32.xlu0 %v1857
    %v1859 = vpop.xlane.xlu0 %1858
    %v1860 = vsel %vm101, %v1851, 0.0
    %1861 = vadd.xlane.f32.xlu0 %v1860
    %v1862 = vpop.xlane.xlu0 %1861
    %v1863 = vsel %vm101, %v1853, 0.0
    %1864 = vadd.xlane.f32.xlu0 %v1863
    %v1865 = vpop.xlane.xlu0 %1864
    %v1866 = vrcp.pop %v1856
    %v1867 = vrcp.pop %v1859
    %v1868 = vrcp.pop %v1862
    %v1869 = vrcp.pop %v1865
    %v1870 = vmul.f32 %v1847, %v1866
    %v1871 = vmul.f32 %v1849, %v1867
    %v1872 = vmul.f32 %v1851, %v1868
    %v1873 = vmul.f32 %v1853, %v1869
    %1874 = vrot.lane.b32.xlu0 %v1340, 48
    %v1875 = vpop.permute.xlu0 %1874
    %1876 = vrot.lane.b32.xlu0 %v1343, 48
    %v1877 = vpop.permute.xlu0 %1876
    %1878 = vrot.lane.b32.xlu0 %v1346, 48
    %v1879 = vpop.permute.xlu0 %1878
    %1880 = vrot.lane.b32.xlu0 %v1349, 48
    %v1881 = vpop.permute.xlu0 %1880
    %v1887 = vsel %vm101, %v1870, 0
    %v1890 = vsel %vm101, %v1871, 0
    %v1893 = vsel %vm101, %v1872, 0
    %v1896 = vsel %vm101, %v1873, 0
    %1898 = vmatpush.msra.mxu0 0.0
    %1899 = vmatpush.msra.mxu0 0.0
    %1900 = vmatpush.msra.mxu0 0.0
    %1901 = vmatpush.msra.mxu0 0.0
    %1902 = vmatpush.msra.mxu0 0.0
    %1903 = vmatpush.msra.mxu0 0.0
    %1904 = vmatpush.msra.mxu0 0.0
    %1905 = vmatpush.msra.mxu0 0.0
    %1906 = vmatpush.msra.mxu0 0.0
    %1907 = vmatpush.msra.mxu0 0.0
    %1908 = vmatpush.msra.mxu0 0.0
    %1909 = vmatpush.msra.mxu0 0.0
    %1910 = vmatpush.msra.mxu0 %v1881
    %1911 = vmatpush.msra.mxu0 %v1879
    %1912 = vmatpush.msra.mxu0 %v1877
    %1913 = vmatpush.msra.mxu0 %v1875
    %1914 = vmatmul.f32.gmra.mxu0 %v1887
    %v1915 = vpop.f32.mrf.mxu0
    %v1916 = vadd.f32 0.0, %v1915
    %1917 = vmatmul.f32.gmra.mxu0 %v1890
    %v1918 = vpop.f32.mrf.mxu0
    %v1919 = vadd.f32 0.0, %v1918
    %1920 = vmatmul.f32.gmra.mxu0 %v1893
    %v1921 = vpop.f32.mrf.mxu0
    %v1922 = vadd.f32 0.0, %v1921
    %1923 = vmatmul.f32.gmra.mxu0 %v1896
    %v1924 = vpop.f32.mrf.mxu0
    %v1925 = vadd.f32 0.0, %v1924
    %1926 = vdwg.mxu0
    %v1928 = vsel %vm155, %v1916, 0
    %v1931 = vsel %vm155, %v1919, 0
    %v1934 = vsel %vm155, %v1922, 0
    %v1937 = vsel %vm155, %v1925, 0
    %1939 = vmatpush.msra.mxu0 0.0
    %1940 = vmatpush.msra.mxu0 0.0
    %1941 = vmatpush.msra.mxu0 0.0
    %1942 = vmatpush.msra.mxu0 0.0
    %1943 = vmatpush.msra.mxu0 0.0
    %1944 = vmatpush.msra.mxu0 0.0
    %1945 = vmatpush.msra.mxu0 0.0
    %1946 = vmatpush.msra.mxu0 0.0
    %1947 = vmatpush.msra.mxu0 0.0
    %1948 = vmatpush.msra.mxu0 0.0
    %1949 = vmatpush.msra.mxu0 0.0
    %1950 = vmatpush.msra.mxu0 0.0
    %1951 = vmatpush.msra.mxu0 0.0
    %1952 = vmatpush.msra.mxu0 0.0
    %1953 = vmatpush.msra.mxu0 0.0
    %1954 = vmatpush.msra.mxu0 %v1306
    %1955 = vmatmul.f32.gmra.mxu0 %v1928
    %v1956 = vpop.f32.mrf.mxu0
    %v1957 = vadd.f32 0.0, %v1956
    %1958 = vmatmul.f32.gmra.mxu0 %v1931
    %v1959 = vpop.f32.mrf.mxu0
    %v1960 = vadd.f32 0.0, %v1959
    %1961 = vmatmul.f32.gmra.mxu0 %v1934
    %v1962 = vpop.f32.mrf.mxu0
    %v1963 = vadd.f32 0.0, %v1962
    %1964 = vmatmul.f32.gmra.mxu0 %v1937
    %v1965 = vpop.f32.mrf.mxu0
    %v1966 = vadd.f32 0.0, %v1965
    %1967 = vdwg.mxu0
    %v1968 = vadd.f32 %v1750, %v1957
    %v1969 = vadd.f32 %v1753, %v1960
    %v1970 = vadd.f32 %v1756, %v1963
    %v1971 = vadd.f32 %v1759, %v1966
    %1972 = vrot.lane.b32.xlu0 %v1340, 104
    %v1973 = vpop.permute.xlu0 %1972
    %1974 = vrot.lane.b32.xlu0 %v1343, 104
    %v1975 = vpop.permute.xlu0 %1974
    %1976 = vrot.lane.b32.xlu0 %v1346, 104
    %v1977 = vpop.permute.xlu0 %1976
    %1978 = vrot.lane.b32.xlu0 %v1349, 104
    %v1979 = vpop.permute.xlu0 %1978
    %1980 = vrot.lane.b32.xlu0 %v1340, 72
    %v1981 = vpop.permute.xlu0 %1980
    %1982 = vrot.lane.b32.xlu0 %v1343, 72
    %v1983 = vpop.permute.xlu0 %1982
    %1984 = vrot.lane.b32.xlu0 %v1346, 72
    %v1985 = vpop.permute.xlu0 %1984
    %1986 = vrot.lane.b32.xlu0 %v1349, 72
    %v1987 = vpop.permute.xlu0 %1986
    %v1988 = vsel %vm155, %v1973, 0
    %v1990 = vsel %vm155, %v1975, 0
    %v1992 = vsel %vm155, %v1977, 0
    %v1994 = vsel %vm155, %v1979, 0
    %v1996 = vsel %vm155, %v1981, 0
    %v1998 = vsel %vm155, %v1983, 0
    %v2000 = vsel %vm155, %v1985, 0
    %v2002 = vsel %vm155, %v1987, 0
    %2004 = vmatpush.xpose.msra.mxu0 0.0
    %2005 = vmatpush.xpose.msra.mxu0 0.0
    %2006 = vmatpush.xpose.msra.mxu0 0.0
    %2007 = vmatpush.xpose.msra.mxu0 0.0
    %2008 = vmatpush.xpose.msra.mxu0 0.0
    %2009 = vmatpush.xpose.msra.mxu0 0.0
    %2010 = vmatpush.xpose.msra.mxu0 0.0
    %2011 = vmatpush.xpose.msra.mxu0 0.0
    %2012 = vmatpush.xpose.msra.mxu0 0.0
    %2013 = vmatpush.xpose.msra.mxu0 0.0
    %2014 = vmatpush.xpose.msra.mxu0 0.0
    %2015 = vmatpush.xpose.msra.mxu0 0.0
    %2016 = vmatpush.xpose.msra.mxu0 %v2002
    %2017 = vmatpush.xpose.msra.mxu0 %v2000
    %2018 = vmatpush.xpose.msra.mxu0 %v1998
    %2019 = vmatpush.xpose.msra.mxu0 %v1996
    %2020 = vmatmul.f32.gmra.mxu0 %v1988
    %v2021 = vpop.f32.mrf.mxu0
    %v2022 = vadd.f32 0.0, %v2021
    %2023 = vmatmul.f32.gmra.mxu0 %v1990
    %v2024 = vpop.f32.mrf.mxu0
    %v2025 = vadd.f32 0.0, %v2024
    %2026 = vmatmul.f32.gmra.mxu0 %v1992
    %v2027 = vpop.f32.mrf.mxu0
    %v2028 = vadd.f32 0.0, %v2027
    %2029 = vmatmul.f32.gmra.mxu0 %v1994
    %v2030 = vpop.f32.mrf.mxu0
    %v2031 = vadd.f32 0.0, %v2030
    %2032 = vdwg.mxu0
    %v2033 = vmul.f32 %v2022, 0.35355338
    %v2034 = vmul.f32 %v2025, 0.35355338
    %v2035 = vmul.f32 %v2028, 0.35355338
    %v2036 = vmul.f32 %v2031, 0.35355338
    %v2037 = vadd.f32 %v2033, %v30
    %v2038 = vadd.f32 %v2034, %v31
    %v2039 = vadd.f32 %v2035, %v32
    %v2040 = vadd.f32 %v2036, %v33
    %v2041 = vsel %vm101, %v2037, -inf
    %2042 = vmax.xlane.f32.xlu0 %v2041
    %v2043 = vpop.xlane.xlu0 %2042
    %v2044 = vsel %vm101, %v2038, -inf
    %2045 = vmax.xlane.f32.xlu0 %v2044
    %v2046 = vpop.xlane.xlu0 %2045
    %v2047 = vsel %vm101, %v2039, -inf
    %2048 = vmax.xlane.f32.xlu0 %v2047
    %v2049 = vpop.xlane.xlu0 %2048
    %v2050 = vsel %vm101, %v2040, -inf
    %2051 = vmax.xlane.f32.xlu0 %v2050
    %v2052 = vpop.xlane.xlu0 %2051
    %v2053 = vsub.f32 %v2037, %v2043
    %v2054 = vsub.f32 %v2038, %v2046
    %v2055 = vsub.f32 %v2039, %v2049
    %v2056 = vsub.f32 %v2040, %v2052
    %v2057 = vmul.f32 %v2053, 1.442695
    %v2058 = vpow.pop %v2057
    %v2059 = vmul.f32 %v2054, 1.442695
    %v2060 = vpow.pop %v2059
    %v2061 = vmul.f32 %v2055, 1.442695
    %v2062 = vpow.pop %v2061
    %v2063 = vmul.f32 %v2056, 1.442695
    %v2064 = vpow.pop %v2063
    %v2065 = vsel %vm101, %v2058, 0.0
    %2066 = vadd.xlane.f32.xlu0 %v2065
    %v2067 = vpop.xlane.xlu0 %2066
    %v2068 = vsel %vm101, %v2060, 0.0
    %2069 = vadd.xlane.f32.xlu0 %v2068
    %v2070 = vpop.xlane.xlu0 %2069
    %v2071 = vsel %vm101, %v2062, 0.0
    %2072 = vadd.xlane.f32.xlu0 %v2071
    %v2073 = vpop.xlane.xlu0 %2072
    %v2074 = vsel %vm101, %v2064, 0.0
    %2075 = vadd.xlane.f32.xlu0 %v2074
    %v2076 = vpop.xlane.xlu0 %2075
    %v2077 = vrcp.pop %v2067
    %v2078 = vrcp.pop %v2070
    %v2079 = vrcp.pop %v2073
    %v2080 = vrcp.pop %v2076
    %v2081 = vmul.f32 %v2058, %v2077
    %v2082 = vmul.f32 %v2060, %v2078
    %v2083 = vmul.f32 %v2062, %v2079
    %v2084 = vmul.f32 %v2064, %v2080
    %2085 = vrot.lane.b32.xlu0 %v1340, 40
    %v2086 = vpop.permute.xlu0 %2085
    %2087 = vrot.lane.b32.xlu0 %v1343, 40
    %v2088 = vpop.permute.xlu0 %2087
    %2089 = vrot.lane.b32.xlu0 %v1346, 40
    %v2090 = vpop.permute.xlu0 %2089
    %2091 = vrot.lane.b32.xlu0 %v1349, 40
    %v2092 = vpop.permute.xlu0 %2091
    %v2098 = vsel %vm101, %v2081, 0
    %v2101 = vsel %vm101, %v2082, 0
    %v2104 = vsel %vm101, %v2083, 0
    %v2107 = vsel %vm101, %v2084, 0
    %2109 = vmatpush.msra.mxu0 0.0
    %2110 = vmatpush.msra.mxu0 0.0
    %2111 = vmatpush.msra.mxu0 0.0
    %2112 = vmatpush.msra.mxu0 0.0
    %2113 = vmatpush.msra.mxu0 0.0
    %2114 = vmatpush.msra.mxu0 0.0
    %2115 = vmatpush.msra.mxu0 0.0
    %2116 = vmatpush.msra.mxu0 0.0
    %2117 = vmatpush.msra.mxu0 0.0
    %2118 = vmatpush.msra.mxu0 0.0
    %2119 = vmatpush.msra.mxu0 0.0
    %2120 = vmatpush.msra.mxu0 0.0
    %2121 = vmatpush.msra.mxu0 %v2092
    %2122 = vmatpush.msra.mxu0 %v2090
    %2123 = vmatpush.msra.mxu0 %v2088
    %2124 = vmatpush.msra.mxu0 %v2086
    %2125 = vmatmul.f32.gmra.mxu0 %v2098
    %v2126 = vpop.f32.mrf.mxu0
    %v2127 = vadd.f32 0.0, %v2126
    %2128 = vmatmul.f32.gmra.mxu0 %v2101
    %v2129 = vpop.f32.mrf.mxu0
    %v2130 = vadd.f32 0.0, %v2129
    %2131 = vmatmul.f32.gmra.mxu0 %v2104
    %v2132 = vpop.f32.mrf.mxu0
    %v2133 = vadd.f32 0.0, %v2132
    %2134 = vmatmul.f32.gmra.mxu0 %v2107
    %v2135 = vpop.f32.mrf.mxu0
    %v2136 = vadd.f32 0.0, %v2135
    %2137 = vdwg.mxu0
    %v2139 = vsel %vm155, %v2127, 0
    %v2142 = vsel %vm155, %v2130, 0
    %v2145 = vsel %vm155, %v2133, 0
    %v2148 = vsel %vm155, %v2136, 0
    %2150 = vmatpush.msra.mxu0 0.0
    %2151 = vmatpush.msra.mxu0 0.0
    %2152 = vmatpush.msra.mxu0 0.0
    %2153 = vmatpush.msra.mxu0 0.0
    %2154 = vmatpush.msra.mxu0 0.0
    %2155 = vmatpush.msra.mxu0 0.0
    %2156 = vmatpush.msra.mxu0 0.0
    %2157 = vmatpush.msra.mxu0 0.0
    %2158 = vmatpush.msra.mxu0 0.0
    %2159 = vmatpush.msra.mxu0 0.0
    %2160 = vmatpush.msra.mxu0 0.0
    %2161 = vmatpush.msra.mxu0 0.0
    %2162 = vmatpush.msra.mxu0 0.0
    %2163 = vmatpush.msra.mxu0 0.0
    %2164 = vmatpush.msra.mxu0 0.0
    %2165 = vmatpush.msra.mxu0 %v1307
    %2166 = vmatmul.f32.gmra.mxu0 %v2139
    %v2167 = vpop.f32.mrf.mxu0
    %v2168 = vadd.f32 0.0, %v2167
    %2169 = vmatmul.f32.gmra.mxu0 %v2142
    %v2170 = vpop.f32.mrf.mxu0
    %v2171 = vadd.f32 0.0, %v2170
    %2172 = vmatmul.f32.gmra.mxu0 %v2145
    %v2173 = vpop.f32.mrf.mxu0
    %v2174 = vadd.f32 0.0, %v2173
    %2175 = vmatmul.f32.gmra.mxu0 %v2148
    %v2176 = vpop.f32.mrf.mxu0
    %v2177 = vadd.f32 0.0, %v2176
    %2178 = vdwg.mxu0
    %v2179 = vadd.f32 %v1968, %v2168
    %v2180 = vadd.f32 %v1969, %v2171
    %v2181 = vadd.f32 %v1970, %v2174
    %v2182 = vadd.f32 %v1971, %v2177
    %v2183 = vperm.slane %v1308, 0
    %v2184 = vadd.f32 %v2179, %v2183
    %v2185 = vadd.f32 %v2180, %v2183
    %v2186 = vadd.f32 %v2181, %v2183
    %v2187 = vadd.f32 %v2182, %v2183
    %v2188 = vadd.f32 %v1295, %v2184
    %v2189 = vadd.f32 %v1296, %v2185
    %v2190 = vadd.f32 %v1297, %v2186
    %v2191 = vadd.f32 %v1298, %v2187
    %v2192 = vld [vmem:[#allocation2 + $0x1d0] sm:$0x1]
    %v2193 = vld [vmem:[#allocation2 + $0x1d8] sm:$0x1]
    %v2194 = vsel %vm101, %v2188, 0.0
    %2195 = vadd.xlane.f32.xlu0 %v2194
    %v2196 = vpop.xlane.xlu0 %2195
    %v2197 = vsel %vm101, %v2189, 0.0
    %2198 = vadd.xlane.f32.xlu0 %v2197
    %v2199 = vpop.xlane.xlu0 %2198
    %v2200 = vsel %vm101, %v2190, 0.0
    %2201 = vadd.xlane.f32.xlu0 %v2200
    %v2202 = vpop.xlane.xlu0 %2201
    %v2203 = vsel %vm101, %v2191, 0.0
    %2204 = vadd.xlane.f32.xlu0 %v2203
    %v2205 = vpop.xlane.xlu0 %2204
    %v2206 = vmul.f32 %v2196, %v1005
    %v2207 = vmul.f32 %v2199, %v1005
    %v2208 = vmul.f32 %v2202, %v1005
    %v2209 = vmul.f32 %v2205, %v1005
    %v2210 = vsub.f32 %v2188, %v2206
    %v2211 = vsub.f32 %v2189, %v2207
    %v2212 = vsub.f32 %v2190, %v2208
    %v2213 = vsub.f32 %v2191, %v2209
    %v2214 = vmul.f32 %v2210, %v2210
    %v2215 = vmul.f32 %v2211, %v2211
    %v2216 = vmul.f32 %v2212, %v2212
    %v2217 = vmul.f32 %v2213, %v2213
    %v2218 = vsel %vm101, %v2214, 0.0
    %2219 = vadd.xlane.f32.xlu0 %v2218
    %v2220 = vpop.xlane.xlu0 %2219
    %v2221 = vsel %vm101, %v2215, 0.0
    %2222 = vadd.xlane.f32.xlu0 %v2221
    %v2223 = vpop.xlane.xlu0 %2222
    %v2224 = vsel %vm101, %v2216, 0.0
    %2225 = vadd.xlane.f32.xlu0 %v2224
    %v2226 = vpop.xlane.xlu0 %2225
    %v2227 = vsel %vm101, %v2217, 0.0
    %2228 = vadd.xlane.f32.xlu0 %v2227
    %v2229 = vpop.xlane.xlu0 %2228
    %v2230 = vmul.f32 %v2220, %v1005
    %v2231 = vmul.f32 %v2223, %v1005
    %v2232 = vmul.f32 %v2226, %v1005
    %v2233 = vmul.f32 %v2229, %v1005
    %v2234 = vadd.f32 %v2230, 1e-05
    %v2235 = vadd.f32 %v2231, 1e-05
    %v2236 = vadd.f32 %v2232, 1e-05
    %v2237 = vadd.f32 %v2233, 1e-05
    %v2238 = vrsqrt.pop %v2234
    %v2239 = vmul.f32 %v2238, %v2234
    %v2240 = vmul.f32 %v2239, %v2238
    %v2241 = vmul.f32 0.5, %v2240
    %v2242 = vsub.f32 1.5, %v2241
    %v2243 = vmul.f32 %v2238, %v2242
    %vm2244 = vweird.f32 %v2234
    %vm2245 = vweird.f32 %v2238
    %vm2246 = vmor %vm2244, %vm2245
    %v2247 = vsel %vm2246, %v2238, %v2243
    %v2248 = vrsqrt.pop %v2235
    %v2249 = vmul.f32 %v2248, %v2235
    %v2250 = vmul.f32 %v2249, %v2248
    %v2251 = vmul.f32 0.5, %v2250
    %v2252 = vsub.f32 1.5, %v2251
    %v2253 = vmul.f32 %v2248, %v2252
    %vm2254 = vweird.f32 %v2235
    %vm2255 = vweird.f32 %v2248
    %vm2256 = vmor %vm2254, %vm2255
    %v2257 = vsel %vm2256, %v2248, %v2253
    %v2258 = vrsqrt.pop %v2236
    %v2259 = vmul.f32 %v2258, %v2236
    %v2260 = vmul.f32 %v2259, %v2258
    %v2261 = vmul.f32 0.5, %v2260
    %v2262 = vsub.f32 1.5, %v2261
    %v2263 = vmul.f32 %v2258, %v2262
    %vm2264 = vweird.f32 %v2236
    %vm2265 = vweird.f32 %v2258
    %vm2266 = vmor %vm2264, %vm2265
    %v2267 = vsel %vm2266, %v2258, %v2263
    %v2268 = vrsqrt.pop %v2237
    %v2269 = vmul.f32 %v2268, %v2237
    %v2270 = vmul.f32 %v2269, %v2268
    %v2271 = vmul.f32 0.5, %v2270
    %v2272 = vsub.f32 1.5, %v2271
    %v2273 = vmul.f32 %v2268, %v2272
    %vm2274 = vweird.f32 %v2237
    %vm2275 = vweird.f32 %v2268
    %vm2276 = vmor %vm2274, %vm2275
    %v2277 = vsel %vm2276, %v2268, %v2273
    %v2278 = vmul.f32 %v2210, %v2247
    %v2279 = vmul.f32 %v2211, %v2257
    %v2280 = vmul.f32 %v2212, %v2267
    %v2281 = vmul.f32 %v2213, %v2277
    %v2282 = vperm.slane %v2192, 0
    %v2283 = vmul.f32 %v2278, %v2282
    %v2284 = vmul.f32 %v2279, %v2282
    %v2285 = vmul.f32 %v2280, %v2282
    %v2286 = vmul.f32 %v2281, %v2282
    %v2287 = vperm.slane %v2193, 0
    %v2288 = vadd.f32 %v2283, %v2287
    %v2289 = vadd.f32 %v2284, %v2287
    %v2290 = vadd.f32 %v2285, %v2287
    %v2291 = vadd.f32 %v2286, %v2287
    %v2292 = vld [vmem:[#allocation2 + $0x1e0] sm:$0xff]
    %v2293 = vld [vmem:[#allocation2 + $0x1e8] sm:$0xff]
    %v2294 = vld [vmem:[#allocation2 + $0x1f0] sm:$0xff]
    %v2295 = vld [vmem:[#allocation2 + $0x1f8] sm:$0xff]
    %v2296 = vld [vmem:[#allocation2 + $0x200] sm:$0x1]
    %v2297 = vperm.slane %v2296, 0
    %v2299 = vsel %vm101, %v2288, 0
    %v2302 = vsel %vm101, %v2289, 0
    %v2305 = vsel %vm101, %v2290, 0
    %v2308 = vsel %vm101, %v2291, 0
    %2310 = vmatpush.msra.mxu0 0.0
    %2311 = vmatpush.msra.mxu0 0.0
    %2312 = vmatpush.msra.mxu0 0.0
    %2313 = vmatpush.msra.mxu0 0.0
    %2314 = vmatpush.msra.mxu0 0.0
    %2315 = vmatpush.msra.mxu0 0.0
    %2316 = vmatpush.msra.mxu0 0.0
    %2317 = vmatpush.msra.mxu0 0.0
    %2318 = vmatpush.msra.mxu0 0.0
    %2319 = vmatpush.msra.mxu0 0.0
    %2320 = vmatpush.msra.mxu0 0.0
    %2321 = vmatpush.msra.mxu0 0.0
    %2322 = vmatpush.msra.mxu0 %v2295
    %2323 = vmatpush.msra.mxu0 %v2294
    %2324 = vmatpush.msra.mxu0 %v2293
    %2325 = vmatpush.msra.mxu0 %v2292
    %2326 = vmatmul.f32.gmra.mxu0 %v2299
    %v2327 = vpop.f32.mrf.mxu0
    %v2328 = vadd.f32 %v2297, %v2327
    %2329 = vmatmul.f32.gmra.mxu0 %v2302
    %v2330 = vpop.f32.mrf.mxu0
    %v2331 = vadd.f32 %v2297, %v2330
    %2332 = vmatmul.f32.gmra.mxu0 %v2305
    %v2333 = vpop.f32.mrf.mxu0
    %v2334 = vadd.f32 %v2297, %v2333
    %2335 = vmatmul.f32.gmra.mxu0 %v2308
    %v2336 = vpop.f32.mrf.mxu0
    %v2337 = vadd.f32 %v2297, %v2336
    %2338 = vdwg.mxu0
    %v2339 = vmax.f32 %v2328, 0.0
    %v2340 = vmax.f32 %v2331, 0.0
    %v2341 = vmax.f32 %v2334, 0.0
    %v2342 = vmax.f32 %v2337, 0.0
    %v2343 = vld [vmem:[#allocation2 + $0x208] sm:$0xff]
    %v2344 = vld [vmem:[#allocation2 + $0x210] sm:$0xff]
    %v2345 = vld [vmem:[#allocation2 + $0x218] sm:$0xff]
    %v2346 = vld [vmem:[#allocation2 + $0x220] sm:$0xff]
    %v2347 = vld [vmem:[#allocation2 + $0x228] sm:$0xff]
    %v2348 = vld [vmem:[#allocation2 + $0x230] sm:$0xff]
    %v2349 = vld [vmem:[#allocation2 + $0x238] sm:$0xff]
    %v2350 = vld [vmem:[#allocation2 + $0x240] sm:$0xff]
    %v2351 = vld [vmem:[#allocation2 + $0x248] sm:$0x1]
    %v2352 = vperm.slane %v2351, 0
    %v2354 = vsel %vm1153, %v2339, 0
    %v2357 = vsel %vm1153, %v2340, 0
    %v2360 = vsel %vm1153, %v2341, 0
    %v2363 = vsel %vm1153, %v2342, 0
    %2365 = vmatpush.msra.mxu0 0.0
    %2366 = vmatpush.msra.mxu0 0.0
    %2367 = vmatpush.msra.mxu0 0.0
    %2368 = vmatpush.msra.mxu0 0.0
    %2369 = vmatpush.msra.mxu0 0.0
    %2370 = vmatpush.msra.mxu0 0.0
    %2371 = vmatpush.msra.mxu0 0.0
    %2372 = vmatpush.msra.mxu0 0.0
    %2373 = vmatpush.msra.mxu0 %v2350
    %2374 = vmatpush.msra.mxu0 %v2349
    %2375 = vmatpush.msra.mxu0 %v2348
    %2376 = vmatpush.msra.mxu0 %v2347
    %2377 = vmatpush.msra.mxu0 %v2346
    %2378 = vmatpush.msra.mxu0 %v2345
    %2379 = vmatpush.msra.mxu0 %v2344
    %2380 = vmatpush.msra.mxu0 %v2343
    %2381 = vmatmul.f32.gmra.mxu0 %v2354
    %v2382 = vpop.f32.mrf.mxu0
    %v2383 = vadd.f32 %v2352, %v2382
    %2384 = vmatmul.f32.gmra.mxu0 %v2357
    %v2385 = vpop.f32.mrf.mxu0
    %v2386 = vadd.f32 %v2352, %v2385
    %2387 = vmatmul.f32.gmra.mxu0 %v2360
    %v2388 = vpop.f32.mrf.mxu0
    %v2389 = vadd.f32 %v2352, %v2388
    %2390 = vmatmul.f32.gmra.mxu0 %v2363
    %v2391 = vpop.f32.mrf.mxu0
    %v2392 = vadd.f32 %v2352, %v2391
    %2393 = vdwg.mxu0
    %v2394 = vadd.f32 %v2288, %v2383
    %v2395 = vadd.f32 %v2289, %v2386
    %v2396 = vadd.f32 %v2290, %v2389
    %v2397 = vadd.f32 %v2291, %v2392
    %v2398 = vld [vmem:[#allocation2 + $0x250] sm:$0x1]
    %v2399 = vld [vmem:[#allocation2 + $0x258] sm:$0x1]
    %v2400 = vsel %vm101, %v2394, 0.0
    %2401 = vadd.xlane.f32.xlu0 %v2400
    %v2402 = vpop.xlane.xlu0 %2401
    %v2403 = vsel %vm101, %v2395, 0.0
    %2404 = vadd.xlane.f32.xlu0 %v2403
    %v2405 = vpop.xlane.xlu0 %2404
    %v2406 = vsel %vm101, %v2396, 0.0
    %2407 = vadd.xlane.f32.xlu0 %v2406
    %v2408 = vpop.xlane.xlu0 %2407
    %v2409 = vsel %vm101, %v2397, 0.0
    %2410 = vadd.xlane.f32.xlu0 %v2409
    %v2411 = vpop.xlane.xlu0 %2410
    %v2412 = vmul.f32 %v2402, %v1005
    %v2413 = vmul.f32 %v2405, %v1005
    %v2414 = vmul.f32 %v2408, %v1005
    %v2415 = vmul.f32 %v2411, %v1005
    %v2416 = vsub.f32 %v2394, %v2412
    %v2417 = vsub.f32 %v2395, %v2413
    %v2418 = vsub.f32 %v2396, %v2414
    %v2419 = vsub.f32 %v2397, %v2415
    %v2420 = vmul.f32 %v2416, %v2416
    %v2421 = vmul.f32 %v2417, %v2417
    %v2422 = vmul.f32 %v2418, %v2418
    %v2423 = vmul.f32 %v2419, %v2419
    %v2424 = vsel %vm101, %v2420, 0.0
    %2425 = vadd.xlane.f32.xlu0 %v2424
    %v2426 = vpop.xlane.xlu0 %2425
    %v2427 = vsel %vm101, %v2421, 0.0
    %2428 = vadd.xlane.f32.xlu0 %v2427
    %v2429 = vpop.xlane.xlu0 %2428
    %v2430 = vsel %vm101, %v2422, 0.0
    %2431 = vadd.xlane.f32.xlu0 %v2430
    %v2432 = vpop.xlane.xlu0 %2431
    %v2433 = vsel %vm101, %v2423, 0.0
    %2434 = vadd.xlane.f32.xlu0 %v2433
    %v2435 = vpop.xlane.xlu0 %2434
    %v2436 = vmul.f32 %v2426, %v1005
    %v2437 = vmul.f32 %v2429, %v1005
    %v2438 = vmul.f32 %v2432, %v1005
    %v2439 = vmul.f32 %v2435, %v1005
    %v2440 = vadd.f32 %v2436, 1e-05
    %v2441 = vadd.f32 %v2437, 1e-05
    %v2442 = vadd.f32 %v2438, 1e-05
    %v2443 = vadd.f32 %v2439, 1e-05
    %v2444 = vrsqrt.pop %v2440
    %v2445 = vmul.f32 %v2444, %v2440
    %v2446 = vmul.f32 %v2445, %v2444
    %v2447 = vmul.f32 0.5, %v2446
    %v2448 = vsub.f32 1.5, %v2447
    %v2449 = vmul.f32 %v2444, %v2448
    %vm2450 = vweird.f32 %v2440
    %vm2451 = vweird.f32 %v2444
    %vm2452 = vmor %vm2450, %vm2451
    %v2453 = vsel %vm2452, %v2444, %v2449
    %v2454 = vrsqrt.pop %v2441
    %v2455 = vmul.f32 %v2454, %v2441
    %v2456 = vmul.f32 %v2455, %v2454
    %v2457 = vmul.f32 0.5, %v2456
    %v2458 = vsub.f32 1.5, %v2457
    %v2459 = vmul.f32 %v2454, %v2458
    %vm2460 = vweird.f32 %v2441
    %vm2461 = vweird.f32 %v2454
    %vm2462 = vmor %vm2460, %vm2461
    %v2463 = vsel %vm2462, %v2454, %v2459
    %v2464 = vrsqrt.pop %v2442
    %v2465 = vmul.f32 %v2464, %v2442
    %v2466 = vmul.f32 %v2465, %v2464
    %v2467 = vmul.f32 0.5, %v2466
    %v2468 = vsub.f32 1.5, %v2467
    %v2469 = vmul.f32 %v2464, %v2468
    %vm2470 = vweird.f32 %v2442
    %vm2471 = vweird.f32 %v2464
    %vm2472 = vmor %vm2470, %vm2471
    %v2473 = vsel %vm2472, %v2464, %v2469
    %v2474 = vrsqrt.pop %v2443
    %v2475 = vmul.f32 %v2474, %v2443
    %v2476 = vmul.f32 %v2475, %v2474
    %v2477 = vmul.f32 0.5, %v2476
    %v2478 = vsub.f32 1.5, %v2477
    %v2479 = vmul.f32 %v2474, %v2478
    %vm2480 = vweird.f32 %v2443
    %vm2481 = vweird.f32 %v2474
    %vm2482 = vmor %vm2480, %vm2481
    %v2483 = vsel %vm2482, %v2474, %v2479
    %v2484 = vmul.f32 %v2416, %v2453
    %v2485 = vmul.f32 %v2417, %v2463
    %v2486 = vmul.f32 %v2418, %v2473
    %v2487 = vmul.f32 %v2419, %v2483
    %v2488 = vperm.slane %v2398, 0
    %v2489 = vmul.f32 %v2484, %v2488
    %v2490 = vmul.f32 %v2485, %v2488
    %v2491 = vmul.f32 %v2486, %v2488
    %v2492 = vmul.f32 %v2487, %v2488
    %v2493 = vperm.slane %v2399, 0
    %v2494 = vadd.f32 %v2489, %v2493
    %v2495 = vadd.f32 %v2490, %v2493
    %v2496 = vadd.f32 %v2491, %v2493
    %v2497 = vadd.f32 %v2492, %v2493
    %v2498 = vld [vmem:[#allocation2 + $0x260] sm:$0x1]
    %v2499 = vld [vmem:[#allocation2 + $0x268] sm:$0x1]
    %v2500 = vsel %vm101, %v2494, 0.0
    %2501 = vadd.xlane.f32.xlu0 %v2500
    %v2502 = vpop.xlane.xlu0 %2501
    %v2503 = vsel %vm101, %v2495, 0.0
    %2504 = vadd.xlane.f32.xlu0 %v2503
    %v2505 = vpop.xlane.xlu0 %2504
    %v2506 = vsel %vm101, %v2496, 0.0
    %2507 = vadd.xlane.f32.xlu0 %v2506
    %v2508 = vpop.xlane.xlu0 %2507
    %v2509 = vsel %vm101, %v2497, 0.0
    %2510 = vadd.xlane.f32.xlu0 %v2509
    %v2511 = vpop.xlane.xlu0 %2510
    %v2512 = vmul.f32 %v2502, %v1005
    %v2513 = vmul.f32 %v2505, %v1005
    %v2514 = vmul.f32 %v2508, %v1005
    %v2515 = vmul.f32 %v2511, %v1005
    %v2516 = vsub.f32 %v2494, %v2512
    %v2517 = vsub.f32 %v2495, %v2513
    %v2518 = vsub.f32 %v2496, %v2514
    %v2519 = vsub.f32 %v2497, %v2515
    %v2520 = vmul.f32 %v2516, %v2516
    %v2521 = vmul.f32 %v2517, %v2517
    %v2522 = vmul.f32 %v2518, %v2518
    %v2523 = vmul.f32 %v2519, %v2519
    %v2524 = vsel %vm101, %v2520, 0.0
    %2525 = vadd.xlane.f32.xlu0 %v2524
    %v2526 = vpop.xlane.xlu0 %2525
    %v2527 = vsel %vm101, %v2521, 0.0
    %2528 = vadd.xlane.f32.xlu0 %v2527
    %v2529 = vpop.xlane.xlu0 %2528
    %v2530 = vsel %vm101, %v2522, 0.0
    %2531 = vadd.xlane.f32.xlu0 %v2530
    %v2532 = vpop.xlane.xlu0 %2531
    %v2533 = vsel %vm101, %v2523, 0.0
    %2534 = vadd.xlane.f32.xlu0 %v2533
    %v2535 = vpop.xlane.xlu0 %2534
    %v2536 = vmul.f32 %v2526, %v1005
    %v2537 = vmul.f32 %v2529, %v1005
    %v2538 = vmul.f32 %v2532, %v1005
    %v2539 = vmul.f32 %v2535, %v1005
    %v2540 = vadd.f32 %v2536, 1e-05
    %v2541 = vadd.f32 %v2537, 1e-05
    %v2542 = vadd.f32 %v2538, 1e-05
    %v2543 = vadd.f32 %v2539, 1e-05
    %v2544 = vrsqrt.pop %v2540
    %v2545 = vmul.f32 %v2544, %v2540
    %v2546 = vmul.f32 %v2545, %v2544
    %v2547 = vmul.f32 0.5, %v2546
    %v2548 = vsub.f32 1.5, %v2547
    %v2549 = vmul.f32 %v2544, %v2548
    %vm2550 = vweird.f32 %v2540
    %vm2551 = vweird.f32 %v2544
    %vm2552 = vmor %vm2550, %vm2551
    %v2553 = vsel %vm2552, %v2544, %v2549
    %v2554 = vrsqrt.pop %v2541
    %v2555 = vmul.f32 %v2554, %v2541
    %v2556 = vmul.f32 %v2555, %v2554
    %v2557 = vmul.f32 0.5, %v2556
    %v2558 = vsub.f32 1.5, %v2557
    %v2559 = vmul.f32 %v2554, %v2558
    %vm2560 = vweird.f32 %v2541
    %vm2561 = vweird.f32 %v2554
    %vm2562 = vmor %vm2560, %vm2561
    %v2563 = vsel %vm2562, %v2554, %v2559
    %v2564 = vrsqrt.pop %v2542
    %v2565 = vmul.f32 %v2564, %v2542
    %v2566 = vmul.f32 %v2565, %v2564
    %v2567 = vmul.f32 0.5, %v2566
    %v2568 = vsub.f32 1.5, %v2567
    %v2569 = vmul.f32 %v2564, %v2568
    %vm2570 = vweird.f32 %v2542
    %vm2571 = vweird.f32 %v2564
    %vm2572 = vmor %vm2570, %vm2571
    %v2573 = vsel %vm2572, %v2564, %v2569
    %v2574 = vrsqrt.pop %v2543
    %v2575 = vmul.f32 %v2574, %v2543
    %v2576 = vmul.f32 %v2575, %v2574
    %v2577 = vmul.f32 0.5, %v2576
    %v2578 = vsub.f32 1.5, %v2577
    %v2579 = vmul.f32 %v2574, %v2578
    %vm2580 = vweird.f32 %v2543
    %vm2581 = vweird.f32 %v2574
    %vm2582 = vmor %vm2580, %vm2581
    %v2583 = vsel %vm2582, %v2574, %v2579
    %v2584 = vmul.f32 %v2516, %v2553
    %v2585 = vmul.f32 %v2517, %v2563
    %v2586 = vmul.f32 %v2518, %v2573
    %v2587 = vmul.f32 %v2519, %v2583
    %v2588 = vperm.slane %v2498, 0
    %v2589 = vmul.f32 %v2584, %v2588
    %v2590 = vmul.f32 %v2585, %v2588
    %v2591 = vmul.f32 %v2586, %v2588
    %v2592 = vmul.f32 %v2587, %v2588
    %v2593 = vperm.slane %v2499, 0
    %v2594 = vadd.f32 %v2589, %v2593
    %v2595 = vadd.f32 %v2590, %v2593
    %v2596 = vadd.f32 %v2591, %v2593
    %v2597 = vadd.f32 %v2592, %v2593
    %v2598 = vld [vmem:[%s1] sm:$0xff]
    %v2599 = vld [vmem:[%s1 + $0x8] sm:$0xff]
    %v2600 = vld [vmem:[%s1 + $0x10] sm:$0xff]
    %v2601 = vld [vmem:[%s1 + $0x18] sm:$0xff]
    %v2602 = vld [vmem:[#allocation2 + $0x10] sm:$0xff]
    %v2603 = vld [vmem:[#allocation2 + $0x18] sm:$0xff]
    %v2604 = vld [vmem:[#allocation2 + $0x40] sm:$0xff]
    %v2605 = vld [vmem:[#allocation2 + $0x48] sm:$0xff]
    %v2606 = vld [vmem:[#allocation2 + $0x50] sm:$0xff]
    %v2607 = vld [vmem:[#allocation2 + $0x58] sm:$0xff]
    %v2609 = vsel %vm48, %v2598, 0
    %v2612 = vsel %vm48, %v2599, 0
    %v2615 = vsel %vm48, %v2600, 0
    %v2618 = vsel %vm48, %v2601, 0
    %2620 = vmatpush.msra.mxu0 0.0
    %2621 = vmatpush.msra.mxu0 0.0
    %2622 = vmatpush.msra.mxu0 0.0
    %2623 = vmatpush.msra.mxu0 0.0
    %2624 = vmatpush.msra.mxu0 0.0
    %2625 = vmatpush.msra.mxu0 0.0
    %2626 = vmatpush.msra.mxu0 0.0
    %2627 = vmatpush.msra.mxu0 0.0
    %2628 = vmatpush.msra.mxu0 0.0
    %2629 = vmatpush.msra.mxu0 0.0
    %2630 = vmatpush.msra.mxu0 0.0
    %2631 = vmatpush.msra.mxu0 0.0
    %2632 = vmatpush.msra.mxu0 0.0
    %2633 = vmatpush.msra.mxu0 0.0
    %2634 = vmatpush.msra.mxu0 %v2603
    %2635 = vmatpush.msra.mxu0 %v2602
    %2636 = vmatmul.f32.gmra.mxu0 %v2609
    %v2637 = vpop.f32.mrf.mxu0
    %v2638 = vadd.f32 %v2604, %v2637
    %2639 = vmatmul.f32.gmra.mxu0 %v2612
    %v2640 = vpop.f32.mrf.mxu0
    %v2641 = vadd.f32 %v2605, %v2640
    %2642 = vmatmul.f32.gmra.mxu0 %v2615
    %v2643 = vpop.f32.mrf.mxu0
    %v2644 = vadd.f32 %v2606, %v2643
    %2645 = vmatmul.f32.gmra.mxu0 %v2618
    %v2646 = vpop.f32.mrf.mxu0
    %v2647 = vadd.f32 %v2607, %v2646
    %2648 = vdwg.mxu0
    %v2649 = vld [vmem:[#allocation2 + $0x270] sm:$0xff]
    %v2650 = vld [vmem:[#allocation2 + $0x278] sm:$0xff]
    %v2651 = vld [vmem:[#allocation2 + $0x280] sm:$0xff]
    %v2652 = vld [vmem:[#allocation2 + $0x288] sm:$0xff]
    %v2653 = vld [vmem:[#allocation2 + $0x290] sm:$0x1]
    %v2654 = vld [vmem:[#allocation2 + $0x298] sm:$0xff]
    %v2655 = vld [vmem:[#allocation2 + $0x2a0] sm:$0xff]
    %v2656 = vld [vmem:[#allocation2 + $0x2a8] sm:$0xff]
    %v2657 = vld [vmem:[#allocation2 + $0x2b0] sm:$0xff]
    %v2658 = vld [vmem:[#allocation2 + $0x2b8] sm:$0x1]
    %v2659 = vperm.slane %v2653, 0
    %v2661 = vsel %vm101, %v2638, 0
    %v2664 = vsel %vm101, %v2641, 0
    %v2667 = vsel %vm101, %v2644, 0
    %v2670 = vsel %vm101, %v2647, 0
    %2672 = vmatpush.msra.mxu0 0.0
    %2673 = vmatpush.msra.mxu0 0.0
    %2674 = vmatpush.msra.mxu0 0.0
    %2675 = vmatpush.msra.mxu0 0.0
    %2676 = vmatpush.msra.mxu0 0.0
    %2677 = vmatpush.msra.mxu0 0.0
    %2678 = vmatpush.msra.mxu0 0.0
    %2679 = vmatpush.msra.mxu0 0.0
    %2680 = vmatpush.msra.mxu0 0.0
    %2681 = vmatpush.msra.mxu0 0.0
    %2682 = vmatpush.msra.mxu0 0.0
    %2683 = vmatpush.msra.mxu0 0.0
    %2684 = vmatpush.msra.mxu0 %v2652
    %2685 = vmatpush.msra.mxu0 %v2651
    %2686 = vmatpush.msra.mxu0 %v2650
    %2687 = vmatpush.msra.mxu0 %v2649
    %2688 = vmatmul.f32.gmra.mxu0 %v2661
    %v2689 = vpop.f32.mrf.mxu0
    %v2690 = vadd.f32 %v2659, %v2689
    %2691 = vmatmul.f32.gmra.mxu0 %v2664
    %v2692 = vpop.f32.mrf.mxu0
    %v2693 = vadd.f32 %v2659, %v2692
    %2694 = vmatmul.f32.gmra.mxu0 %v2667
    %v2695 = vpop.f32.mrf.mxu0
    %v2696 = vadd.f32 %v2659, %v2695
    %2697 = vmatmul.f32.gmra.mxu0 %v2670
    %v2698 = vpop.f32.mrf.mxu0
    %v2699 = vadd.f32 %v2659, %v2698
    %2700 = vdwg.mxu0
    %2705 = vrot.lane.b32.xlu0 %v2690, 96
    %v2706 = vpop.permute.xlu0 %2705
    %2707 = vrot.lane.b32.xlu0 %v2693, 96
    %v2708 = vpop.permute.xlu0 %2707
    %2709 = vrot.lane.b32.xlu0 %v2696, 96
    %v2710 = vpop.permute.xlu0 %2709
    %2711 = vrot.lane.b32.xlu0 %v2699, 96
    %v2712 = vpop.permute.xlu0 %2711
    %v2713 = vsel %vm155, %v2690, 0
    %v2715 = vsel %vm155, %v2693, 0
    %v2717 = vsel %vm155, %v2696, 0
    %v2719 = vsel %vm155, %v2699, 0
    %v2721 = vsel %vm155, %v2706, 0
    %v2723 = vsel %vm155, %v2708, 0
    %v2725 = vsel %vm155, %v2710, 0
    %v2727 = vsel %vm155, %v2712, 0
    %2729 = vmatpush.xpose.msra.mxu0 0.0
    %2730 = vmatpush.xpose.msra.mxu0 0.0
    %2731 = vmatpush.xpose.msra.mxu0 0.0
    %2732 = vmatpush.xpose.msra.mxu0 0.0
    %2733 = vmatpush.xpose.msra.mxu0 0.0
    %2734 = vmatpush.xpose.msra.mxu0 0.0
    %2735 = vmatpush.xpose.msra.mxu0 0.0
    %2736 = vmatpush.xpose.msra.mxu0 0.0
    %2737 = vmatpush.xpose.msra.mxu0 0.0
    %2738 = vmatpush.xpose.msra.mxu0 0.0
    %2739 = vmatpush.xpose.msra.mxu0 0.0
    %2740 = vmatpush.xpose.msra.mxu0 0.0
    %2741 = vmatpush.xpose.msra.mxu0 %v2727
    %2742 = vmatpush.xpose.msra.mxu0 %v2725
    %2743 = vmatpush.xpose.msra.mxu0 %v2723
    %2744 = vmatpush.xpose.msra.mxu0 %v2721
    %2745 = vmatmul.f32.gmra.mxu0 %v2713
    %v2746 = vpop.f32.mrf.mxu0
    %v2747 = vadd.f32 0.0, %v2746
    %2748 = vmatmul.f32.gmra.mxu0 %v2715
    %v2749 = vpop.f32.mrf.mxu0
    %v2750 = vadd.f32 0.0, %v2749
    %2751 = vmatmul.f32.gmra.mxu0 %v2717
    %v2752 = vpop.f32.mrf.mxu0
    %v2753 = vadd.f32 0.0, %v2752
    %2754 = vmatmul.f32.gmra.mxu0 %v2719
    %v2755 = vpop.f32.mrf.mxu0
    %v2756 = vadd.f32 0.0, %v2755
    %2757 = vdwg.mxu0
    %v2758 = vmul.f32 %v2747, 0.35355338
    %v2759 = vmul.f32 %v2750, 0.35355338
    %v2760 = vmul.f32 %v2753, 0.35355338
    %v2761 = vmul.f32 %v2756, 0.35355338
    %v2762 = vadd.f32 %v2758, %v34
    %v2763 = vadd.f32 %v2759, %v35
    %v2764 = vadd.f32 %v2760, %v36
    %v2765 = vadd.f32 %v2761, %v37
    %v2766 = vsel %vm101, %v2762, -inf
    %2767 = vmax.xlane.f32.xlu0 %v2766
    %v2768 = vpop.xlane.xlu0 %2767
    %v2769 = vsel %vm101, %v2763, -inf
    %2770 = vmax.xlane.f32.xlu0 %v2769
    %v2771 = vpop.xlane.xlu0 %2770
    %v2772 = vsel %vm101, %v2764, -inf
    %2773 = vmax.xlane.f32.xlu0 %v2772
    %v2774 = vpop.xlane.xlu0 %2773
    %v2775 = vsel %vm101, %v2765, -inf
    %2776 = vmax.xlane.f32.xlu0 %v2775
    %v2777 = vpop.xlane.xlu0 %2776
    %v2778 = vsub.f32 %v2762, %v2768
    %v2779 = vsub.f32 %v2763, %v2771
    %v2780 = vsub.f32 %v2764, %v2774
    %v2781 = vsub.f32 %v2765, %v2777
    %v2782 = vmul.f32 %v2778, 1.442695
    %v2783 = vpow.pop %v2782
    %v2784 = vmul.f32 %v2779, 1.442695
    %v2785 = vpow.pop %v2784
    %v2786 = vmul.f32 %v2780, 1.442695
    %v2787 = vpow.pop %v2786
    %v2788 = vmul.f32 %v2781, 1.442695
    %v2789 = vpow.pop %v2788
    %v2790 = vsel %vm101, %v2783, 0.0
    %2791 = vadd.xlane.f32.xlu0 %v2790
    %v2792 = vpop.xlane.xlu0 %2791
    %v2793 = vsel %vm101, %v2785, 0.0
    %2794 = vadd.xlane.f32.xlu0 %v2793
    %v2795 = vpop.xlane.xlu0 %2794
    %v2796 = vsel %vm101, %v2787, 0.0
    %2797 = vadd.xlane.f32.xlu0 %v2796
    %v2798 = vpop.xlane.xlu0 %2797
    %v2799 = vsel %vm101, %v2789, 0.0
    %2800 = vadd.xlane.f32.xlu0 %v2799
    %v2801 = vpop.xlane.xlu0 %2800
    %v2802 = vrcp.pop %v2792
    %v2803 = vrcp.pop %v2795
    %v2804 = vrcp.pop %v2798
    %v2805 = vrcp.pop %v2801
    %v2806 = vmul.f32 %v2783, %v2802
    %v2807 = vmul.f32 %v2785, %v2803
    %v2808 = vmul.f32 %v2787, %v2804
    %v2809 = vmul.f32 %v2789, %v2805
    %2810 = vrot.lane.b32.xlu0 %v2690, 64
    %v2811 = vpop.permute.xlu0 %2810
    %2812 = vrot.lane.b32.xlu0 %v2693, 64
    %v2813 = vpop.permute.xlu0 %2812
    %2814 = vrot.lane.b32.xlu0 %v2696, 64
    %v2815 = vpop.permute.xlu0 %2814
    %2816 = vrot.lane.b32.xlu0 %v2699, 64
    %v2817 = vpop.permute.xlu0 %2816
    %v2823 = vsel %vm101, %v2806, 0
    %v2826 = vsel %vm101, %v2807, 0
    %v2829 = vsel %vm101, %v2808, 0
    %v2832 = vsel %vm101, %v2809, 0
    %2834 = vmatpush.msra.mxu0 0.0
    %2835 = vmatpush.msra.mxu0 0.0
    %2836 = vmatpush.msra.mxu0 0.0
    %2837 = vmatpush.msra.mxu0 0.0
    %2838 = vmatpush.msra.mxu0 0.0
    %2839 = vmatpush.msra.mxu0 0.0
    %2840 = vmatpush.msra.mxu0 0.0
    %2841 = vmatpush.msra.mxu0 0.0
    %2842 = vmatpush.msra.mxu0 0.0
    %2843 = vmatpush.msra.mxu0 0.0
    %2844 = vmatpush.msra.mxu0 0.0
    %2845 = vmatpush.msra.mxu0 0.0
    %2846 = vmatpush.msra.mxu0 %v2817
    %2847 = vmatpush.msra.mxu0 %v2815
    %2848 = vmatpush.msra.mxu0 %v2813
    %2849 = vmatpush.msra.mxu0 %v2811
    %2850 = vmatmul.f32.gmra.mxu0 %v2823
    %v2851 = vpop.f32.mrf.mxu0
    %v2852 = vadd.f32 0.0, %v2851
    %2853 = vmatmul.f32.gmra.mxu0 %v2826
    %v2854 = vpop.f32.mrf.mxu0
    %v2855 = vadd.f32 0.0, %v2854
    %2856 = vmatmul.f32.gmra.mxu0 %v2829
    %v2857 = vpop.f32.mrf.mxu0
    %v2858 = vadd.f32 0.0, %v2857
    %2859 = vmatmul.f32.gmra.mxu0 %v2832
    %v2860 = vpop.f32.mrf.mxu0
    %v2861 = vadd.f32 0.0, %v2860
    %2862 = vdwg.mxu0
    %2863 = vrot.lane.b32.xlu0 %v2690, 120
    %v2864 = vpop.permute.xlu0 %2863
    %2865 = vrot.lane.b32.xlu0 %v2693, 120
    %v2866 = vpop.permute.xlu0 %2865
    %2867 = vrot.lane.b32.xlu0 %v2696, 120
    %v2868 = vpop.permute.xlu0 %2867
    %2869 = vrot.lane.b32.xlu0 %v2699, 120
    %v2870 = vpop.permute.xlu0 %2869
    %2871 = vrot.lane.b32.xlu0 %v2690, 88
    %v2872 = vpop.permute.xlu0 %2871
    %2873 = vrot.lane.b32.xlu0 %v2693, 88
    %v2874 = vpop.permute.xlu0 %2873
    %2875 = vrot.lane.b32.xlu0 %v2696, 88
    %v2876 = vpop.permute.xlu0 %2875
    %2877 = vrot.lane.b32.xlu0 %v2699, 88
    %v2878 = vpop.permute.xlu0 %2877
    %v2879 = vsel %vm155, %v2864, 0
    %v2881 = vsel %vm155, %v2866, 0
    %v2883 = vsel %vm155, %v2868, 0
    %v2885 = vsel %vm155, %v2870, 0
    %v2887 = vsel %vm155, %v2872, 0
    %v2889 = vsel %vm155, %v2874, 0
    %v2891 = vsel %vm155, %v2876, 0
    %v2893 = vsel %vm155, %v2878, 0
    %2895 = vmatpush.xpose.msra.mxu0 0.0
    %2896 = vmatpush.xpose.msra.mxu0 0.0
    %2897 = vmatpush.xpose.msra.mxu0 0.0
    %2898 = vmatpush.xpose.msra.mxu0 0.0
    %2899 = vmatpush.xpose.msra.mxu0 0.0
    %2900 = vmatpush.xpose.msra.mxu0 0.0
    %2901 = vmatpush.xpose.msra.mxu0 0.0
    %2902 = vmatpush.xpose.msra.mxu0 0.0
    %2903 = vmatpush.xpose.msra.mxu0 0.0
    %2904 = vmatpush.xpose.msra.mxu0 0.0
    %2905 = vmatpush.xpose.msra.mxu0 0.0
    %2906 = vmatpush.xpose.msra.mxu0 0.0
    %2907 = vmatpush.xpose.msra.mxu0 %v2893
    %2908 = vmatpush.xpose.msra.mxu0 %v2891
    %2909 = vmatpush.xpose.msra.mxu0 %v2889
    %2910 = vmatpush.xpose.msra.mxu0 %v2887
    %2911 = vmatmul.f32.gmra.mxu0 %v2879
    %v2912 = vpop.f32.mrf.mxu0
    %v2913 = vadd.f32 0.0, %v2912
    %2914 = vmatmul.f32.gmra.mxu0 %v2881
    %v2915 = vpop.f32.mrf.mxu0
    %v2916 = vadd.f32 0.0, %v2915
    %2917 = vmatmul.f32.gmra.mxu0 %v2883
    %v2918 = vpop.f32.mrf.mxu0
    %v2919 = vadd.f32 0.0, %v2918
    %2920 = vmatmul.f32.gmra.mxu0 %v2885
    %v2921 = vpop.f32.mrf.mxu0
    %v2922 = vadd.f32 0.0, %v2921
    %2923 = vdwg.mxu0
    %v2924 = vmul.f32 %v2913, 0.35355338
    %v2925 = vmul.f32 %v2916, 0.35355338
    %v2926 = vmul.f32 %v2919, 0.35355338
    %v2927 = vmul.f32 %v2922, 0.35355338
    %v2928 = vadd.f32 %v2924, %v34
    %v2929 = vadd.f32 %v2925, %v35
    %v2930 = vadd.f32 %v2926, %v36
    %v2931 = vadd.f32 %v2927, %v37
    %v2932 = vsel %vm101, %v2928, -inf
    %2933 = vmax.xlane.f32.xlu0 %v2932
    %v2934 = vpop.xlane.xlu0 %2933
    %v2935 = vsel %vm101, %v2929, -inf
    %2936 = vmax.xlane.f32.xlu0 %v2935
    %v2937 = vpop.xlane.xlu0 %2936
    %v2938 = vsel %vm101, %v2930, -inf
    %2939 = vmax.xlane.f32.xlu0 %v2938
    %v2940 = vpop.xlane.xlu0 %2939
    %v2941 = vsel %vm101, %v2931, -inf
    %2942 = vmax.xlane.f32.xlu0 %v2941
    %v2943 = vpop.xlane.xlu0 %2942
    %v2944 = vsub.f32 %v2928, %v2934
    %v2945 = vsub.f32 %v2929, %v2937
    %v2946 = vsub.f32 %v2930, %v2940
    %v2947 = vsub.f32 %v2931, %v2943
    %v2948 = vmul.f32 %v2944, 1.442695
    %v2949 = vpow.pop %v2948
    %v2950 = vmul.f32 %v2945, 1.442695
    %v2951 = vpow.pop %v2950
    %v2952 = vmul.f32 %v2946, 1.442695
    %v2953 = vpow.pop %v2952
    %v2954 = vmul.f32 %v2947, 1.442695
    %v2955 = vpow.pop %v2954
    %v2956 = vsel %vm101, %v2949, 0.0
    %2957 = vadd.xlane.f32.xlu0 %v2956
    %v2958 = vpop.xlane.xlu0 %2957
    %v2959 = vsel %vm101, %v2951, 0.0
    %2960 = vadd.xlane.f32.xlu0 %v2959
    %v2961 = vpop.xlane.xlu0 %2960
    %v2962 = vsel %vm101, %v2953, 0.0
    %2963 = vadd.xlane.f32.xlu0 %v2962
    %v2964 = vpop.xlane.xlu0 %2963
    %v2965 = vsel %vm101, %v2955, 0.0
    %2966 = vadd.xlane.f32.xlu0 %v2965
    %v2967 = vpop.xlane.xlu0 %2966
    %v2968 = vrcp.pop %v2958
    %v2969 = vrcp.pop %v2961
    %v2970 = vrcp.pop %v2964
    %v2971 = vrcp.pop %v2967
    %v2972 = vmul.f32 %v2949, %v2968
    %v2973 = vmul.f32 %v2951, %v2969
    %v2974 = vmul.f32 %v2953, %v2970
    %v2975 = vmul.f32 %v2955, %v2971
    %2976 = vrot.lane.b32.xlu0 %v2690, 56
    %v2977 = vpop.permute.xlu0 %2976
    %2978 = vrot.lane.b32.xlu0 %v2693, 56
    %v2979 = vpop.permute.xlu0 %2978
    %2980 = vrot.lane.b32.xlu0 %v2696, 56
    %v2981 = vpop.permute.xlu0 %2980
    %2982 = vrot.lane.b32.xlu0 %v2699, 56
    %v2983 = vpop.permute.xlu0 %2982
    %v2989 = vsel %vm101, %v2972, 0
    %v2992 = vsel %vm101, %v2973, 0
    %v2995 = vsel %vm101, %v2974, 0
    %v2998 = vsel %vm101, %v2975, 0
    %3000 = vmatpush.msra.mxu0 0.0
    %3001 = vmatpush.msra.mxu0 0.0
    %3002 = vmatpush.msra.mxu0 0.0
    %3003 = vmatpush.msra.mxu0 0.0
    %3004 = vmatpush.msra.mxu0 0.0
    %3005 = vmatpush.msra.mxu0 0.0
    %3006 = vmatpush.msra.mxu0 0.0
    %3007 = vmatpush.msra.mxu0 0.0
    %3008 = vmatpush.msra.mxu0 0.0
    %3009 = vmatpush.msra.mxu0 0.0
    %3010 = vmatpush.msra.mxu0 0.0
    %3011 = vmatpush.msra.mxu0 0.0
    %3012 = vmatpush.msra.mxu0 %v2983
    %3013 = vmatpush.msra.mxu0 %v2981
    %3014 = vmatpush.msra.mxu0 %v2979
    %3015 = vmatpush.msra.mxu0 %v2977
    %3016 = vmatmul.f32.gmra.mxu0 %v2989
    %v3017 = vpop.f32.mrf.mxu0
    %v3018 = vadd.f32 0.0, %v3017
    %3019 = vmatmul.f32.gmra.mxu0 %v2992
    %v3020 = vpop.f32.mrf.mxu0
    %v3021 = vadd.f32 0.0, %v3020
    %3022 = vmatmul.f32.gmra.mxu0 %v2995
    %v3023 = vpop.f32.mrf.mxu0
    %v3024 = vadd.f32 0.0, %v3023
    %3025 = vmatmul.f32.gmra.mxu0 %v2998
    %v3026 = vpop.f32.mrf.mxu0
    %v3027 = vadd.f32 0.0, %v3026
    %3028 = vdwg.mxu0
    %v3030 = vsel %vm155, %v3018, 0
    %v3033 = vsel %vm155, %v3021, 0
    %v3036 = vsel %vm155, %v3024, 0
    %v3039 = vsel %vm155, %v3027, 0
    %3041 = vmatpush.msra.mxu0 0.0
    %3042 = vmatpush.msra.mxu0 0.0
    %3043 = vmatpush.msra.mxu0 0.0
    %3044 = vmatpush.msra.mxu0 0.0
    %3045 = vmatpush.msra.mxu0 0.0
    %3046 = vmatpush.msra.mxu0 0.0
    %3047 = vmatpush.msra.mxu0 0.0
    %3048 = vmatpush.msra.mxu0 0.0
    %3049 = vmatpush.msra.mxu0 0.0
    %3050 = vmatpush.msra.mxu0 0.0
    %3051 = vmatpush.msra.mxu0 0.0
    %3052 = vmatpush.msra.mxu0 0.0
    %3053 = vmatpush.msra.mxu0 0.0
    %3054 = vmatpush.msra.mxu0 0.0
    %3055 = vmatpush.msra.mxu0 0.0
    %3056 = vmatpush.msra.mxu0 %v2655
    %3057 = vmatmul.f32.gmra.mxu0 %v3030
    %v3058 = vpop.f32.mrf.mxu0
    %v3059 = vadd.f32 0.0, %v3058
    %3060 = vmatmul.f32.gmra.mxu0 %v3033
    %v3061 = vpop.f32.mrf.mxu0
    %v3062 = vadd.f32 0.0, %v3061
    %3063 = vmatmul.f32.gmra.mxu0 %v3036
    %v3064 = vpop.f32.mrf.mxu0
    %v3065 = vadd.f32 0.0, %v3064
    %3066 = vmatmul.f32.gmra.mxu0 %v3039
    %v3067 = vpop.f32.mrf.mxu0
    %v3068 = vadd.f32 0.0, %v3067
    %3069 = vdwg.mxu0
    %v3071 = vsel %vm155, %v2852, 0
    %v3074 = vsel %vm155, %v2855, 0
    %v3077 = vsel %vm155, %v2858, 0
    %v3080 = vsel %vm155, %v2861, 0
    %3082 = vmatpush.msra.mxu0 0.0
    %3083 = vmatpush.msra.mxu0 0.0
    %3084 = vmatpush.msra.mxu0 0.0
    %3085 = vmatpush.msra.mxu0 0.0
    %3086 = vmatpush.msra.mxu0 0.0
    %3087 = vmatpush.msra.mxu0 0.0
    %3088 = vmatpush.msra.mxu0 0.0
    %3089 = vmatpush.msra.mxu0 0.0
    %3090 = vmatpush.msra.mxu0 0.0
    %3091 = vmatpush.msra.mxu0 0.0
    %3092 = vmatpush.msra.mxu0 0.0
    %3093 = vmatpush.msra.mxu0 0.0
    %3094 = vmatpush.msra.mxu0 0.0
    %3095 = vmatpush.msra.mxu0 0.0
    %3096 = vmatpush.msra.mxu0 0.0
    %3097 = vmatpush.msra.mxu0 %v2654
    %3098 = vmatmul.f32.gmra.mxu0 %v3071
    %v3099 = vpop.f32.mrf.mxu0
    %v3100 = vadd.f32 %v3059, %v3099
    %3101 = vmatmul.f32.gmra.mxu0 %v3074
    %v3102 = vpop.f32.mrf.mxu0
    %v3103 = vadd.f32 %v3062, %v3102
    %3104 = vmatmul.f32.gmra.mxu0 %v3077
    %v3105 = vpop.f32.mrf.mxu0
    %v3106 = vadd.f32 %v3065, %v3105
    %3107 = vmatmul.f32.gmra.mxu0 %v3080
    %v3108 = vpop.f32.mrf.mxu0
    %v3109 = vadd.f32 %v3068, %v3108
    %3110 = vdwg.mxu0
    %3111 = vrot.lane.b32.xlu0 %v2690, 112
    %v3112 = vpop.permute.xlu0 %3111
    %3113 = vrot.lane.b32.xlu0 %v2693, 112
    %v3114 = vpop.permute.xlu0 %3113
    %3115 = vrot.lane.b32.xlu0 %v2696, 112
    %v3116 = vpop.permute.xlu0 %3115
    %3117 = vrot.lane.b32.xlu0 %v2699, 112
    %v3118 = vpop.permute.xlu0 %3117
    %3119 = vrot.lane.b32.xlu0 %v2690, 80
    %v3120 = vpop.permute.xlu0 %3119
    %3121 = vrot.lane.b32.xlu0 %v2693, 80
    %v3122 = vpop.permute.xlu0 %3121
    %3123 = vrot.lane.b32.xlu0 %v2696, 80
    %v3124 = vpop.permute.xlu0 %3123
    %3125 = vrot.lane.b32.xlu0 %v2699, 80
    %v3126 = vpop.permute.xlu0 %3125
    %v3127 = vsel %vm155, %v3112, 0
    %v3129 = vsel %vm155, %v3114, 0
    %v3131 = vsel %vm155, %v3116, 0
    %v3133 = vsel %vm155, %v3118, 0
    %v3135 = vsel %vm155, %v3120, 0
    %v3137 = vsel %vm155, %v3122, 0
    %v3139 = vsel %vm155, %v3124, 0
    %v3141 = vsel %vm155, %v3126, 0
    %3143 = vmatpush.xpose.msra.mxu0 0.0
    %3144 = vmatpush.xpose.msra.mxu0 0.0
    %3145 = vmatpush.xpose.msra.mxu0 0.0
    %3146 = vmatpush.xpose.msra.mxu0 0.0
    %3147 = vmatpush.xpose.msra.mxu0 0.0
    %3148 = vmatpush.xpose.msra.mxu0 0.0
    %3149 = vmatpush.xpose.msra.mxu0 0.0
    %3150 = vmatpush.xpose.msra.mxu0 0.0
    %3151 = vmatpush.xpose.msra.mxu0 0.0
    %3152 = vmatpush.xpose.msra.mxu0 0.0
    %3153 = vmatpush.xpose.msra.mxu0 0.0
    %3154 = vmatpush.xpose.msra.mxu0 0.0
    %3155 = vmatpush.xpose.msra.mxu0 %v3141
    %3156 = vmatpush.xpose.msra.mxu0 %v3139
    %3157 = vmatpush.xpose.msra.mxu0 %v3137
    %3158 = vmatpush.xpose.msra.mxu0 %v3135
    %3159 = vmatmul.f32.gmra.mxu0 %v3127
    %v3160 = vpop.f32.mrf.mxu0
    %v3161 = vadd.f32 0.0, %v3160
    %3162 = vmatmul.f32.gmra.mxu0 %v3129
    %v3163 = vpop.f32.mrf.mxu0
    %v3164 = vadd.f32 0.0, %v3163
    %3165 = vmatmul.f32.gmra.mxu0 %v3131
    %v3166 = vpop.f32.mrf.mxu0
    %v3167 = vadd.f32 0.0, %v3166
    %3168 = vmatmul.f32.gmra.mxu0 %v3133
    %v3169 = vpop.f32.mrf.mxu0
    %v3170 = vadd.f32 0.0, %v3169
    %3171 = vdwg.mxu0
    %v3172 = vmul.f32 %v3161, 0.35355338
    %v3173 = vmul.f32 %v3164, 0.35355338
    %v3174 = vmul.f32 %v3167, 0.35355338
    %v3175 = vmul.f32 %v3170, 0.35355338
    %v3176 = vadd.f32 %v3172, %v34
    %v3177 = vadd.f32 %v3173, %v35
    %v3178 = vadd.f32 %v3174, %v36
    %v3179 = vadd.f32 %v3175, %v37
    %v3180 = vsel %vm101, %v3176, -inf
    %3181 = vmax.xlane.f32.xlu0 %v3180
    %v3182 = vpop.xlane.xlu0 %3181
    %v3183 = vsel %vm101, %v3177, -inf
    %3184 = vmax.xlane.f32.xlu0 %v3183
    %v3185 = vpop.xlane.xlu0 %3184
    %v3186 = vsel %vm101, %v3178, -inf
    %3187 = vmax.xlane.f32.xlu0 %v3186
    %v3188 = vpop.xlane.xlu0 %3187
    %v3189 = vsel %vm101, %v3179, -inf
    %3190 = vmax.xlane.f32.xlu0 %v3189
    %v3191 = vpop.xlane.xlu0 %3190
    %v3192 = vsub.f32 %v3176, %v3182
    %v3193 = vsub.f32 %v3177, %v3185
    %v3194 = vsub.f32 %v3178, %v3188
    %v3195 = vsub.f32 %v3179, %v3191
    %v3196 = vmul.f32 %v3192, 1.442695
    %v3197 = vpow.pop %v3196
    %v3198 = vmul.f32 %v3193, 1.442695
    %v3199 = vpow.pop %v3198
    %v3200 = vmul.f32 %v3194, 1.442695
    %v3201 = vpow.pop %v3200
    %v3202 = vmul.f32 %v3195, 1.442695
    %v3203 = vpow.pop %v3202
    %v3204 = vsel %vm101, %v3197, 0.0
    %3205 = vadd.xlane.f32.xlu0 %v3204
    %v3206 = vpop.xlane.xlu0 %3205
    %v3207 = vsel %vm101, %v3199, 0.0
    %3208 = vadd.xlane.f32.xlu0 %v3207
    %v3209 = vpop.xlane.xlu0 %3208
    %v3210 = vsel %vm101, %v3201, 0.0
    %3211 = vadd.xlane.f32.xlu0 %v3210
    %v3212 = vpop.xlane.xlu0 %3211
    %v3213 = vsel %vm101, %v3203, 0.0
    %3214 = vadd.xlane.f32.xlu0 %v3213
    %v3215 = vpop.xlane.xlu0 %3214
    %v3216 = vrcp.pop %v3206
    %v3217 = vrcp.pop %v3209
    %v3218 = vrcp.pop %v3212
    %v3219 = vrcp.pop %v3215
    %v3220 = vmul.f32 %v3197, %v3216
    %v3221 = vmul.f32 %v3199, %v3217
    %v3222 = vmul.f32 %v3201, %v3218
    %v3223 = vmul.f32 %v3203, %v3219
    %3224 = vrot.lane.b32.xlu0 %v2690, 48
    %v3225 = vpop.permute.xlu0 %3224
    %3226 = vrot.lane.b32.xlu0 %v2693, 48
    %v3227 = vpop.permute.xlu0 %3226
    %3228 = vrot.lane.b32.xlu0 %v2696, 48
    %v3229 = vpop.permute.xlu0 %3228
    %3230 = vrot.lane.b32.xlu0 %v2699, 48
    %v3231 = vpop.permute.xlu0 %3230
    %v3237 = vsel %vm101, %v3220, 0
    %v3240 = vsel %vm101, %v3221, 0
    %v3243 = vsel %vm101, %v3222, 0
    %v3246 = vsel %vm101, %v3223, 0
    %3248 = vmatpush.msra.mxu0 0.0
    %3249 = vmatpush.msra.mxu0 0.0
    %3250 = vmatpush.msra.mxu0 0.0
    %3251 = vmatpush.msra.mxu0 0.0
    %3252 = vmatpush.msra.mxu0 0.0
    %3253 = vmatpush.msra.mxu0 0.0
    %3254 = vmatpush.msra.mxu0 0.0
    %3255 = vmatpush.msra.mxu0 0.0
    %3256 = vmatpush.msra.mxu0 0.0
    %3257 = vmatpush.msra.mxu0 0.0
    %3258 = vmatpush.msra.mxu0 0.0
    %3259 = vmatpush.msra.mxu0 0.0
    %3260 = vmatpush.msra.mxu0 %v3231
    %3261 = vmatpush.msra.mxu0 %v3229
    %3262 = vmatpush.msra.mxu0 %v3227
    %3263 = vmatpush.msra.mxu0 %v3225
    %3264 = vmatmul.f32.gmra.mxu0 %v3237
    %v3265 = vpop.f32.mrf.mxu0
    %v3266 = vadd.f32 0.0, %v3265
    %3267 = vmatmul.f32.gmra.mxu0 %v3240
    %v3268 = vpop.f32.mrf.mxu0
    %v3269 = vadd.f32 0.0, %v3268
    %3270 = vmatmul.f32.gmra.mxu0 %v3243
    %v3271 = vpop.f32.mrf.mxu0
    %v3272 = vadd.f32 0.0, %v3271
    %3273 = vmatmul.f32.gmra.mxu0 %v3246
    %v3274 = vpop.f32.mrf.mxu0
    %v3275 = vadd.f32 0.0, %v3274
    %3276 = vdwg.mxu0
    %v3278 = vsel %vm155, %v3266, 0
    %v3281 = vsel %vm155, %v3269, 0
    %v3284 = vsel %vm155, %v3272, 0
    %v3287 = vsel %vm155, %v3275, 0
    %3289 = vmatpush.msra.mxu0 0.0
    %3290 = vmatpush.msra.mxu0 0.0
    %3291 = vmatpush.msra.mxu0 0.0
    %3292 = vmatpush.msra.mxu0 0.0
    %3293 = vmatpush.msra.mxu0 0.0
    %3294 = vmatpush.msra.mxu0 0.0
    %3295 = vmatpush.msra.mxu0 0.0
    %3296 = vmatpush.msra.mxu0 0.0
    %3297 = vmatpush.msra.mxu0 0.0
    %3298 = vmatpush.msra.mxu0 0.0
    %3299 = vmatpush.msra.mxu0 0.0
    %3300 = vmatpush.msra.mxu0 0.0
    %3301 = vmatpush.msra.mxu0 0.0
    %3302 = vmatpush.msra.mxu0 0.0
    %3303 = vmatpush.msra.mxu0 0.0
    %3304 = vmatpush.msra.mxu0 %v2656
    %3305 = vmatmul.f32.gmra.mxu0 %v3278
    %v3306 = vpop.f32.mrf.mxu0
    %v3307 = vadd.f32 0.0, %v3306
    %3308 = vmatmul.f32.gmra.mxu0 %v3281
    %v3309 = vpop.f32.mrf.mxu0
    %v3310 = vadd.f32 0.0, %v3309
    %3311 = vmatmul.f32.gmra.mxu0 %v3284
    %v3312 = vpop.f32.mrf.mxu0
    %v3313 = vadd.f32 0.0, %v3312
    %3314 = vmatmul.f32.gmra.mxu0 %v3287
    %v3315 = vpop.f32.mrf.mxu0
    %v3316 = vadd.f32 0.0, %v3315
    %3317 = vdwg.mxu0
    %v3318 = vadd.f32 %v3100, %v3307
    %v3319 = vadd.f32 %v3103, %v3310
    %v3320 = vadd.f32 %v3106, %v3313
    %v3321 = vadd.f32 %v3109, %v3316
    %3322 = vrot.lane.b32.xlu0 %v2690, 104
    %v3323 = vpop.permute.xlu0 %3322
    %3324 = vrot.lane.b32.xlu0 %v2693, 104
    %v3325 = vpop.permute.xlu0 %3324
    %3326 = vrot.lane.b32.xlu0 %v2696, 104
    %v3327 = vpop.permute.xlu0 %3326
    %3328 = vrot.lane.b32.xlu0 %v2699, 104
    %v3329 = vpop.permute.xlu0 %3328
    %3330 = vrot.lane.b32.xlu0 %v2690, 72
    %v3331 = vpop.permute.xlu0 %3330
    %3332 = vrot.lane.b32.xlu0 %v2693, 72
    %v3333 = vpop.permute.xlu0 %3332
    %3334 = vrot.lane.b32.xlu0 %v2696, 72
    %v3335 = vpop.permute.xlu0 %3334
    %3336 = vrot.lane.b32.xlu0 %v2699, 72
    %v3337 = vpop.permute.xlu0 %3336
    %v3338 = vsel %vm155, %v3323, 0
    %v3340 = vsel %vm155, %v3325, 0
    %v3342 = vsel %vm155, %v3327, 0
    %v3344 = vsel %vm155, %v3329, 0
    %v3346 = vsel %vm155, %v3331, 0
    %v3348 = vsel %vm155, %v3333, 0
    %v3350 = vsel %vm155, %v3335, 0
    %v3352 = vsel %vm155, %v3337, 0
    %3354 = vmatpush.xpose.msra.mxu0 0.0
    %3355 = vmatpush.xpose.msra.mxu0 0.0
    %3356 = vmatpush.xpose.msra.mxu0 0.0
    %3357 = vmatpush.xpose.msra.mxu0 0.0
    %3358 = vmatpush.xpose.msra.mxu0 0.0
    %3359 = vmatpush.xpose.msra.mxu0 0.0
    %3360 = vmatpush.xpose.msra.mxu0 0.0
    %3361 = vmatpush.xpose.msra.mxu0 0.0
    %3362 = vmatpush.xpose.msra.mxu0 0.0
    %3363 = vmatpush.xpose.msra.mxu0 0.0
    %3364 = vmatpush.xpose.msra.mxu0 0.0
    %3365 = vmatpush.xpose.msra.mxu0 0.0
    %3366 = vmatpush.xpose.msra.mxu0 %v3352
    %3367 = vmatpush.xpose.msra.mxu0 %v3350
    %3368 = vmatpush.xpose.msra.mxu0 %v3348
    %3369 = vmatpush.xpose.msra.mxu0 %v3346
    %3370 = vmatmul.f32.gmra.mxu0 %v3338
    %v3371 = vpop.f32.mrf.mxu0
    %v3372 = vadd.f32 0.0, %v3371
    %3373 = vmatmul.f32.gmra.mxu0 %v3340
    %v3374 = vpop.f32.mrf.mxu0
    %v3375 = vadd.f32 0.0, %v3374
    %3376 = vmatmul.f32.gmra.mxu0 %v3342
    %v3377 = vpop.f32.mrf.mxu0
    %v3378 = vadd.f32 0.0, %v3377
    %3379 = vmatmul.f32.gmra.mxu0 %v3344
    %v3380 = vpop.f32.mrf.mxu0
    %v3381 = vadd.f32 0.0, %v3380
    %3382 = vdwg.mxu0
    %v3383 = vmul.f32 %v3372, 0.35355338
    %v3384 = vmul.f32 %v3375, 0.35355338
    %v3385 = vmul.f32 %v3378, 0.35355338
    %v3386 = vmul.f32 %v3381, 0.35355338
    %v3387 = vadd.f32 %v3383, %v34
    %v3388 = vadd.f32 %v3384, %v35
    %v3389 = vadd.f32 %v3385, %v36
    %v3390 = vadd.f32 %v3386, %v37
    %v3391 = vsel %vm101, %v3387, -inf
    %3392 = vmax.xlane.f32.xlu0 %v3391
    %v3393 = vpop.xlane.xlu0 %3392
    %v3394 = vsel %vm101, %v3388, -inf
    %3395 = vmax.xlane.f32.xlu0 %v3394
    %v3396 = vpop.xlane.xlu0 %3395
    %v3397 = vsel %vm101, %v3389, -inf
    %3398 = vmax.xlane.f32.xlu0 %v3397
    %v3399 = vpop.xlane.xlu0 %3398
    %v3400 = vsel %vm101, %v3390, -inf
    %3401 = vmax.xlane.f32.xlu0 %v3400
    %v3402 = vpop.xlane.xlu0 %3401
    %v3403 = vsub.f32 %v3387, %v3393
    %v3404 = vsub.f32 %v3388, %v3396
    %v3405 = vsub.f32 %v3389, %v3399
    %v3406 = vsub.f32 %v3390, %v3402
    %v3407 = vmul.f32 %v3403, 1.442695
    %v3408 = vpow.pop %v3407
    %v3409 = vmul.f32 %v3404, 1.442695
    %v3410 = vpow.pop %v3409
    %v3411 = vmul.f32 %v3405, 1.442695
    %v3412 = vpow.pop %v3411
    %v3413 = vmul.f32 %v3406, 1.442695
    %v3414 = vpow.pop %v3413
    %v3415 = vsel %vm101, %v3408, 0.0
    %3416 = vadd.xlane.f32.xlu0 %v3415
    %v3417 = vpop.xlane.xlu0 %3416
    %v3418 = vsel %vm101, %v3410, 0.0
    %3419 = vadd.xlane.f32.xlu0 %v3418
    %v3420 = vpop.xlane.xlu0 %3419
    %v3421 = vsel %vm101, %v3412, 0.0
    %3422 = vadd.xlane.f32.xlu0 %v3421
    %v3423 = vpop.xlane.xlu0 %3422
    %v3424 = vsel %vm101, %v3414, 0.0
    %3425 = vadd.xlane.f32.xlu0 %v3424
    %v3426 = vpop.xlane.xlu0 %3425
    %v3427 = vrcp.pop %v3417
    %v3428 = vrcp.pop %v3420
    %v3429 = vrcp.pop %v3423
    %v3430 = vrcp.pop %v3426
    %v3431 = vmul.f32 %v3408, %v3427
    %v3432 = vmul.f32 %v3410, %v3428
    %v3433 = vmul.f32 %v3412, %v3429
    %v3434 = vmul.f32 %v3414, %v3430
    %3435 = vrot.lane.b32.xlu0 %v2690, 40
    %v3436 = vpop.permute.xlu0 %3435
    %3437 = vrot.lane.b32.xlu0 %v2693, 40
    %v3438 = vpop.permute.xlu0 %3437
    %3439 = vrot.lane.b32.xlu0 %v2696, 40
    %v3440 = vpop.permute.xlu0 %3439
    %3441 = vrot.lane.b32.xlu0 %v2699, 40
    %v3442 = vpop.permute.xlu0 %3441
    %v3448 = vsel %vm101, %v3431, 0
    %v3451 = vsel %vm101, %v3432, 0
    %v3454 = vsel %vm101, %v3433, 0
    %v3457 = vsel %vm101, %v3434, 0
    %3459 = vmatpush.msra.mxu0 0.0
    %3460 = vmatpush.msra.mxu0 0.0
    %3461 = vmatpush.msra.mxu0 0.0
    %3462 = vmatpush.msra.mxu0 0.0
    %3463 = vmatpush.msra.mxu0 0.0
    %3464 = vmatpush.msra.mxu0 0.0
    %3465 = vmatpush.msra.mxu0 0.0
    %3466 = vmatpush.msra.mxu0 0.0
    %3467 = vmatpush.msra.mxu0 0.0
    %3468 = vmatpush.msra.mxu0 0.0
    %3469 = vmatpush.msra.mxu0 0.0
    %3470 = vmatpush.msra.mxu0 0.0
    %3471 = vmatpush.msra.mxu0 %v3442
    %3472 = vmatpush.msra.mxu0 %v3440
    %3473 = vmatpush.msra.mxu0 %v3438
    %3474 = vmatpush.msra.mxu0 %v3436
    %3475 = vmatmul.f32.gmra.mxu0 %v3448
    %v3476 = vpop.f32.mrf.mxu0
    %v3477 = vadd.f32 0.0, %v3476
    %3478 = vmatmul.f32.gmra.mxu0 %v3451
    %v3479 = vpop.f32.mrf.mxu0
    %v3480 = vadd.f32 0.0, %v3479
    %3481 = vmatmul.f32.gmra.mxu0 %v3454
    %v3482 = vpop.f32.mrf.mxu0
    %v3483 = vadd.f32 0.0, %v3482
    %3484 = vmatmul.f32.gmra.mxu0 %v3457
    %v3485 = vpop.f32.mrf.mxu0
    %v3486 = vadd.f32 0.0, %v3485
    %3487 = vdwg.mxu0
    %v3489 = vsel %vm155, %v3477, 0
    %v3492 = vsel %vm155, %v3480, 0
    %v3495 = vsel %vm155, %v3483, 0
    %v3498 = vsel %vm155, %v3486, 0
    %3500 = vmatpush.msra.mxu0 0.0
    %3501 = vmatpush.msra.mxu0 0.0
    %3502 = vmatpush.msra.mxu0 0.0
    %3503 = vmatpush.msra.mxu0 0.0
    %3504 = vmatpush.msra.mxu0 0.0
    %3505 = vmatpush.msra.mxu0 0.0
    %3506 = vmatpush.msra.mxu0 0.0
    %3507 = vmatpush.msra.mxu0 0.0
    %3508 = vmatpush.msra.mxu0 0.0
    %3509 = vmatpush.msra.mxu0 0.0
    %3510 = vmatpush.msra.mxu0 0.0
    %3511 = vmatpush.msra.mxu0 0.0
    %3512 = vmatpush.msra.mxu0 0.0
    %3513 = vmatpush.msra.mxu0 0.0
    %3514 = vmatpush.msra.mxu0 0.0
    %3515 = vmatpush.msra.mxu0 %v2657
    %3516 = vmatmul.f32.gmra.mxu0 %v3489
    %v3517 = vpop.f32.mrf.mxu0
    %v3518 = vadd.f32 0.0, %v3517
    %3519 = vmatmul.f32.gmra.mxu0 %v3492
    %v3520 = vpop.f32.mrf.mxu0
    %v3521 = vadd.f32 0.0, %v3520
    %3522 = vmatmul.f32.gmra.mxu0 %v3495
    %v3523 = vpop.f32.mrf.mxu0
    %v3524 = vadd.f32 0.0, %v3523
    %3525 = vmatmul.f32.gmra.mxu0 %v3498
    %v3526 = vpop.f32.mrf.mxu0
    %v3527 = vadd.f32 0.0, %v3526
    %3528 = vdwg.mxu0
    %v3529 = vadd.f32 %v3318, %v3518
    %v3530 = vadd.f32 %v3319, %v3521
    %v3531 = vadd.f32 %v3320, %v3524
    %v3532 = vadd.f32 %v3321, %v3527
    %v3533 = vperm.slane %v2658, 0
    %v3534 = vadd.f32 %v3529, %v3533
    %v3535 = vadd.f32 %v3530, %v3533
    %v3536 = vadd.f32 %v3531, %v3533
    %v3537 = vadd.f32 %v3532, %v3533
    %v3538 = vadd.f32 %v2638, %v3534
    %v3539 = vadd.f32 %v2641, %v3535
    %v3540 = vadd.f32 %v2644, %v3536
    %v3541 = vadd.f32 %v2647, %v3537
    %v3542 = vld [vmem:[#allocation2 + $0x310] sm:$0x1]
    %v3543 = vld [vmem:[#allocation2 + $0x318] sm:$0x1]
    %v3544 = vsel %vm101, %v3538, 0.0
    %3545 = vadd.xlane.f32.xlu0 %v3544
    %v3546 = vpop.xlane.xlu0 %3545
    %v3547 = vsel %vm101, %v3539, 0.0
    %3548 = vadd.xlane.f32.xlu0 %v3547
    %v3549 = vpop.xlane.xlu0 %3548
    %v3550 = vsel %vm101, %v3540, 0.0
    %3551 = vadd.xlane.f32.xlu0 %v3550
    %v3552 = vpop.xlane.xlu0 %3551
    %v3553 = vsel %vm101, %v3541, 0.0
    %3554 = vadd.xlane.f32.xlu0 %v3553
    %v3555 = vpop.xlane.xlu0 %3554
    %v3556 = vmul.f32 %v3546, %v1005
    %v3557 = vmul.f32 %v3549, %v1005
    %v3558 = vmul.f32 %v3552, %v1005
    %v3559 = vmul.f32 %v3555, %v1005
    %v3560 = vsub.f32 %v3538, %v3556
    %v3561 = vsub.f32 %v3539, %v3557
    %v3562 = vsub.f32 %v3540, %v3558
    %v3563 = vsub.f32 %v3541, %v3559
    %v3564 = vmul.f32 %v3560, %v3560
    %v3565 = vmul.f32 %v3561, %v3561
    %v3566 = vmul.f32 %v3562, %v3562
    %v3567 = vmul.f32 %v3563, %v3563
    %v3568 = vsel %vm101, %v3564, 0.0
    %3569 = vadd.xlane.f32.xlu0 %v3568
    %v3570 = vpop.xlane.xlu0 %3569
    %v3571 = vsel %vm101, %v3565, 0.0
    %3572 = vadd.xlane.f32.xlu0 %v3571
    %v3573 = vpop.xlane.xlu0 %3572
    %v3574 = vsel %vm101, %v3566, 0.0
    %3575 = vadd.xlane.f32.xlu0 %v3574
    %v3576 = vpop.xlane.xlu0 %3575
    %v3577 = vsel %vm101, %v3567, 0.0
    %3578 = vadd.xlane.f32.xlu0 %v3577
    %v3579 = vpop.xlane.xlu0 %3578
    %v3580 = vmul.f32 %v3570, %v1005
    %v3581 = vmul.f32 %v3573, %v1005
    %v3582 = vmul.f32 %v3576, %v1005
    %v3583 = vmul.f32 %v3579, %v1005
    %v3584 = vadd.f32 %v3580, 1e-05
    %v3585 = vadd.f32 %v3581, 1e-05
    %v3586 = vadd.f32 %v3582, 1e-05
    %v3587 = vadd.f32 %v3583, 1e-05
    %v3588 = vrsqrt.pop %v3584
    %v3589 = vmul.f32 %v3588, %v3584
    %v3590 = vmul.f32 %v3589, %v3588
    %v3591 = vmul.f32 0.5, %v3590
    %v3592 = vsub.f32 1.5, %v3591
    %v3593 = vmul.f32 %v3588, %v3592
    %vm3594 = vweird.f32 %v3584
    %vm3595 = vweird.f32 %v3588
    %vm3596 = vmor %vm3594, %vm3595
    %v3597 = vsel %vm3596, %v3588, %v3593
    %v3598 = vrsqrt.pop %v3585
    %v3599 = vmul.f32 %v3598, %v3585
    %v3600 = vmul.f32 %v3599, %v3598
    %v3601 = vmul.f32 0.5, %v3600
    %v3602 = vsub.f32 1.5, %v3601
    %v3603 = vmul.f32 %v3598, %v3602
    %vm3604 = vweird.f32 %v3585
    %vm3605 = vweird.f32 %v3598
    %vm3606 = vmor %vm3604, %vm3605
    %v3607 = vsel %vm3606, %v3598, %v3603
    %v3608 = vrsqrt.pop %v3586
    %v3609 = vmul.f32 %v3608, %v3586
    %v3610 = vmul.f32 %v3609, %v3608
    %v3611 = vmul.f32 0.5, %v3610
    %v3612 = vsub.f32 1.5, %v3611
    %v3613 = vmul.f32 %v3608, %v3612
    %vm3614 = vweird.f32 %v3586
    %vm3615 = vweird.f32 %v3608
    %vm3616 = vmor %vm3614, %vm3615
    %v3617 = vsel %vm3616, %v3608, %v3613
    %v3618 = vrsqrt.pop %v3587
    %v3619 = vmul.f32 %v3618, %v3587
    %v3620 = vmul.f32 %v3619, %v3618
    %v3621 = vmul.f32 0.5, %v3620
    %v3622 = vsub.f32 1.5, %v3621
    %v3623 = vmul.f32 %v3618, %v3622
    %vm3624 = vweird.f32 %v3587
    %vm3625 = vweird.f32 %v3618
    %vm3626 = vmor %vm3624, %vm3625
    %v3627 = vsel %vm3626, %v3618, %v3623
    %v3628 = vmul.f32 %v3560, %v3597
    %v3629 = vmul.f32 %v3561, %v3607
    %v3630 = vmul.f32 %v3562, %v3617
    %v3631 = vmul.f32 %v3563, %v3627
    %v3632 = vperm.slane %v3542, 0
    %v3633 = vmul.f32 %v3628, %v3632
    %v3634 = vmul.f32 %v3629, %v3632
    %v3635 = vmul.f32 %v3630, %v3632
    %v3636 = vmul.f32 %v3631, %v3632
    %v3637 = vperm.slane %v3543, 0
    %v3638 = vadd.f32 %v3633, %v3637
    %v3639 = vadd.f32 %v3634, %v3637
    %v3640 = vadd.f32 %v3635, %v3637
    %v3641 = vadd.f32 %v3636, %v3637
    %v3642 = vld [vmem:[#allocation2 + $0x2c0] sm:$0xff]
    %v3643 = vld [vmem:[#allocation2 + $0x2c8] sm:$0xff]
    %v3644 = vld [vmem:[#allocation2 + $0x2d0] sm:$0xff]
    %v3645 = vld [vmem:[#allocation2 + $0x2d8] sm:$0xff]
    %v3646 = vld [vmem:[#allocation2 + $0x2e0] sm:$0x1]
    %v3647 = vld [vmem:[#allocation2 + $0x2e8] sm:$0xff]
    %v3648 = vld [vmem:[#allocation2 + $0x2f0] sm:$0xff]
    %v3649 = vld [vmem:[#allocation2 + $0x2f8] sm:$0xff]
    %v3650 = vld [vmem:[#allocation2 + $0x300] sm:$0xff]
    %v3651 = vld [vmem:[#allocation2 + $0x308] sm:$0x1]
    %v3652 = vperm.slane %v3646, 0
    %v3654 = vsel %vm101, %v3638, 0
    %v3657 = vsel %vm101, %v3639, 0
    %v3660 = vsel %vm101, %v3640, 0
    %v3663 = vsel %vm101, %v3641, 0
    %3665 = vmatpush.msra.mxu0 0.0
    %3666 = vmatpush.msra.mxu0 0.0
    %3667 = vmatpush.msra.mxu0 0.0
    %3668 = vmatpush.msra.mxu0 0.0
    %3669 = vmatpush.msra.mxu0 0.0
    %3670 = vmatpush.msra.mxu0 0.0
    %3671 = vmatpush.msra.mxu0 0.0
    %3672 = vmatpush.msra.mxu0 0.0
    %3673 = vmatpush.msra.mxu0 0.0
    %3674 = vmatpush.msra.mxu0 0.0
    %3675 = vmatpush.msra.mxu0 0.0
    %3676 = vmatpush.msra.mxu0 0.0
    %3677 = vmatpush.msra.mxu0 %v3645
    %3678 = vmatpush.msra.mxu0 %v3644
    %3679 = vmatpush.msra.mxu0 %v3643
    %3680 = vmatpush.msra.mxu0 %v3642
    %3681 = vmatmul.f32.gmra.mxu0 %v3654
    %v3682 = vpop.f32.mrf.mxu0
    %v3683 = vadd.f32 %v3652, %v3682
    %3684 = vmatmul.f32.gmra.mxu0 %v3657
    %v3685 = vpop.f32.mrf.mxu0
    %v3686 = vadd.f32 %v3652, %v3685
    %3687 = vmatmul.f32.gmra.mxu0 %v3660
    %v3688 = vpop.f32.mrf.mxu0
    %v3689 = vadd.f32 %v3652, %v3688
    %3690 = vmatmul.f32.gmra.mxu0 %v3663
    %v3691 = vpop.f32.mrf.mxu0
    %v3692 = vadd.f32 %v3652, %v3691
    %3693 = vdwg.mxu0
    %3698 = vrot.lane.b32.xlu0 %v3642, 96
    %v3699 = vpop.permute.xlu0 %3698
    %3700 = vrot.lane.b32.xlu0 %v3643, 96
    %v3701 = vpop.permute.xlu0 %3700
    %3702 = vrot.lane.b32.xlu0 %v3644, 96
    %v3703 = vpop.permute.xlu0 %3702
    %3704 = vrot.lane.b32.xlu0 %v3645, 96
    %v3705 = vpop.permute.xlu0 %3704
    %3711 = vrot.lane.b32.xlu0 %v3652, 96
    %v3712 = vpop.permute.xlu0 %3711
    %v3715 = vsel %vm101, %v2594, 0
    %v3718 = vsel %vm101, %v2595, 0
    %v3721 = vsel %vm101, %v2596, 0
    %v3724 = vsel %vm101, %v2597, 0
    %3726 = vmatpush.msra.mxu0 0.0
    %3727 = vmatpush.msra.mxu0 0.0
    %3728 = vmatpush.msra.mxu0 0.0
    %3729 = vmatpush.msra.mxu0 0.0
    %3730 = vmatpush.msra.mxu0 0.0
    %3731 = vmatpush.msra.mxu0 0.0
    %3732 = vmatpush.msra.mxu0 0.0
    %3733 = vmatpush.msra.mxu0 0.0
    %3734 = vmatpush.msra.mxu0 0.0
    %3735 = vmatpush.msra.mxu0 0.0
    %3736 = vmatpush.msra.mxu0 0.0
    %3737 = vmatpush.msra.mxu0 0.0
    %3738 = vmatpush.msra.mxu0 %v3705
    %3739 = vmatpush.msra.mxu0 %v3703
    %3740 = vmatpush.msra.mxu0 %v3701
    %3741 = vmatpush.msra.mxu0 %v3699
    %3742 = vmatmul.f32.gmra.mxu0 %v3715
    %v3743 = vpop.f32.mrf.mxu0
    %v3744 = vadd.f32 %v3712, %v3743
    %3745 = vmatmul.f32.gmra.mxu0 %v3718
    %v3746 = vpop.f32.mrf.mxu0
    %v3747 = vadd.f32 %v3712, %v3746
    %3748 = vmatmul.f32.gmra.mxu0 %v3721
    %v3749 = vpop.f32.mrf.mxu0
    %v3750 = vadd.f32 %v3712, %v3749
    %3751 = vmatmul.f32.gmra.mxu0 %v3724
    %v3752 = vpop.f32.mrf.mxu0
    %v3753 = vadd.f32 %v3712, %v3752
    %3754 = vdwg.mxu0
    %v3756 = vsel %vm155, %v3683, 0
    %v3759 = vsel %vm155, %v3686, 0
    %v3762 = vsel %vm155, %v3689, 0
    %v3765 = vsel %vm155, %v3692, 0
    %v3768 = vsel %vm155, %v3744, 0
    %v3771 = vsel %vm155, %v3747, 0
    %v3774 = vsel %vm155, %v3750, 0
    %v3777 = vsel %vm155, %v3753, 0
    %3779 = vmatpush.xpose.msra.mxu0 0.0
    %3780 = vmatpush.xpose.msra.mxu0 0.0
    %3781 = vmatpush.xpose.msra.mxu0 0.0
    %3782 = vmatpush.xpose.msra.mxu0 0.0
    %3783 = vmatpush.xpose.msra.mxu0 0.0
    %3784 = vmatpush.xpose.msra.mxu0 0.0
    %3785 = vmatpush.xpose.msra.mxu0 0.0
    %3786 = vmatpush.xpose.msra.mxu0 0.0
    %3787 = vmatpush.xpose.msra.mxu0 0.0
    %3788 = vmatpush.xpose.msra.mxu0 0.0
    %3789 = vmatpush.xpose.msra.mxu0 0.0
    %3790 = vmatpush.xpose.msra.mxu0 0.0
    %3791 = vmatpush.xpose.msra.mxu0 %v3777
    %3792 = vmatpush.xpose.msra.mxu0 %v3774
    %3793 = vmatpush.xpose.msra.mxu0 %v3771
    %3794 = vmatpush.xpose.msra.mxu0 %v3768
    %3795 = vmatmul.f32.gmra.mxu0 %v3756
    %v3796 = vpop.f32.mrf.mxu0
    %v3797 = vadd.f32 0.0, %v3796
    %3798 = vmatmul.f32.gmra.mxu0 %v3759
    %v3799 = vpop.f32.mrf.mxu0
    %v3800 = vadd.f32 0.0, %v3799
    %3801 = vmatmul.f32.gmra.mxu0 %v3762
    %v3802 = vpop.f32.mrf.mxu0
    %v3803 = vadd.f32 0.0, %v3802
    %3804 = vmatmul.f32.gmra.mxu0 %v3765
    %v3805 = vpop.f32.mrf.mxu0
    %v3806 = vadd.f32 0.0, %v3805
    %3807 = vdwg.mxu0
    %v3808 = vmul.f32 %v3797, 0.35355338
    %v3809 = vmul.f32 %v3800, 0.35355338
    %v3810 = vmul.f32 %v3803, 0.35355338
    %v3811 = vmul.f32 %v3806, 0.35355338
    %v3812 = vadd.f32 %v3808, %v30
    %v3813 = vadd.f32 %v3809, %v31
    %v3814 = vadd.f32 %v3810, %v32
    %v3815 = vadd.f32 %v3811, %v33
    %v3816 = vsel %vm101, %v3812, -inf
    %3817 = vmax.xlane.f32.xlu0 %v3816
    %v3818 = vpop.xlane.xlu0 %3817
    %v3819 = vsel %vm101, %v3813, -inf
    %3820 = vmax.xlane.f32.xlu0 %v3819
    %v3821 = vpop.xlane.xlu0 %3820
    %v3822 = vsel %vm101, %v3814, -inf
    %3823 = vmax.xlane.f32.xlu0 %v3822
    %v3824 = vpop.xlane.xlu0 %3823
    %v3825 = vsel %vm101, %v3815, -inf
    %3826 = vmax.xlane.f32.xlu0 %v3825
    %v3827 = vpop.xlane.xlu0 %3826
    %v3828 = vsub.f32 %v3812, %v3818
    %v3829 = vsub.f32 %v3813, %v3821
    %v3830 = vsub.f32 %v3814, %v3824
    %v3831 = vsub.f32 %v3815, %v3827
    %v3832 = vmul.f32 %v3828, 1.442695
    %v3833 = vpow.pop %v3832
    %v3834 = vmul.f32 %v3829, 1.442695
    %v3835 = vpow.pop %v3834
    %v3836 = vmul.f32 %v3830, 1.442695
    %v3837 = vpow.pop %v3836
    %v3838 = vmul.f32 %v3831, 1.442695
    %v3839 = vpow.pop %v3838
    %v3840 = vsel %vm101, %v3833, 0.0
    %3841 = vadd.xlane.f32.xlu0 %v3840
    %v3842 = vpop.xlane.xlu0 %3841
    %v3843 = vsel %vm101, %v3835, 0.0
    %3844 = vadd.xlane.f32.xlu0 %v3843
    %v3845 = vpop.xlane.xlu0 %3844
    %v3846 = vsel %vm101, %v3837, 0.0
    %3847 = vadd.xlane.f32.xlu0 %v3846
    %v3848 = vpop.xlane.xlu0 %3847
    %v3849 = vsel %vm101, %v3839, 0.0
    %3850 = vadd.xlane.f32.xlu0 %v3849
    %v3851 = vpop.xlane.xlu0 %3850
    %v3852 = vrcp.pop %v3842
    %v3853 = vrcp.pop %v3845
    %v3854 = vrcp.pop %v3848
    %v3855 = vrcp.pop %v3851
    %v3856 = vmul.f32 %v3833, %v3852
    %v3857 = vmul.f32 %v3835, %v3853
    %v3858 = vmul.f32 %v3837, %v3854
    %v3859 = vmul.f32 %v3839, %v3855
    %3860 = vrot.lane.b32.xlu0 %v3744, 96
    %v3861 = vpop.permute.xlu0 %3860
    %3862 = vrot.lane.b32.xlu0 %v3747, 96
    %v3863 = vpop.permute.xlu0 %3862
    %3864 = vrot.lane.b32.xlu0 %v3750, 96
    %v3865 = vpop.permute.xlu0 %3864
    %3866 = vrot.lane.b32.xlu0 %v3753, 96
    %v3867 = vpop.permute.xlu0 %3866
    %v3873 = vsel %vm101, %v3856, 0
    %v3876 = vsel %vm101, %v3857, 0
    %v3879 = vsel %vm101, %v3858, 0
    %v3882 = vsel %vm101, %v3859, 0
    %3884 = vmatpush.msra.mxu0 0.0
    %3885 = vmatpush.msra.mxu0 0.0
    %3886 = vmatpush.msra.mxu0 0.0
    %3887 = vmatpush.msra.mxu0 0.0
    %3888 = vmatpush.msra.mxu0 0.0
    %3889 = vmatpush.msra.mxu0 0.0
    %3890 = vmatpush.msra.mxu0 0.0
    %3891 = vmatpush.msra.mxu0 0.0
    %3892 = vmatpush.msra.mxu0 0.0
    %3893 = vmatpush.msra.mxu0 0.0
    %3894 = vmatpush.msra.mxu0 0.0
    %3895 = vmatpush.msra.mxu0 0.0
    %3896 = vmatpush.msra.mxu0 %v3867
    %3897 = vmatpush.msra.mxu0 %v3865
    %3898 = vmatpush.msra.mxu0 %v3863
    %3899 = vmatpush.msra.mxu0 %v3861
    %3900 = vmatmul.f32.gmra.mxu0 %v3873
    %v3901 = vpop.f32.mrf.mxu0
    %v3902 = vadd.f32 0.0, %v3901
    %3903 = vmatmul.f32.gmra.mxu0 %v3876
    %v3904 = vpop.f32.mrf.mxu0
    %v3905 = vadd.f32 0.0, %v3904
    %3906 = vmatmul.f32.gmra.mxu0 %v3879
    %v3907 = vpop.f32.mrf.mxu0
    %v3908 = vadd.f32 0.0, %v3907
    %3909 = vmatmul.f32.gmra.mxu0 %v3882
    %v3910 = vpop.f32.mrf.mxu0
    %v3911 = vadd.f32 0.0, %v3910
    %3912 = vdwg.mxu0
    %3913 = vrot.lane.b32.xlu0 %v3683, 120
    %v3914 = vpop.permute.xlu0 %3913
    %3915 = vrot.lane.b32.xlu0 %v3686, 120
    %v3916 = vpop.permute.xlu0 %3915
    %3917 = vrot.lane.b32.xlu0 %v3689, 120
    %v3918 = vpop.permute.xlu0 %3917
    %3919 = vrot.lane.b32.xlu0 %v3692, 120
    %v3920 = vpop.permute.xlu0 %3919
    %3921 = vrot.lane.b32.xlu0 %v3744, 120
    %v3922 = vpop.permute.xlu0 %3921
    %3923 = vrot.lane.b32.xlu0 %v3747, 120
    %v3924 = vpop.permute.xlu0 %3923
    %3925 = vrot.lane.b32.xlu0 %v3750, 120
    %v3926 = vpop.permute.xlu0 %3925
    %3927 = vrot.lane.b32.xlu0 %v3753, 120
    %v3928 = vpop.permute.xlu0 %3927
    %v3929 = vsel %vm155, %v3914, 0
    %v3931 = vsel %vm155, %v3916, 0
    %v3933 = vsel %vm155, %v3918, 0
    %v3935 = vsel %vm155, %v3920, 0
    %v3937 = vsel %vm155, %v3922, 0
    %v3939 = vsel %vm155, %v3924, 0
    %v3941 = vsel %vm155, %v3926, 0
    %v3943 = vsel %vm155, %v3928, 0
    %3945 = vmatpush.xpose.msra.mxu0 0.0
    %3946 = vmatpush.xpose.msra.mxu0 0.0
    %3947 = vmatpush.xpose.msra.mxu0 0.0
    %3948 = vmatpush.xpose.msra.mxu0 0.0
    %3949 = vmatpush.xpose.msra.mxu0 0.0
    %3950 = vmatpush.xpose.msra.mxu0 0.0
    %3951 = vmatpush.xpose.msra.mxu0 0.0
    %3952 = vmatpush.xpose.msra.mxu0 0.0
    %3953 = vmatpush.xpose.msra.mxu0 0.0
    %3954 = vmatpush.xpose.msra.mxu0 0.0
    %3955 = vmatpush.xpose.msra.mxu0 0.0
    %3956 = vmatpush.xpose.msra.mxu0 0.0
    %3957 = vmatpush.xpose.msra.mxu0 %v3943
    %3958 = vmatpush.xpose.msra.mxu0 %v3941
    %3959 = vmatpush.xpose.msra.mxu0 %v3939
    %3960 = vmatpush.xpose.msra.mxu0 %v3937
    %3961 = vmatmul.f32.gmra.mxu0 %v3929
    %v3962 = vpop.f32.mrf.mxu0
    %v3963 = vadd.f32 0.0, %v3962
    %3964 = vmatmul.f32.gmra.mxu0 %v3931
    %v3965 = vpop.f32.mrf.mxu0
    %v3966 = vadd.f32 0.0, %v3965
    %3967 = vmatmul.f32.gmra.mxu0 %v3933
    %v3968 = vpop.f32.mrf.mxu0
    %v3969 = vadd.f32 0.0, %v3968
    %3970 = vmatmul.f32.gmra.mxu0 %v3935
    %v3971 = vpop.f32.mrf.mxu0
    %v3972 = vadd.f32 0.0, %v3971
    %3973 = vdwg.mxu0
    %v3974 = vmul.f32 %v3963, 0.35355338
    %v3975 = vmul.f32 %v3966, 0.35355338
    %v3976 = vmul.f32 %v3969, 0.35355338
    %v3977 = vmul.f32 %v3972, 0.35355338
    %v3978 = vadd.f32 %v3974, %v30
    %v3979 = vadd.f32 %v3975, %v31
    %v3980 = vadd.f32 %v3976, %v32
    %v3981 = vadd.f32 %v3977, %v33
    %v3982 = vsel %vm101, %v3978, -inf
    %3983 = vmax.xlane.f32.xlu0 %v3982
    %v3984 = vpop.xlane.xlu0 %3983
    %v3985 = vsel %vm101, %v3979, -inf
    %3986 = vmax.xlane.f32.xlu0 %v3985
    %v3987 = vpop.xlane.xlu0 %3986
    %v3988 = vsel %vm101, %v3980, -inf
    %3989 = vmax.xlane.f32.xlu0 %v3988
    %v3990 = vpop.xlane.xlu0 %3989
    %v3991 = vsel %vm101, %v3981, -inf
    %3992 = vmax.xlane.f32.xlu0 %v3991
    %v3993 = vpop.xlane.xlu0 %3992
    %v3994 = vsub.f32 %v3978, %v3984
    %v3995 = vsub.f32 %v3979, %v3987
    %v3996 = vsub.f32 %v3980, %v3990
    %v3997 = vsub.f32 %v3981, %v3993
    %v3998 = vmul.f32 %v3994, 1.442695
    %v3999 = vpow.pop %v3998
    %v4000 = vmul.f32 %v3995, 1.442695
    %v4001 = vpow.pop %v4000
    %v4002 = vmul.f32 %v3996, 1.442695
    %v4003 = vpow.pop %v4002
    %v4004 = vmul.f32 %v3997, 1.442695
    %v4005 = vpow.pop %v4004
    %v4006 = vsel %vm101, %v3999, 0.0
    %4007 = vadd.xlane.f32.xlu0 %v4006
    %v4008 = vpop.xlane.xlu0 %4007
    %v4009 = vsel %vm101, %v4001, 0.0
    %4010 = vadd.xlane.f32.xlu0 %v4009
    %v4011 = vpop.xlane.xlu0 %4010
    %v4012 = vsel %vm101, %v4003, 0.0
    %4013 = vadd.xlane.f32.xlu0 %v4012
    %v4014 = vpop.xlane.xlu0 %4013
    %v4015 = vsel %vm101, %v4005, 0.0
    %4016 = vadd.xlane.f32.xlu0 %v4015
    %v4017 = vpop.xlane.xlu0 %4016
    %v4018 = vrcp.pop %v4008
    %v4019 = vrcp.pop %v4011
    %v4020 = vrcp.pop %v4014
    %v4021 = vrcp.pop %v4017
    %v4022 = vmul.f32 %v3999, %v4018
    %v4023 = vmul.f32 %v4001, %v4019
    %v4024 = vmul.f32 %v4003, %v4020
    %v4025 = vmul.f32 %v4005, %v4021
    %4026 = vrot.lane.b32.xlu0 %v3744, 88
    %v4027 = vpop.permute.xlu0 %4026
    %4028 = vrot.lane.b32.xlu0 %v3747, 88
    %v4029 = vpop.permute.xlu0 %4028
    %4030 = vrot.lane.b32.xlu0 %v3750, 88
    %v4031 = vpop.permute.xlu0 %4030
    %4032 = vrot.lane.b32.xlu0 %v3753, 88
    %v4033 = vpop.permute.xlu0 %4032
    %v4039 = vsel %vm101, %v4022, 0
    %v4042 = vsel %vm101, %v4023, 0
    %v4045 = vsel %vm101, %v4024, 0
    %v4048 = vsel %vm101, %v4025, 0
    %4050 = vmatpush.msra.mxu0 0.0
    %4051 = vmatpush.msra.mxu0 0.0
    %4052 = vmatpush.msra.mxu0 0.0
    %4053 = vmatpush.msra.mxu0 0.0
    %4054 = vmatpush.msra.mxu0 0.0
    %4055 = vmatpush.msra.mxu0 0.0
    %4056 = vmatpush.msra.mxu0 0.0
    %4057 = vmatpush.msra.mxu0 0.0
    %4058 = vmatpush.msra.mxu0 0.0
    %4059 = vmatpush.msra.mxu0 0.0
    %4060 = vmatpush.msra.mxu0 0.0
    %4061 = vmatpush.msra.mxu0 0.0
    %4062 = vmatpush.msra.mxu0 %v4033
    %4063 = vmatpush.msra.mxu0 %v4031
    %4064 = vmatpush.msra.mxu0 %v4029
    %4065 = vmatpush.msra.mxu0 %v4027
    %4066 = vmatmul.f32.gmra.mxu0 %v4039
    %v4067 = vpop.f32.mrf.mxu0
    %v4068 = vadd.f32 0.0, %v4067
    %4069 = vmatmul.f32.gmra.mxu0 %v4042
    %v4070 = vpop.f32.mrf.mxu0
    %v4071 = vadd.f32 0.0, %v4070
    %4072 = vmatmul.f32.gmra.mxu0 %v4045
    %v4073 = vpop.f32.mrf.mxu0
    %v4074 = vadd.f32 0.0, %v4073
    %4075 = vmatmul.f32.gmra.mxu0 %v4048
    %v4076 = vpop.f32.mrf.mxu0
    %v4077 = vadd.f32 0.0, %v4076
    %4078 = vdwg.mxu0
    %v4080 = vsel %vm155, %v4068, 0
    %v4083 = vsel %vm155, %v4071, 0
    %v4086 = vsel %vm155, %v4074, 0
    %v4089 = vsel %vm155, %v4077, 0
    %4091 = vmatpush.msra.mxu0 0.0
    %4092 = vmatpush.msra.mxu0 0.0
    %4093 = vmatpush.msra.mxu0 0.0
    %4094 = vmatpush.msra.mxu0 0.0
    %4095 = vmatpush.msra.mxu0 0.0
    %4096 = vmatpush.msra.mxu0 0.0
    %4097 = vmatpush.msra.mxu0 0.0
    %4098 = vmatpush.msra.mxu0 0.0
    %4099 = vmatpush.msra.mxu0 0.0
    %4100 = vmatpush.msra.mxu0 0.0
    %4101 = vmatpush.msra.mxu0 0.0
    %4102 = vmatpush.msra.mxu0 0.0
    %4103 = vmatpush.msra.mxu0 0.0
    %4104 = vmatpush.msra.mxu0 0.0
    %4105 = vmatpush.msra.mxu0 0.0
    %4106 = vmatpush.msra.mxu0 %v3648
    %4107 = vmatmul.f32.gmra.mxu0 %v4080
    %v4108 = vpop.f32.mrf.mxu0
    %v4109 = vadd.f32 0.0, %v4108
    %4110 = vmatmul.f32.gmra.mxu0 %v4083
    %v4111 = vpop.f32.mrf.mxu0
    %v4112 = vadd.f32 0.0, %v4111
    %4113 = vmatmul.f32.gmra.mxu0 %v4086
    %v4114 = vpop.f32.mrf.mxu0
    %v4115 = vadd.f32 0.0, %v4114
    %4116 = vmatmul.f32.gmra.mxu0 %v4089
    %v4117 = vpop.f32.mrf.mxu0
    %v4118 = vadd.f32 0.0, %v4117
    %4119 = vdwg.mxu0
    %v4121 = vsel %vm155, %v3902, 0
    %v4124 = vsel %vm155, %v3905, 0
    %v4127 = vsel %vm155, %v3908, 0
    %v4130 = vsel %vm155, %v3911, 0
    %4132 = vmatpush.msra.mxu0 0.0
    %4133 = vmatpush.msra.mxu0 0.0
    %4134 = vmatpush.msra.mxu0 0.0
    %4135 = vmatpush.msra.mxu0 0.0
    %4136 = vmatpush.msra.mxu0 0.0
    %4137 = vmatpush.msra.mxu0 0.0
    %4138 = vmatpush.msra.mxu0 0.0
    %4139 = vmatpush.msra.mxu0 0.0
    %4140 = vmatpush.msra.mxu0 0.0
    %4141 = vmatpush.msra.mxu0 0.0
    %4142 = vmatpush.msra.mxu0 0.0
    %4143 = vmatpush.msra.mxu0 0.0
    %4144 = vmatpush.msra.mxu0 0.0
    %4145 = vmatpush.msra.mxu0 0.0
    %4146 = vmatpush.msra.mxu0 0.0
    %4147 = vmatpush.msra.mxu0 %v3647
    %4148 = vmatmul.f32.gmra.mxu0 %v4121
    %v4149 = vpop.f32.mrf.mxu0
    %v4150 = vadd.f32 %v4109, %v4149
    %4151 = vmatmul.f32.gmra.mxu0 %v4124
    %v4152 = vpop.f32.mrf.mxu0
    %v4153 = vadd.f32 %v4112, %v4152
    %4154 = vmatmul.f32.gmra.mxu0 %v4127
    %v4155 = vpop.f32.mrf.mxu0
    %v4156 = vadd.f32 %v4115, %v4155
    %4157 = vmatmul.f32.gmra.mxu0 %v4130
    %v4158 = vpop.f32.mrf.mxu0
    %v4159 = vadd.f32 %v4118, %v4158
    %4160 = vdwg.mxu0
    %4161 = vrot.lane.b32.xlu0 %v3683, 112
    %v4162 = vpop.permute.xlu0 %4161
    %4163 = vrot.lane.b32.xlu0 %v3686, 112
    %v4164 = vpop.permute.xlu0 %4163
    %4165 = vrot.lane.b32.xlu0 %v3689, 112
    %v4166 = vpop.permute.xlu0 %4165
    %4167 = vrot.lane.b32.xlu0 %v3692, 112
    %v4168 = vpop.permute.xlu0 %4167
    %4169 = vrot.lane.b32.xlu0 %v3744, 112
    %v4170 = vpop.permute.xlu0 %4169
    %4171 = vrot.lane.b32.xlu0 %v3747, 112
    %v4172 = vpop.permute.xlu0 %4171
    %4173 = vrot.lane.b32.xlu0 %v3750, 112
    %v4174 = vpop.permute.xlu0 %4173
    %4175 = vrot.lane.b32.xlu0 %v3753, 112
    %v4176 = vpop.permute.xlu0 %4175
    %v4177 = vsel %vm155, %v4162, 0
    %v4179 = vsel %vm155, %v4164, 0
    %v4181 = vsel %vm155, %v4166, 0
    %v4183 = vsel %vm155, %v4168, 0
    %v4185 = vsel %vm155, %v4170, 0
    %v4187 = vsel %vm155, %v4172, 0
    %v4189 = vsel %vm155, %v4174, 0
    %v4191 = vsel %vm155, %v4176, 0
    %4193 = vmatpush.xpose.msra.mxu0 0.0
    %4194 = vmatpush.xpose.msra.mxu0 0.0
    %4195 = vmatpush.xpose.msra.mxu0 0.0
    %4196 = vmatpush.xpose.msra.mxu0 0.0
    %4197 = vmatpush.xpose.msra.mxu0 0.0
    %4198 = vmatpush.xpose.msra.mxu0 0.0
    %4199 = vmatpush.xpose.msra.mxu0 0.0
    %4200 = vmatpush.xpose.msra.mxu0 0.0
    %4201 = vmatpush.xpose.msra.mxu0 0.0
    %4202 = vmatpush.xpose.msra.mxu0 0.0
    %4203 = vmatpush.xpose.msra.mxu0 0.0
    %4204 = vmatpush.xpose.msra.mxu0 0.0
    %4205 = vmatpush.xpose.msra.mxu0 %v4191
    %4206 = vmatpush.xpose.msra.mxu0 %v4189
    %4207 = vmatpush.xpose.msra.mxu0 %v4187
    %4208 = vmatpush.xpose.msra.mxu0 %v4185
    %4209 = vmatmul.f32.gmra.mxu0 %v4177
    %v4210 = vpop.f32.mrf.mxu0
    %v4211 = vadd.f32 0.0, %v4210
    %4212 = vmatmul.f32.gmra.mxu0 %v4179
    %v4213 = vpop.f32.mrf.mxu0
    %v4214 = vadd.f32 0.0, %v4213
    %4215 = vmatmul.f32.gmra.mxu0 %v4181
    %v4216 = vpop.f32.mrf.mxu0
    %v4217 = vadd.f32 0.0, %v4216
    %4218 = vmatmul.f32.gmra.mxu0 %v4183
    %v4219 = vpop.f32.mrf.mxu0
    %v4220 = vadd.f32 0.0, %v4219
    %4221 = vdwg.mxu0
    %v4222 = vmul.f32 %v4211, 0.35355338
    %v4223 = vmul.f32 %v4214, 0.35355338
    %v4224 = vmul.f32 %v4217, 0.35355338
    %v4225 = vmul.f32 %v4220, 0.35355338
    %v4226 = vadd.f32 %v4222, %v30
    %v4227 = vadd.f32 %v4223, %v31
    %v4228 = vadd.f32 %v4224, %v32
    %v4229 = vadd.f32 %v4225, %v33
    %v4230 = vsel %vm101, %v4226, -inf
    %4231 = vmax.xlane.f32.xlu0 %v4230
    %v4232 = vpop.xlane.xlu0 %4231
    %v4233 = vsel %vm101, %v4227, -inf
    %4234 = vmax.xlane.f32.xlu0 %v4233
    %v4235 = vpop.xlane.xlu0 %4234
    %v4236 = vsel %vm101, %v4228, -inf
    %4237 = vmax.xlane.f32.xlu0 %v4236
    %v4238 = vpop.xlane.xlu0 %4237
    %v4239 = vsel %vm101, %v4229, -inf
    %4240 = vmax.xlane.f32.xlu0 %v4239
    %v4241 = vpop.xlane.xlu0 %4240
    %v4242 = vsub.f32 %v4226, %v4232
    %v4243 = vsub.f32 %v4227, %v4235
    %v4244 = vsub.f32 %v4228, %v4238
    %v4245 = vsub.f32 %v4229, %v4241
    %v4246 = vmul.f32 %v4242, 1.442695
    %v4247 = vpow.pop %v4246
    %v4248 = vmul.f32 %v4243, 1.442695
    %v4249 = vpow.pop %v4248
    %v4250 = vmul.f32 %v4244, 1.442695
    %v4251 = vpow.pop %v4250
    %v4252 = vmul.f32 %v4245, 1.442695
    %v4253 = vpow.pop %v4252
    %v4254 = vsel %vm101, %v4247, 0.0
    %4255 = vadd.xlane.f32.xlu0 %v4254
    %v4256 = vpop.xlane.xlu0 %4255
    %v4257 = vsel %vm101, %v4249, 0.0
    %4258 = vadd.xlane.f32.xlu0 %v4257
    %v4259 = vpop.xlane.xlu0 %4258
    %v4260 = vsel %vm101, %v4251, 0.0
    %4261 = vadd.xlane.f32.xlu0 %v4260
    %v4262 = vpop.xlane.xlu0 %4261
    %v4263 = vsel %vm101, %v4253, 0.0
    %4264 = vadd.xlane.f32.xlu0 %v4263
    %v4265 = vpop.xlane.xlu0 %4264
    %v4266 = vrcp.pop %v4256
    %v4267 = vrcp.pop %v4259
    %v4268 = vrcp.pop %v4262
    %v4269 = vrcp.pop %v4265
    %v4270 = vmul.f32 %v4247, %v4266
    %v4271 = vmul.f32 %v4249, %v4267
    %v4272 = vmul.f32 %v4251, %v4268
    %v4273 = vmul.f32 %v4253, %v4269
    %4274 = vrot.lane.b32.xlu0 %v3744, 80
    %v4275 = vpop.permute.xlu0 %4274
    %4276 = vrot.lane.b32.xlu0 %v3747, 80
    %v4277 = vpop.permute.xlu0 %4276
    %4278 = vrot.lane.b32.xlu0 %v3750, 80
    %v4279 = vpop.permute.xlu0 %4278
    %4280 = vrot.lane.b32.xlu0 %v3753, 80
    %v4281 = vpop.permute.xlu0 %4280
    %v4287 = vsel %vm101, %v4270, 0
    %v4290 = vsel %vm101, %v4271, 0
    %v4293 = vsel %vm101, %v4272, 0
    %v4296 = vsel %vm101, %v4273, 0
    %4298 = vmatpush.msra.mxu0 0.0
    %4299 = vmatpush.msra.mxu0 0.0
    %4300 = vmatpush.msra.mxu0 0.0
    %4301 = vmatpush.msra.mxu0 0.0
    %4302 = vmatpush.msra.mxu0 0.0
    %4303 = vmatpush.msra.mxu0 0.0
    %4304 = vmatpush.msra.mxu0 0.0
    %4305 = vmatpush.msra.mxu0 0.0
    %4306 = vmatpush.msra.mxu0 0.0
    %4307 = vmatpush.msra.mxu0 0.0
    %4308 = vmatpush.msra.mxu0 0.0
    %4309 = vmatpush.msra.mxu0 0.0
    %4310 = vmatpush.msra.mxu0 %v4281
    %4311 = vmatpush.msra.mxu0 %v4279
    %4312 = vmatpush.msra.mxu0 %v4277
    %4313 = vmatpush.msra.mxu0 %v4275
    %4314 = vmatmul.f32.gmra.mxu0 %v4287
    %v4315 = vpop.f32.mrf.mxu0
    %v4316 = vadd.f32 0.0, %v4315
    %4317 = vmatmul.f32.gmra.mxu0 %v4290
    %v4318 = vpop.f32.mrf.mxu0
    %v4319 = vadd.f32 0.0, %v4318
    %4320 = vmatmul.f32.gmra.mxu0 %v4293
    %v4321 = vpop.f32.mrf.mxu0
    %v4322 = vadd.f32 0.0, %v4321
    %4323 = vmatmul.f32.gmra.mxu0 %v4296
    %v4324 = vpop.f32.mrf.mxu0
    %v4325 = vadd.f32 0.0, %v4324
    %4326 = vdwg.mxu0
    %v4328 = vsel %vm155, %v4316, 0
    %v4331 = vsel %vm155, %v4319, 0
    %v4334 = vsel %vm155, %v4322, 0
    %v4337 = vsel %vm155, %v4325, 0
    %4339 = vmatpush.msra.mxu0 0.0
    %4340 = vmatpush.msra.mxu0 0.0
    %4341 = vmatpush.msra.mxu0 0.0
    %4342 = vmatpush.msra.mxu0 0.0
    %4343 = vmatpush.msra.mxu0 0.0
    %4344 = vmatpush.msra.mxu0 0.0
    %4345 = vmatpush.msra.mxu0 0.0
    %4346 = vmatpush.msra.mxu0 0.0
    %4347 = vmatpush.msra.mxu0 0.0
    %4348 = vmatpush.msra.mxu0 0.0
    %4349 = vmatpush.msra.mxu0 0.0
    %4350 = vmatpush.msra.mxu0 0.0
    %4351 = vmatpush.msra.mxu0 0.0
    %4352 = vmatpush.msra.mxu0 0.0
    %4353 = vmatpush.msra.mxu0 0.0
    %4354 = vmatpush.msra.mxu0 %v3649
    %4355 = vmatmul.f32.gmra.mxu0 %v4328
    %v4356 = vpop.f32.mrf.mxu0
    %v4357 = vadd.f32 0.0, %v4356
    %4358 = vmatmul.f32.gmra.mxu0 %v4331
    %v4359 = vpop.f32.mrf.mxu0
    %v4360 = vadd.f32 0.0, %v4359
    %4361 = vmatmul.f32.gmra.mxu0 %v4334
    %v4362 = vpop.f32.mrf.mxu0
    %v4363 = vadd.f32 0.0, %v4362
    %4364 = vmatmul.f32.gmra.mxu0 %v4337
    %v4365 = vpop.f32.mrf.mxu0
    %v4366 = vadd.f32 0.0, %v4365
    %4367 = vdwg.mxu0
    %v4368 = vadd.f32 %v4150, %v4357
    %v4369 = vadd.f32 %v4153, %v4360
    %v4370 = vadd.f32 %v4156, %v4363
    %v4371 = vadd.f32 %v4159, %v4366
    %4372 = vrot.lane.b32.xlu0 %v3683, 104
    %v4373 = vpop.permute.xlu0 %4372
    %4374 = vrot.lane.b32.xlu0 %v3686, 104
    %v4375 = vpop.permute.xlu0 %4374
    %4376 = vrot.lane.b32.xlu0 %v3689, 104
    %v4377 = vpop.permute.xlu0 %4376
    %4378 = vrot.lane.b32.xlu0 %v3692, 104
    %v4379 = vpop.permute.xlu0 %4378
    %4380 = vrot.lane.b32.xlu0 %v3744, 104
    %v4381 = vpop.permute.xlu0 %4380
    %4382 = vrot.lane.b32.xlu0 %v3747, 104
    %v4383 = vpop.permute.xlu0 %4382
    %4384 = vrot.lane.b32.xlu0 %v3750, 104
    %v4385 = vpop.permute.xlu0 %4384
    %4386 = vrot.lane.b32.xlu0 %v3753, 104
    %v4387 = vpop.permute.xlu0 %4386
    %v4388 = vsel %vm155, %v4373, 0
    %v4390 = vsel %vm155, %v4375, 0
    %v4392 = vsel %vm155, %v4377, 0
    %v4394 = vsel %vm155, %v4379, 0
    %v4396 = vsel %vm155, %v4381, 0
    %v4398 = vsel %vm155, %v4383, 0
    %v4400 = vsel %vm155, %v4385, 0
    %v4402 = vsel %vm155, %v4387, 0
    %4404 = vmatpush.xpose.msra.mxu0 0.0
    %4405 = vmatpush.xpose.msra.mxu0 0.0
    %4406 = vmatpush.xpose.msra.mxu0 0.0
    %4407 = vmatpush.xpose.msra.mxu0 0.0
    %4408 = vmatpush.xpose.msra.mxu0 0.0
    %4409 = vmatpush.xpose.msra.mxu0 0.0
    %4410 = vmatpush.xpose.msra.mxu0 0.0
    %4411 = vmatpush.xpose.msra.mxu0 0.0
    %4412 = vmatpush.xpose.msra.mxu0 0.0
    %4413 = vmatpush.xpose.msra.mxu0 0.0
    %4414 = vmatpush.xpose.msra.mxu0 0.0
    %4415 = vmatpush.xpose.msra.mxu0 0.0
    %4416 = vmatpush.xpose.msra.mxu0 %v4402
    %4417 = vmatpush.xpose.msra.mxu0 %v4400
    %4418 = vmatpush.xpose.msra.mxu0 %v4398
    %4419 = vmatpush.xpose.msra.mxu0 %v4396
    %4420 = vmatmul.f32.gmra.mxu0 %v4388
    %v4421 = vpop.f32.mrf.mxu0
    %v4422 = vadd.f32 0.0, %v4421
    %4423 = vmatmul.f32.gmra.mxu0 %v4390
    %v4424 = vpop.f32.mrf.mxu0
    %v4425 = vadd.f32 0.0, %v4424
    %4426 = vmatmul.f32.gmra.mxu0 %v4392
    %v4427 = vpop.f32.mrf.mxu0
    %v4428 = vadd.f32 0.0, %v4427
    %4429 = vmatmul.f32.gmra.mxu0 %v4394
    %v4430 = vpop.f32.mrf.mxu0
    %v4431 = vadd.f32 0.0, %v4430
    %4432 = vdwg.mxu0
    %v4433 = vmul.f32 %v4422, 0.35355338
    %v4434 = vmul.f32 %v4425, 0.35355338
    %v4435 = vmul.f32 %v4428, 0.35355338
    %v4436 = vmul.f32 %v4431, 0.35355338
    %v4437 = vadd.f32 %v4433, %v30
    %v4438 = vadd.f32 %v4434, %v31
    %v4439 = vadd.f32 %v4435, %v32
    %v4440 = vadd.f32 %v4436, %v33
    %v4441 = vsel %vm101, %v4437, -inf
    %4442 = vmax.xlane.f32.xlu0 %v4441
    %v4443 = vpop.xlane.xlu0 %4442
    %v4444 = vsel %vm101, %v4438, -inf
    %4445 = vmax.xlane.f32.xlu0 %v4444
    %v4446 = vpop.xlane.xlu0 %4445
    %v4447 = vsel %vm101, %v4439, -inf
    %4448 = vmax.xlane.f32.xlu0 %v4447
    %v4449 = vpop.xlane.xlu0 %4448
    %v4450 = vsel %vm101, %v4440, -inf
    %4451 = vmax.xlane.f32.xlu0 %v4450
    %v4452 = vpop.xlane.xlu0 %4451
    %v4453 = vsub.f32 %v4437, %v4443
    %v4454 = vsub.f32 %v4438, %v4446
    %v4455 = vsub.f32 %v4439, %v4449
    %v4456 = vsub.f32 %v4440, %v4452
    %v4457 = vmul.f32 %v4453, 1.442695
    %v4458 = vpow.pop %v4457
    %v4459 = vmul.f32 %v4454, 1.442695
    %v4460 = vpow.pop %v4459
    %v4461 = vmul.f32 %v4455, 1.442695
    %v4462 = vpow.pop %v4461
    %v4463 = vmul.f32 %v4456, 1.442695
    %v4464 = vpow.pop %v4463
    %v4465 = vsel %vm101, %v4458, 0.0
    %4466 = vadd.xlane.f32.xlu0 %v4465
    %v4467 = vpop.xlane.xlu0 %4466
    %v4468 = vsel %vm101, %v4460, 0.0
    %4469 = vadd.xlane.f32.xlu0 %v4468
    %v4470 = vpop.xlane.xlu0 %4469
    %v4471 = vsel %vm101, %v4462, 0.0
    %4472 = vadd.xlane.f32.xlu0 %v4471
    %v4473 = vpop.xlane.xlu0 %4472
    %v4474 = vsel %vm101, %v4464, 0.0
    %4475 = vadd.xlane.f32.xlu0 %v4474
    %v4476 = vpop.xlane.xlu0 %4475
    %v4477 = vrcp.pop %v4467
    %v4478 = vrcp.pop %v4470
    %v4479 = vrcp.pop %v4473
    %v4480 = vrcp.pop %v4476
    %v4481 = vmul.f32 %v4458, %v4477
    %v4482 = vmul.f32 %v4460, %v4478
    %v4483 = vmul.f32 %v4462, %v4479
    %v4484 = vmul.f32 %v4464, %v4480
    %4485 = vrot.lane.b32.xlu0 %v3744, 72
    %v4486 = vpop.permute.xlu0 %4485
    %4487 = vrot.lane.b32.xlu0 %v3747, 72
    %v4488 = vpop.permute.xlu0 %4487
    %4489 = vrot.lane.b32.xlu0 %v3750, 72
    %v4490 = vpop.permute.xlu0 %4489
    %4491 = vrot.lane.b32.xlu0 %v3753, 72
    %v4492 = vpop.permute.xlu0 %4491
    %v4498 = vsel %vm101, %v4481, 0
    %v4501 = vsel %vm101, %v4482, 0
    %v4504 = vsel %vm101, %v4483, 0
    %v4507 = vsel %vm101, %v4484, 0
    %4509 = vmatpush.msra.mxu0 0.0
    %4510 = vmatpush.msra.mxu0 0.0
    %4511 = vmatpush.msra.mxu0 0.0
    %4512 = vmatpush.msra.mxu0 0.0
    %4513 = vmatpush.msra.mxu0 0.0
    %4514 = vmatpush.msra.mxu0 0.0
    %4515 = vmatpush.msra.mxu0 0.0
    %4516 = vmatpush.msra.mxu0 0.0
    %4517 = vmatpush.msra.mxu0 0.0
    %4518 = vmatpush.msra.mxu0 0.0
    %4519 = vmatpush.msra.mxu0 0.0
    %4520 = vmatpush.msra.mxu0 0.0
    %4521 = vmatpush.msra.mxu0 %v4492
    %4522 = vmatpush.msra.mxu0 %v4490
    %4523 = vmatpush.msra.mxu0 %v4488
    %4524 = vmatpush.msra.mxu0 %v4486
    %4525 = vmatmul.f32.gmra.mxu0 %v4498
    %v4526 = vpop.f32.mrf.mxu0
    %v4527 = vadd.f32 0.0, %v4526
    %4528 = vmatmul.f32.gmra.mxu0 %v4501
    %v4529 = vpop.f32.mrf.mxu0
    %v4530 = vadd.f32 0.0, %v4529
    %4531 = vmatmul.f32.gmra.mxu0 %v4504
    %v4532 = vpop.f32.mrf.mxu0
    %v4533 = vadd.f32 0.0, %v4532
    %4534 = vmatmul.f32.gmra.mxu0 %v4507
    %v4535 = vpop.f32.mrf.mxu0
    %v4536 = vadd.f32 0.0, %v4535
    %4537 = vdwg.mxu0
    %v4539 = vsel %vm155, %v4527, 0
    %v4542 = vsel %vm155, %v4530, 0
    %v4545 = vsel %vm155, %v4533, 0
    %v4548 = vsel %vm155, %v4536, 0
    %4550 = vmatpush.msra.mxu0 0.0
    %4551 = vmatpush.msra.mxu0 0.0
    %4552 = vmatpush.msra.mxu0 0.0
    %4553 = vmatpush.msra.mxu0 0.0
    %4554 = vmatpush.msra.mxu0 0.0
    %4555 = vmatpush.msra.mxu0 0.0
    %4556 = vmatpush.msra.mxu0 0.0
    %4557 = vmatpush.msra.mxu0 0.0
    %4558 = vmatpush.msra.mxu0 0.0
    %4559 = vmatpush.msra.mxu0 0.0
    %4560 = vmatpush.msra.mxu0 0.0
    %4561 = vmatpush.msra.mxu0 0.0
    %4562 = vmatpush.msra.mxu0 0.0
    %4563 = vmatpush.msra.mxu0 0.0
    %4564 = vmatpush.msra.mxu0 0.0
    %4565 = vmatpush.msra.mxu0 %v3650
    %4566 = vmatmul.f32.gmra.mxu0 %v4539
    %v4567 = vpop.f32.mrf.mxu0
    %v4568 = vadd.f32 0.0, %v4567
    %4569 = vmatmul.f32.gmra.mxu0 %v4542
    %v4570 = vpop.f32.mrf.mxu0
    %v4571 = vadd.f32 0.0, %v4570
    %4572 = vmatmul.f32.gmra.mxu0 %v4545
    %v4573 = vpop.f32.mrf.mxu0
    %v4574 = vadd.f32 0.0, %v4573
    %4575 = vmatmul.f32.gmra.mxu0 %v4548
    %v4576 = vpop.f32.mrf.mxu0
    %v4577 = vadd.f32 0.0, %v4576
    %4578 = vdwg.mxu0
    %v4579 = vadd.f32 %v4368, %v4568
    %v4580 = vadd.f32 %v4369, %v4571
    %v4581 = vadd.f32 %v4370, %v4574
    %v4582 = vadd.f32 %v4371, %v4577
    %v4583 = vperm.slane %v3651, 0
    %v4584 = vadd.f32 %v4579, %v4583
    %v4585 = vadd.f32 %v4580, %v4583
    %v4586 = vadd.f32 %v4581, %v4583
    %v4587 = vadd.f32 %v4582, %v4583
    %v4588 = vadd.f32 %v3638, %v4584
    %v4589 = vadd.f32 %v3639, %v4585
    %v4590 = vadd.f32 %v3640, %v4586
    %v4591 = vadd.f32 %v3641, %v4587
    %v4592 = vld [vmem:[#allocation2 + $0x320] sm:$0x1]
    %v4593 = vld [vmem:[#allocation2 + $0x328] sm:$0x1]
    %v4594 = vsel %vm101, %v4588, 0.0
    %4595 = vadd.xlane.f32.xlu0 %v4594
    %v4596 = vpop.xlane.xlu0 %4595
    %v4597 = vsel %vm101, %v4589, 0.0
    %4598 = vadd.xlane.f32.xlu0 %v4597
    %v4599 = vpop.xlane.xlu0 %4598
    %v4600 = vsel %vm101, %v4590, 0.0
    %4601 = vadd.xlane.f32.xlu0 %v4600
    %v4602 = vpop.xlane.xlu0 %4601
    %v4603 = vsel %vm101, %v4591, 0.0
    %4604 = vadd.xlane.f32.xlu0 %v4603
    %v4605 = vpop.xlane.xlu0 %4604
    %v4606 = vmul.f32 %v4596, %v1005
    %v4607 = vmul.f32 %v4599, %v1005
    %v4608 = vmul.f32 %v4602, %v1005
    %v4609 = vmul.f32 %v4605, %v1005
    %v4610 = vsub.f32 %v4588, %v4606
    %v4611 = vsub.f32 %v4589, %v4607
    %v4612 = vsub.f32 %v4590, %v4608
    %v4613 = vsub.f32 %v4591, %v4609
    %v4614 = vmul.f32 %v4610, %v4610
    %v4615 = vmul.f32 %v4611, %v4611
    %v4616 = vmul.f32 %v4612, %v4612
    %v4617 = vmul.f32 %v4613, %v4613
    %v4618 = vsel %vm101, %v4614, 0.0
    %4619 = vadd.xlane.f32.xlu0 %v4618
    %v4620 = vpop.xlane.xlu0 %4619
    %v4621 = vsel %vm101, %v4615, 0.0
    %4622 = vadd.xlane.f32.xlu0 %v4621
    %v4623 = vpop.xlane.xlu0 %4622
    %v4624 = vsel %vm101, %v4616, 0.0
    %4625 = vadd.xlane.f32.xlu0 %v4624
    %v4626 = vpop.xlane.xlu0 %4625
    %v4627 = vsel %vm101, %v4617, 0.0
    %4628 = vadd.xlane.f32.xlu0 %v4627
    %v4629 = vpop.xlane.xlu0 %4628
    %v4630 = vmul.f32 %v4620, %v1005
    %v4631 = vmul.f32 %v4623, %v1005
    %v4632 = vmul.f32 %v4626, %v1005
    %v4633 = vmul.f32 %v4629, %v1005
    %v4634 = vadd.f32 %v4630, 1e-05
    %v4635 = vadd.f32 %v4631, 1e-05
    %v4636 = vadd.f32 %v4632, 1e-05
    %v4637 = vadd.f32 %v4633, 1e-05
    %v4638 = vrsqrt.pop %v4634
    %v4639 = vmul.f32 %v4638, %v4634
    %v4640 = vmul.f32 %v4639, %v4638
    %v4641 = vmul.f32 0.5, %v4640
    %v4642 = vsub.f32 1.5, %v4641
    %v4643 = vmul.f32 %v4638, %v4642
    %vm4644 = vweird.f32 %v4634
    %vm4645 = vweird.f32 %v4638
    %vm4646 = vmor %vm4644, %vm4645
    %v4647 = vsel %vm4646, %v4638, %v4643
    %v4648 = vrsqrt.pop %v4635
    %v4649 = vmul.f32 %v4648, %v4635
    %v4650 = vmul.f32 %v4649, %v4648
    %v4651 = vmul.f32 0.5, %v4650
    %v4652 = vsub.f32 1.5, %v4651
    %v4653 = vmul.f32 %v4648, %v4652
    %vm4654 = vweird.f32 %v4635
    %vm4655 = vweird.f32 %v4648
    %vm4656 = vmor %vm4654, %vm4655
    %v4657 = vsel %vm4656, %v4648, %v4653
    %v4658 = vrsqrt.pop %v4636
    %v4659 = vmul.f32 %v4658, %v4636
    %v4660 = vmul.f32 %v4659, %v4658
    %v4661 = vmul.f32 0.5, %v4660
    %v4662 = vsub.f32 1.5, %v4661
    %v4663 = vmul.f32 %v4658, %v4662
    %vm4664 = vweird.f32 %v4636
    %vm4665 = vweird.f32 %v4658
    %vm4666 = vmor %vm4664, %vm4665
    %v4667 = vsel %vm4666, %v4658, %v4663
    %v4668 = vrsqrt.pop %v4637
    %v4669 = vmul.f32 %v4668, %v4637
    %v4670 = vmul.f32 %v4669, %v4668
    %v4671 = vmul.f32 0.5, %v4670
    %v4672 = vsub.f32 1.5, %v4671
    %v4673 = vmul.f32 %v4668, %v4672
    %vm4674 = vweird.f32 %v4637
    %vm4675 = vweird.f32 %v4668
    %vm4676 = vmor %vm4674, %vm4675
    %v4677 = vsel %vm4676, %v4668, %v4673
    %v4678 = vmul.f32 %v4610, %v4647
    %v4679 = vmul.f32 %v4611, %v4657
    %v4680 = vmul.f32 %v4612, %v4667
    %v4681 = vmul.f32 %v4613, %v4677
    %v4682 = vperm.slane %v4592, 0
    %v4683 = vmul.f32 %v4678, %v4682
    %v4684 = vmul.f32 %v4679, %v4682
    %v4685 = vmul.f32 %v4680, %v4682
    %v4686 = vmul.f32 %v4681, %v4682
    %v4687 = vperm.slane %v4593, 0
    %v4688 = vadd.f32 %v4683, %v4687
    %v4689 = vadd.f32 %v4684, %v4687
    %v4690 = vadd.f32 %v4685, %v4687
    %v4691 = vadd.f32 %v4686, %v4687
    %v4692 = vld [vmem:[#allocation2 + $0x330] sm:$0xff]
    %v4693 = vld [vmem:[#allocation2 + $0x338] sm:$0xff]
    %v4694 = vld [vmem:[#allocation2 + $0x340] sm:$0xff]
    %v4695 = vld [vmem:[#allocation2 + $0x348] sm:$0xff]
    %v4696 = vld [vmem:[#allocation2 + $0x350] sm:$0x1]
    %v4697 = vperm.slane %v4696, 0
    %v4699 = vsel %vm101, %v4688, 0
    %v4702 = vsel %vm101, %v4689, 0
    %v4705 = vsel %vm101, %v4690, 0
    %v4708 = vsel %vm101, %v4691, 0
    %4710 = vmatpush.msra.mxu0 0.0
    %4711 = vmatpush.msra.mxu0 0.0
    %4712 = vmatpush.msra.mxu0 0.0
    %4713 = vmatpush.msra.mxu0 0.0
    %4714 = vmatpush.msra.mxu0 0.0
    %4715 = vmatpush.msra.mxu0 0.0
    %4716 = vmatpush.msra.mxu0 0.0
    %4717 = vmatpush.msra.mxu0 0.0
    %4718 = vmatpush.msra.mxu0 0.0
    %4719 = vmatpush.msra.mxu0 0.0
    %4720 = vmatpush.msra.mxu0 0.0
    %4721 = vmatpush.msra.mxu0 0.0
    %4722 = vmatpush.msra.mxu0 %v4695
    %4723 = vmatpush.msra.mxu0 %v4694
    %4724 = vmatpush.msra.mxu0 %v4693
    %4725 = vmatpush.msra.mxu0 %v4692
    %4726 = vmatmul.f32.gmra.mxu0 %v4699
    %v4727 = vpop.f32.mrf.mxu0
    %v4728 = vadd.f32 %v4697, %v4727
    %4729 = vmatmul.f32.gmra.mxu0 %v4702
    %v4730 = vpop.f32.mrf.mxu0
    %v4731 = vadd.f32 %v4697, %v4730
    %4732 = vmatmul.f32.gmra.mxu0 %v4705
    %v4733 = vpop.f32.mrf.mxu0
    %v4734 = vadd.f32 %v4697, %v4733
    %4735 = vmatmul.f32.gmra.mxu0 %v4708
    %v4736 = vpop.f32.mrf.mxu0
    %v4737 = vadd.f32 %v4697, %v4736
    %4738 = vdwg.mxu0
    %v4739 = vmax.f32 %v4728, 0.0
    %v4740 = vmax.f32 %v4731, 0.0
    %v4741 = vmax.f32 %v4734, 0.0
    %v4742 = vmax.f32 %v4737, 0.0
    %v4743 = vld [vmem:[#allocation2 + $0x358] sm:$0xff]
    %v4744 = vld [vmem:[#allocation2 + $0x360] sm:$0xff]
    %v4745 = vld [vmem:[#allocation2 + $0x368] sm:$0xff]
    %v4746 = vld [vmem:[#allocation2 + $0x370] sm:$0xff]
    %v4747 = vld [vmem:[#allocation2 + $0x378] sm:$0xff]
    %v4748 = vld [vmem:[#allocation2 + $0x380] sm:$0xff]
    %v4749 = vld [vmem:[#allocation2 + $0x388] sm:$0xff]
    %v4750 = vld [vmem:[#allocation2 + $0x390] sm:$0xff]
    %v4751 = vld [vmem:[#allocation2 + $0x398] sm:$0x1]
    %v4752 = vperm.slane %v4751, 0
    %v4754 = vsel %vm1153, %v4739, 0
    %v4757 = vsel %vm1153, %v4740, 0
    %v4760 = vsel %vm1153, %v4741, 0
    %v4763 = vsel %vm1153, %v4742, 0
    %4765 = vmatpush.msra.mxu0 0.0
    %4766 = vmatpush.msra.mxu0 0.0
    %4767 = vmatpush.msra.mxu0 0.0
    %4768 = vmatpush.msra.mxu0 0.0
    %4769 = vmatpush.msra.mxu0 0.0
    %4770 = vmatpush.msra.mxu0 0.0
    %4771 = vmatpush.msra.mxu0 0.0
    %4772 = vmatpush.msra.mxu0 0.0
    %4773 = vmatpush.msra.mxu0 %v4750
    %4774 = vmatpush.msra.mxu0 %v4749
    %4775 = vmatpush.msra.mxu0 %v4748
    %4776 = vmatpush.msra.mxu0 %v4747
    %4777 = vmatpush.msra.mxu0 %v4746
    %4778 = vmatpush.msra.mxu0 %v4745
    %4779 = vmatpush.msra.mxu0 %v4744
    %4780 = vmatpush.msra.mxu0 %v4743
    %4781 = vmatmul.f32.gmra.mxu0 %v4754
    %v4782 = vpop.f32.mrf.mxu0
    %v4783 = vadd.f32 %v4752, %v4782
    %4784 = vmatmul.f32.gmra.mxu0 %v4757
    %v4785 = vpop.f32.mrf.mxu0
    %v4786 = vadd.f32 %v4752, %v4785
    %4787 = vmatmul.f32.gmra.mxu0 %v4760
    %v4788 = vpop.f32.mrf.mxu0
    %v4789 = vadd.f32 %v4752, %v4788
    %4790 = vmatmul.f32.gmra.mxu0 %v4763
    %v4791 = vpop.f32.mrf.mxu0
    %v4792 = vadd.f32 %v4752, %v4791
    %4793 = vdwg.mxu0
    %v4794 = vadd.f32 %v4688, %v4783
    %v4795 = vadd.f32 %v4689, %v4786
    %v4796 = vadd.f32 %v4690, %v4789
    %v4797 = vadd.f32 %v4691, %v4792
    %v4798 = vld [vmem:[#allocation2 + $0x3a0] sm:$0x1]
    %v4799 = vld [vmem:[#allocation2 + $0x3a8] sm:$0x1]
    %v4800 = vsel %vm101, %v4794, 0.0
    %4801 = vadd.xlane.f32.xlu0 %v4800
    %v4802 = vpop.xlane.xlu0 %4801
    %v4803 = vsel %vm101, %v4795, 0.0
    %4804 = vadd.xlane.f32.xlu0 %v4803
    %v4805 = vpop.xlane.xlu0 %4804
    %v4806 = vsel %vm101, %v4796, 0.0
    %4807 = vadd.xlane.f32.xlu0 %v4806
    %v4808 = vpop.xlane.xlu0 %4807
    %v4809 = vsel %vm101, %v4797, 0.0
    %4810 = vadd.xlane.f32.xlu0 %v4809
    %v4811 = vpop.xlane.xlu0 %4810
    %v4812 = vmul.f32 %v4802, %v1005
    %v4813 = vmul.f32 %v4805, %v1005
    %v4814 = vmul.f32 %v4808, %v1005
    %v4815 = vmul.f32 %v4811, %v1005
    %v4816 = vsub.f32 %v4794, %v4812
    %v4817 = vsub.f32 %v4795, %v4813
    %v4818 = vsub.f32 %v4796, %v4814
    %v4819 = vsub.f32 %v4797, %v4815
    %v4820 = vmul.f32 %v4816, %v4816
    %v4821 = vmul.f32 %v4817, %v4817
    %v4822 = vmul.f32 %v4818, %v4818
    %v4823 = vmul.f32 %v4819, %v4819
    %v4824 = vsel %vm101, %v4820, 0.0
    %4825 = vadd.xlane.f32.xlu0 %v4824
    %v4826 = vpop.xlane.xlu0 %4825
    %v4827 = vsel %vm101, %v4821, 0.0
    %4828 = vadd.xlane.f32.xlu0 %v4827
    %v4829 = vpop.xlane.xlu0 %4828
    %v4830 = vsel %vm101, %v4822, 0.0
    %4831 = vadd.xlane.f32.xlu0 %v4830
    %v4832 = vpop.xlane.xlu0 %4831
    %v4833 = vsel %vm101, %v4823, 0.0
    %4834 = vadd.xlane.f32.xlu0 %v4833
    %v4835 = vpop.xlane.xlu0 %4834
    %v4836 = vmul.f32 %v4826, %v1005
    %v4837 = vmul.f32 %v4829, %v1005
    %v4838 = vmul.f32 %v4832, %v1005
    %v4839 = vmul.f32 %v4835, %v1005
    %v4840 = vadd.f32 %v4836, 1e-05
    %v4841 = vadd.f32 %v4837, 1e-05
    %v4842 = vadd.f32 %v4838, 1e-05
    %v4843 = vadd.f32 %v4839, 1e-05
    %v4844 = vrsqrt.pop %v4840
    %v4845 = vmul.f32 %v4844, %v4840
    %v4846 = vmul.f32 %v4845, %v4844
    %v4847 = vmul.f32 0.5, %v4846
    %v4848 = vsub.f32 1.5, %v4847
    %v4849 = vmul.f32 %v4844, %v4848
    %vm4850 = vweird.f32 %v4840
    %vm4851 = vweird.f32 %v4844
    %vm4852 = vmor %vm4850, %vm4851
    %v4853 = vsel %vm4852, %v4844, %v4849
    %v4854 = vrsqrt.pop %v4841
    %v4855 = vmul.f32 %v4854, %v4841
    %v4856 = vmul.f32 %v4855, %v4854
    %v4857 = vmul.f32 0.5, %v4856
    %v4858 = vsub.f32 1.5, %v4857
    %v4859 = vmul.f32 %v4854, %v4858
    %vm4860 = vweird.f32 %v4841
    %vm4861 = vweird.f32 %v4854
    %vm4862 = vmor %vm4860, %vm4861
    %v4863 = vsel %vm4862, %v4854, %v4859
    %v4864 = vrsqrt.pop %v4842
    %v4865 = vmul.f32 %v4864, %v4842
    %v4866 = vmul.f32 %v4865, %v4864
    %v4867 = vmul.f32 0.5, %v4866
    %v4868 = vsub.f32 1.5, %v4867
    %v4869 = vmul.f32 %v4864, %v4868
    %vm4870 = vweird.f32 %v4842
    %vm4871 = vweird.f32 %v4864
    %vm4872 = vmor %vm4870, %vm4871
    %v4873 = vsel %vm4872, %v4864, %v4869
    %v4874 = vrsqrt.pop %v4843
    %v4875 = vmul.f32 %v4874, %v4843
    %v4876 = vmul.f32 %v4875, %v4874
    %v4877 = vmul.f32 0.5, %v4876
    %v4878 = vsub.f32 1.5, %v4877
    %v4879 = vmul.f32 %v4874, %v4878
    %vm4880 = vweird.f32 %v4843
    %vm4881 = vweird.f32 %v4874
    %vm4882 = vmor %vm4880, %vm4881
    %v4883 = vsel %vm4882, %v4874, %v4879
    %v4884 = vmul.f32 %v4816, %v4853
    %v4885 = vmul.f32 %v4817, %v4863
    %v4886 = vmul.f32 %v4818, %v4873
    %v4887 = vmul.f32 %v4819, %v4883
    %v4888 = vperm.slane %v4798, 0
    %v4889 = vmul.f32 %v4884, %v4888
    %v4890 = vmul.f32 %v4885, %v4888
    %v4891 = vmul.f32 %v4886, %v4888
    %v4892 = vmul.f32 %v4887, %v4888
    %v4893 = vperm.slane %v4799, 0
    %v4894 = vadd.f32 %v4889, %v4893
    %v4895 = vadd.f32 %v4890, %v4893
    %v4896 = vadd.f32 %v4891, %v4893
    %v4897 = vadd.f32 %v4892, %v4893
    %v4898 = vld [vmem:[#allocation2 + $0x3b0] sm:$0x1]
    %v4899 = vld [vmem:[#allocation2 + $0x3b8] sm:$0x1]
    %v4900 = vsel %vm101, %v4894, 0.0
    %4901 = vadd.xlane.f32.xlu0 %v4900
    %v4902 = vpop.xlane.xlu0 %4901
    %v4903 = vsel %vm101, %v4895, 0.0
    %4904 = vadd.xlane.f32.xlu0 %v4903
    %v4905 = vpop.xlane.xlu0 %4904
    %v4906 = vsel %vm101, %v4896, 0.0
    %4907 = vadd.xlane.f32.xlu0 %v4906
    %v4908 = vpop.xlane.xlu0 %4907
    %v4909 = vsel %vm101, %v4897, 0.0
    %4910 = vadd.xlane.f32.xlu0 %v4909
    %v4911 = vpop.xlane.xlu0 %4910
    %v4912 = vmul.f32 %v4902, %v1005
    %v4913 = vmul.f32 %v4905, %v1005
    %v4914 = vmul.f32 %v4908, %v1005
    %v4915 = vmul.f32 %v4911, %v1005
    %v4916 = vsub.f32 %v4894, %v4912
    %v4917 = vsub.f32 %v4895, %v4913
    %v4918 = vsub.f32 %v4896, %v4914
    %v4919 = vsub.f32 %v4897, %v4915
    %v4920 = vmul.f32 %v4916, %v4916
    %v4921 = vmul.f32 %v4917, %v4917
    %v4922 = vmul.f32 %v4918, %v4918
    %v4923 = vmul.f32 %v4919, %v4919
    %v4924 = vsel %vm101, %v4920, 0.0
    %4925 = vadd.xlane.f32.xlu0 %v4924
    %v4926 = vpop.xlane.xlu0 %4925
    %v4927 = vsel %vm101, %v4921, 0.0
    %4928 = vadd.xlane.f32.xlu0 %v4927
    %v4929 = vpop.xlane.xlu0 %4928
    %v4930 = vsel %vm101, %v4922, 0.0
    %4931 = vadd.xlane.f32.xlu0 %v4930
    %v4932 = vpop.xlane.xlu0 %4931
    %v4933 = vsel %vm101, %v4923, 0.0
    %4934 = vadd.xlane.f32.xlu0 %v4933
    %v4935 = vpop.xlane.xlu0 %4934
    %v4936 = vmul.f32 %v4926, %v1005
    %v4937 = vmul.f32 %v4929, %v1005
    %v4938 = vmul.f32 %v4932, %v1005
    %v4939 = vmul.f32 %v4935, %v1005
    %v4940 = vadd.f32 %v4936, 1e-05
    %v4941 = vadd.f32 %v4937, 1e-05
    %v4942 = vadd.f32 %v4938, 1e-05
    %v4943 = vadd.f32 %v4939, 1e-05
    %v4944 = vrsqrt.pop %v4940
    %v4945 = vmul.f32 %v4944, %v4940
    %v4946 = vmul.f32 %v4945, %v4944
    %v4947 = vmul.f32 0.5, %v4946
    %v4948 = vsub.f32 1.5, %v4947
    %v4949 = vmul.f32 %v4944, %v4948
    %vm4950 = vweird.f32 %v4940
    %vm4951 = vweird.f32 %v4944
    %vm4952 = vmor %vm4950, %vm4951
    %v4953 = vsel %vm4952, %v4944, %v4949
    %v4954 = vrsqrt.pop %v4941
    %v4955 = vmul.f32 %v4954, %v4941
    %v4956 = vmul.f32 %v4955, %v4954
    %v4957 = vmul.f32 0.5, %v4956
    %v4958 = vsub.f32 1.5, %v4957
    %v4959 = vmul.f32 %v4954, %v4958
    %vm4960 = vweird.f32 %v4941
    %vm4961 = vweird.f32 %v4954
    %vm4962 = vmor %vm4960, %vm4961
    %v4963 = vsel %vm4962, %v4954, %v4959
    %v4964 = vrsqrt.pop %v4942
    %v4965 = vmul.f32 %v4964, %v4942
    %v4966 = vmul.f32 %v4965, %v4964
    %v4967 = vmul.f32 0.5, %v4966
    %v4968 = vsub.f32 1.5, %v4967
    %v4969 = vmul.f32 %v4964, %v4968
    %vm4970 = vweird.f32 %v4942
    %vm4971 = vweird.f32 %v4964
    %vm4972 = vmor %vm4970, %vm4971
    %v4973 = vsel %vm4972, %v4964, %v4969
    %v4974 = vrsqrt.pop %v4943
    %v4975 = vmul.f32 %v4974, %v4943
    %v4976 = vmul.f32 %v4975, %v4974
    %v4977 = vmul.f32 0.5, %v4976
    %v4978 = vsub.f32 1.5, %v4977
    %v4979 = vmul.f32 %v4974, %v4978
    %vm4980 = vweird.f32 %v4943
    %vm4981 = vweird.f32 %v4974
    %vm4982 = vmor %vm4980, %vm4981
    %v4983 = vsel %vm4982, %v4974, %v4979
    %v4984 = vmul.f32 %v4916, %v4953
    %v4985 = vmul.f32 %v4917, %v4963
    %v4986 = vmul.f32 %v4918, %v4973
    %v4987 = vmul.f32 %v4919, %v4983
    %v4988 = vperm.slane %v4898, 0
    %v4989 = vmul.f32 %v4984, %v4988
    %v4990 = vmul.f32 %v4985, %v4988
    %v4991 = vmul.f32 %v4986, %v4988
    %v4992 = vmul.f32 %v4987, %v4988
    %v4993 = vperm.slane %v4899, 0
    %v4994 = vadd.f32 %v4989, %v4993
    %v4995 = vadd.f32 %v4990, %v4993
    %v4996 = vadd.f32 %v4991, %v4993
    %v4997 = vadd.f32 %v4992, %v4993
    %v4998 = vld [vmem:[#allocation2 + $0x3c0] sm:$0xff]
    %v4999 = vld [vmem:[#allocation2 + $0x3c8] sm:$0xff]
    %v5000 = vld [vmem:[#allocation2 + $0x3d0] sm:$0xff]
    %v5001 = vld [vmem:[#allocation2 + $0x3d8] sm:$0xff]
    %v5002 = vld [vmem:[#allocation2 + $0x3e0] sm:$0x1]
    %v5003 = vperm.slane %v5002, 0
    %v5005 = vsel %vm101, %v4994, 0
    %v5008 = vsel %vm101, %v4995, 0
    %v5011 = vsel %vm101, %v4996, 0
    %v5014 = vsel %vm101, %v4997, 0
    %5016 = vmatpush.msra.mxu0 0.0
    %5017 = vmatpush.msra.mxu0 0.0
    %5018 = vmatpush.msra.mxu0 0.0
    %5019 = vmatpush.msra.mxu0 0.0
    %5020 = vmatpush.msra.mxu0 0.0
    %5021 = vmatpush.msra.mxu0 0.0
    %5022 = vmatpush.msra.mxu0 0.0
    %5023 = vmatpush.msra.mxu0 0.0
    %5024 = vmatpush.msra.mxu0 0.0
    %5025 = vmatpush.msra.mxu0 0.0
    %5026 = vmatpush.msra.mxu0 0.0
    %5027 = vmatpush.msra.mxu0 0.0
    %5028 = vmatpush.msra.mxu0 %v5001
    %5029 = vmatpush.msra.mxu0 %v5000
    %5030 = vmatpush.msra.mxu0 %v4999
    %5031 = vmatpush.msra.mxu0 %v4998
    %5032 = vmatmul.f32.gmra.mxu0 %v5005
    %v5033 = vpop.f32.mrf.mxu0
    %5034 = vmatmul.f32.gmra.mxu0 %v5008
    %v5035 = vpop.f32.mrf.mxu0
    %v5036 = vadd.f32 %v5003, %v5035
    %5037 = vmatmul.f32.gmra.mxu0 %v5011
    %v5038 = vpop.f32.mrf.mxu0
    %5039 = vmatmul.f32.gmra.mxu0 %v5014
    %v5040 = vpop.f32.mrf.mxu0
    %v5041 = vadd.f32 %v5003, %v5040
    %5042 = vdwg.mxu0
    %vm5043 = vcmask 31744
    %5044 = vst.msk [vmem:[%s3] sm:$0xff] %vm5043, %v5036
    %5045 = vst.msk [vmem:[%s3 + $0x8] sm:$0xff] %vm5043, %v5041
    // Predicated region
    $region18: #{forward.1} parent=1 // pred_check
      _
    $region19: #{forward.1} parent=1 // pred_check_branch
      %5047 = sbr.rel (0) target = $region21
    $region20: #{forward.1} parent=1 // pred_region
      _
    $region21: #{forward.1} parent=1 // pred_fallthru
      _
    // Predicated region
    $region22: #{forward.1} parent=1 // pred_check
      _
    $region23: #{forward.1} parent=1 // pred_check_branch
      %5049 = sbr.rel (0) target = $region25
    $region24: #{forward.1} parent=1 // pred_region
      _
    $region25: #{forward.1} parent=1 // pred_fallthru
      _
    %5050 = vsyncpa [#allocation3], 1

</llo_original>
